<compile_context>
chip_gen: v7x
topology: tpu7x:2x2x1
jax: 0.10.0
libtpu: 0.0.40
codegen_flags: <defaults>
</compile_context>

<pallas_src>
import functools

import jax
import jax.numpy as jnp
from jax import lax
from jax.experimental import pallas as pl
from jax.experimental.pallas import tpu as pltpu

_EPS = 1e-5                 # torch.nn.BatchNorm2d default eps
_LANE = 128
_HALO = 128                 # halo columns loaded for the ConvT shifts (>= W+1)
_VMEM_BUDGET = 16 << 20     # bytes for double-buffered activation blocks
_VMEM_LIMIT = 40 << 20      # scoped VMEM: fits v5e/v6e (128 MiB) and v7x (64 MiB)
_MAX_TM = 16 * 1024         # absolute cap on the row tile (lane axis)


# ----------------------------- Pallas kernels ------------------------------ #

def _mm_stats_kernel(*refs, fuse_act):
    """y = w @ act(x) (no bias: BN cancels it) + per-tile BN partial sums.

    Slab layout is (channels, rows): channels on sublanes, rows = N*H*W on the
    128-lane axis, so the (c_out, tm) output store is lane-dense.  `fuse_act`
    applies the previous layer's BN scale/shift + ReLU to the loaded tile (f32
    math, cast back to the activation dtype so the MXU stays on the bf16 path).
    """
    if fuse_act:
        x_ref, w_ref, scale_ref, shift_ref, y_ref, sum_ref, ssq_ref = refs
    else:
        x_ref, w_ref, y_ref, sum_ref, ssq_ref = refs

    x = x_ref[...]
    if fuse_act:
        x = jnp.maximum(x.astype(jnp.float32) * scale_ref[...] + shift_ref[...],
                        0.0).astype(x_ref.dtype)

    y = jnp.dot(w_ref[...], x, preferred_element_type=jnp.float32)
    y_ref[...] = y.astype(y_ref.dtype)

    # Per-tile partial statistics: each grid step writes its own block, so there
    # is no resident accumulator and the grid axis can stay "parallel".
    sum_ref[...] = jnp.sum(y, axis=1, keepdims=True)[None]
    ssq_ref[...] = jnp.sum(y * y, axis=1, keepdims=True)[None]


def _convT_phase_kernel(a_ref, b_ref, w_ref, mask_ref, scale_ref, shift_ref,
                        y_ref, sum_ref, ssq_ref, *, w_img):
    """Stride-2 ConvT(3x3) as 4 sub-pixel phases, fused with layer-1 BN+ReLU.

    a_ref: (tem, tm) layer-1 output tile; b_ref: (tem, _HALO) columns that
    immediately follow the tile.  The four shifted copies (offsets 0, +1, +W,
    +W+1 in the flattened N*H*W row axis) are lane slices of the concatenation;
    image borders and padded columns are zeroed with three precomputed mask
    rows (valid, valid & col<W-1, valid & row<H-1).
    """
    tm = a_ref.shape[-1]
    z = jnp.concatenate([a_ref[...], b_ref[...]], axis=1).astype(jnp.float32)
    z = jnp.maximum(z * scale_ref[...] + shift_ref[...], 0.0)   # layer-1 BN+ReLU

    m_valid = mask_ref[0:1, :]
    m_col = mask_ref[1:2, :]
    m_row = mask_ref[2:3, :]
    masks = (m_valid, m_col, m_row, m_col * m_row)
    offs = (0, 1, w_img, w_img + 1)

    y = None
    for s in range(4):
        xs = (z[:, offs[s]:offs[s] + tm] * masks[s]).astype(a_ref.dtype)
        part = jnp.dot(w_ref[s], xs, preferred_element_type=jnp.float32)
        y = part if y is None else y + part

    y_ref[...] = y.astype(y_ref.dtype)
    sum_ref[...] = jnp.sum(y, axis=1, keepdims=True)[None]
    ssq_ref[...] = jnp.sum(y * y, axis=1, keepdims=True)[None]


def _affine_relu_kernel(y_ref, scale_ref, shift_ref, o_ref):
    """o = relu(y * scale + shift)  (only the final layer has nothing to fuse into)."""
    y = y_ref[...].astype(jnp.float32)
    o_ref[...] = jnp.maximum(y * scale_ref[...] + shift_ref[...], 0.0).astype(o_ref.dtype)


# ----------------------------- Pallas wrappers ----------------------------- #

def _pick_tile(m, widest_cols, itemsize, max_tm=None):
    """Row tile (lane axis) from a VMEM budget; returns (tile, padded_rows)."""
    per_col = 2 * (widest_cols * itemsize + 8)       # dbl-buffered in+out blocks / col
    tm = max(_LANE, (_VMEM_BUDGET // per_col) // _LANE * _LANE)
    m_up = pl.cdiv(m, _LANE) * _LANE
    if m_up >= 2 * _LANE:                            # keep >= 2 tiles so the parallel
        tm = min(tm, max(_LANE, (m_up // 2) // _LANE * _LANE))   # axis can use both v7x TCs
    tm = min(tm, _MAX_TM)
    if max_tm is not None:
        tm = min(tm, max(_LANE, max_tm // _LANE * _LANE))
    n_tiles = pl.cdiv(m_up, tm)
    tm = pl.cdiv(pl.cdiv(m_up, n_tiles), _LANE) * _LANE
    return tm, n_tiles * tm


def _pad_rows(x2d, m_target):
    m = x2d.shape[1]
    return x2d if m == m_target else jnp.pad(x2d, ((0, 0), (0, m_target - m)))


def _matmul_bn_stats(x2d, w, scale_in, shift_in, *, tm, out_dtype):
    """One conv-as-matmul layer (no bias): y = w @ act(x), plus BN partials."""
    c_in, m_cols = x2d.shape
    c_o = w.shape[0]
    n_tiles = m_cols // tm
    fuse_act = scale_in is not None
    kern = functools.partial(_mm_stats_kernel, fuse_act=fuse_act)

    in_specs = [pl.BlockSpec((c_in, tm), lambda i: (0, i)),       # activation tile
                pl.BlockSpec((c_o, c_in), lambda i: (0, 0))]      # weight (resident)
    args = [x2d, w]
    if fuse_act:
        in_specs += [pl.BlockSpec((c_in, 1), lambda i: (0, 0)),
                     pl.BlockSpec((c_in, 1), lambda i: (0, 0))]
        args += [scale_in.reshape(c_in, 1).astype(jnp.float32),
                 shift_in.reshape(c_in, 1).astype(jnp.float32)]

    return pl.pallas_call(
        kern,
        out_shape=(jax.ShapeDtypeStruct((c_o, m_cols), out_dtype),
                   jax.ShapeDtypeStruct((n_tiles, c_o, 1), jnp.float32),
                   jax.ShapeDtypeStruct((n_tiles, c_o, 1), jnp.float32)),
        grid=(n_tiles,),
        in_specs=in_specs,
        out_specs=(pl.BlockSpec((c_o, tm), lambda i: (0, i)),
                   pl.BlockSpec((1, c_o, 1), lambda i: (i, 0, 0)),
                   pl.BlockSpec((1, c_o, 1), lambda i: (i, 0, 0))),
        compiler_params=pltpu.CompilerParams(
            dimension_semantics=("parallel",),
            vmem_limit_bytes=_VMEM_LIMIT),
    )(*args)


def _convT_phase(y1, w_shift, mask, scale1, shift1, *, tm, w_img, out_dtype):
    """Layer 2: stride-2 ConvT(3x3) over the un-upsampled grid.

    y1 carries one extra zero tile of columns so the +1 / +W / +W+1 shift reads
    of the last tile stay in bounds; each grid step reads its (tem, tm) tile
    plus the next _HALO columns of y1.
    """
    tem = y1.shape[0]
    m_pad = mask.shape[1]
    n_tiles = m_pad // tm
    c_o = w_shift.shape[1]

    kern = functools.partial(_convT_phase_kernel, w_img=w_img)
    return pl.pallas_call(
        kern,
        out_shape=(jax.ShapeDtypeStruct((c_o, m_pad), out_dtype),
                   jax.ShapeDtypeStruct((n_tiles, c_o, 1), jnp.float32),
                   jax.ShapeDtypeStruct((n_tiles, c_o, 1), jnp.float32)),
        grid=(n_tiles,),
        in_specs=[
            pl.BlockSpec((tem, tm), lambda i: (0, i)),                          # y1 tile
            pl.BlockSpec((tem, _HALO), lambda i: (0, (i + 1) * (tm // _HALO))),  # halo
            pl.BlockSpec((4, c_o, tem), lambda i: (0, 0, 0)),                   # shift weights
            pl.BlockSpec((3, tm), lambda i: (0, i)),                            # border masks
            pl.BlockSpec((tem, 1), lambda i: (0, 0)),                           # scale1
            pl.BlockSpec((tem, 1), lambda i: (0, 0)),                           # shift1
        ],
        out_specs=(pl.BlockSpec((c_o, tm), lambda i: (0, i)),
                   pl.BlockSpec((1, c_o, 1), lambda i: (i, 0, 0)),
                   pl.BlockSpec((1, c_o, 1), lambda i: (i, 0, 0))),
        compiler_params=pltpu.CompilerParams(
            dimension_semantics=("parallel",),
            vmem_limit_bytes=_VMEM_LIMIT),
    )(y1, y1, w_shift, mask,
      scale1.reshape(tem, 1).astype(jnp.float32),
      shift1.reshape(tem, 1).astype(jnp.float32))


def _affine_relu(y2d, scale, shift, *, tm, out_dtype):
    c, m_pad = y2d.shape
    return pl.pallas_call(
        _affine_relu_kernel,
        out_shape=jax.ShapeDtypeStruct((c, m_pad), out_dtype),
        grid=(m_pad // tm,),
        in_specs=[pl.BlockSpec((c, tm), lambda i: (0, i)),
                  pl.BlockSpec((c, 1), lambda i: (0, 0)),
                  pl.BlockSpec((c, 1), lambda i: (0, 0))],
        out_specs=pl.BlockSpec((c, tm), lambda i: (0, i)),
        compiler_params=pltpu.CompilerParams(
            dimension_semantics=("parallel",),
            vmem_limit_bytes=_VMEM_LIMIT),
    )(y2d, scale.reshape(c, 1).astype(jnp.float32),
      shift.reshape(c, 1).astype(jnp.float32))


def _bn_scale_shift(s, ss, gamma, beta, count, groups=1, pad_val=None, n_pad=0):
    """Fold training-mode BatchNorm into per-channel scale/shift from partials.

    pad_val: known constant value each padded column contributed to the raw
    sums (per expanded channel), subtracted host-side instead of masking
    in-kernel.  Variance uses E[y^2]-mean^2 with a >=0 clamp.
    """
    c = gamma.shape[0]
    s = jnp.sum(s.reshape(-1, groups, c), axis=(0, 1))
    ss = jnp.sum(ss.reshape(-1, groups, c), axis=(0, 1))
    if pad_val is not None and n_pad > 0:
        pv = pad_val.reshape(groups, c)
        s = s - n_pad * jnp.sum(pv, axis=0)
        ss = ss - n_pad * jnp.sum(pv * pv, axis=0)
    n = count * groups
    mean = s / n
    var = jnp.maximum(ss / n - mean * mean, 0.0)   # clamp: E[y^2]-m^2 can dip < 0
    scale = gamma * lax.rsqrt(var + _EPS)
    shift = beta - mean * scale
    return scale, shift


# ------------------- ConvTranspose2d(3x3, s=2) sub-pixel form --------------- #
# For output position (2a+di, 2b+dj) only these kernel taps contribute:
#   taps[p] = [(shift_index, kh, kw)]  with p = 2*di + dj and shift s = 2*dh + dw
#   selecting the input shifted by (+dh, +dw) (zero outside the image).
_SUBPIXEL_TAPS = {
    0: [(0, 1, 1)],
    1: [(0, 1, 2), (1, 1, 0)],
    2: [(0, 2, 1), (2, 0, 1)],
    3: [(0, 2, 2), (1, 2, 0), (2, 0, 2), (3, 0, 0)],
}


def _convT3x3_s2_shift_weights(w2):
    """(tem_in, tem_out, 3, 3) ConvT weight -> (4 shifts, 4*tem_out phase-major, tem_in)."""
    tem_in, tem_out = w2.shape[0], w2.shape[1]
    wb = jnp.zeros((4, tem_out, 4, tem_in), jnp.float32)   # (phase, out, shift, in)
    for p_idx, taps in _SUBPIXEL_TAPS.items():
        for s_idx, kh, kw in taps:
            wb = wb.at[p_idx, :, s_idx, :].set(w2[:, :, kh, kw].T)
    return jnp.transpose(wb, (2, 0, 1, 3)).reshape(4, 4 * tem_out, tem_in)


# ------------------------------- Decoder fwd -------------------------------- #

def decoder_forward(x_nchw, p, act_dtype=jnp.bfloat16, max_tm=None):
    n, c_in, h, w = x_nchw.shape
    tem = c_in // 4
    c_out = p["w3"].shape[1]
    m = n * h * w
    if w + 1 > _HALO:
        # TODO(synk): images wider than 127 need a multi-block halo read.
        raise NotImplementedError("image width must be < 128")

    itemsize = jnp.dtype(act_dtype).itemsize
    widest = max(c_in + tem, 8 * tem + 4, 4 * (tem + c_out), 8 * c_out)
    tm, m_pad = _pick_tile(m, widest, itemsize, max_tm)
    n_pad = m_pad - m

    # (C, rows) slab in act_dtype: channels on sublanes, rows = N*H*W on the
    # 128-lane axis.  One extra zero tile keeps layer-2's halo reads in bounds
    # (layer-1 output there is exactly zero: zero input, no bias).
    x2d = jnp.transpose(x_nchw, (1, 0, 2, 3)).reshape(c_in, m).astype(act_dtype)
    x2d = _pad_rows(x2d, m_pad + tm)

    # ---- layer 1: Conv2d(c_in, tem, k=1) + BN stats ------------------------ #
    y1, s1, ss1 = _matmul_bn_stats(x2d, p["w1"][:, :, 0, 0].astype(act_dtype),
                                   None, None, tm=tm, out_dtype=act_dtype)
    scale1, shift1 = _bn_scale_shift(s1, ss1, p["g1"], p["be1"], count=m)

    # Border / padding masks for the sub-pixel shifts (3 rows, built once).
    col = jnp.arange(m_pad, dtype=jnp.int32)
    w_idx = col % w
    h_idx = (col // w) % h
    valid = col < m
    mask = jnp.stack([valid,
                      valid & (w_idx < w - 1),
                      valid & (h_idx < h - 1)]).astype(jnp.float32)

    # ---- layer 2: ConvT(3x3, s=2, p=1, op=1) via in-kernel sub-pixel shifts - #
    # Layer-1's BN+ReLU is fused into this kernel; the four shifted copies are
    # lane slices of the tile + halo, so no (4*tem, M) slab touches HBM.
    w2_shift = _convT3x3_s2_shift_weights(p["w2"]).astype(act_dtype)
    y2, s2, ss2 = _convT_phase(y1, w2_shift, mask, scale1, shift1,
                               tm=tm, w_img=w, out_dtype=act_dtype)
    scale2, shift2 = _bn_scale_shift(s2, ss2, p["g2"], p["be2"], count=m, groups=4)

    # ---- layer 3: ConvT(1x1) with layer-2 BN+ReLU fused into the matmul ---- #
    w3_big = jnp.kron(jnp.eye(4, dtype=jnp.float32),
                      p["w3"][:, :, 0, 0].T).astype(act_dtype)
    scale2_big = jnp.tile(scale2, 4)
    shift2_big = jnp.tile(shift2, 4)
    y3, s3, ss3 = _matmul_bn_stats(y2, w3_big, scale2_big, shift2_big,
                                   tm=tm, out_dtype=act_dtype)
    # Padded columns of y2 are exactly zero, so each contributes the constant
    # w3 @ relu(shift2) to layer-3's raw sums; subtract it host-side instead of
    # masking per grid step in the kernel.
    pad_val = None
    if n_pad:
        pad_val = jnp.dot(
            w3_big.astype(jnp.float32),
            jnp.maximum(shift2_big, 0.0).astype(act_dtype).astype(jnp.float32),
            precision=lax.Precision.HIGHEST)
    scale3, shift3 = _bn_scale_shift(s3, ss3, p["g3"], p["be3"], count=m, groups=4,
                                     pad_val=pad_val, n_pad=n_pad)

    # ---- final BN + ReLU (act_dtype), then phase interleave (XLA) ----------- #
    # TODO(synk): fuse the (di, dj) phase interleave into the last Pallas pass
    # (bf16 pair packing on the lane axis + di routed via the out_spec).
    out = _affine_relu(y3, jnp.tile(scale3, 4), jnp.tile(shift3, 4),
                       tm=tm, out_dtype=act_dtype)
    out = out[:, :m].reshape(2, 2, c_out, n, h, w)            # (di, dj, c, n, a, b)
    out = jnp.transpose(out, (3, 2, 4, 0, 5, 1)).reshape(n, c_out, 2 * h, 2 * w)
    return out.astype(jnp.float32)


# ------------------------------ reference (jnp) ------------------------------ #

def ref_decoder(x, p):
    def bn_relu(y, gamma, beta):
        mean = y.mean(axis=(0, 2, 3), keepdims=True)
        var = y.var(axis=(0, 2, 3), keepdims=True)
        yn = (y - mean) / jnp.sqrt(var + _EPS)
        return jnp.maximum(yn * gamma[None, :, None, None] + beta[None, :, None, None], 0.0)

    y = jnp.einsum("nchw,oc->nohw", x, p["w1"][:, :, 0, 0]) + p["b1"][None, :, None, None]
    y = bn_relu(y, p["g1"], p["be1"])

    rhs = jnp.transpose(p["w2"][:, :, ::-1, ::-1], (1, 0, 2, 3))   # OIHW
    y = lax.conv_general_dilated(
        y, rhs, window_strides=(1, 1), padding=((1, 2), (1, 2)),
        lhs_dilation=(2, 2), dimension_numbers=("NCHW", "OIHW", "NCHW"),
    ) + p["b2"][None, :, None, None]
    y = bn_relu(y, p["g2"], p["be2"])

    y = jnp.einsum("nchw,co->nohw", y, p["w3"][:, :, 0, 0]) + p["b3"][None, :, None, None]
    return bn_relu(y, p["g3"], p["be3"])


# --------------------------------- params ----------------------------------- #

def init_params(key, c_in, c_out):
    tem = c_in // 4
    ks = jax.random.split(key, 12)

    def u(k, shape, fan_in):
        bound = 1.0 / jnp.sqrt(float(fan_in))
        return jax.random.uniform(k, shape, jnp.float32, -bound, bound)

    return {
        "w1": u(ks[0], (tem, c_in, 1, 1), c_in),        # Conv2d weight (out,in,1,1)
        "b1": u(ks[1], (tem,), c_in),
        "g1": 1.0 + 0.1 * jax.random.normal(ks[2], (tem,), jnp.float32),
        "be1": 0.1 * jax.random.normal(ks[3], (tem,), jnp.float32),
        "w2": u(ks[4], (tem, tem, 3, 3), tem * 9),      # ConvT weight (in,out,3,3)
        "b2": u(ks[5], (tem,), tem * 9),
        "g2": 1.0 + 0.1 * jax.random.normal(ks[6], (tem,), jnp.float32),
        "be2": 0.1 * jax.random.normal(ks[7], (tem,), jnp.float32),
        "w3": u(ks[8], (tem, c_out, 1, 1), tem),        # ConvT weight (in,out,1,1)
        "b3": u(ks[9], (c_out,), tem),
        "g3": 1.0 + 0.1 * jax.random.normal(ks[10], (c_out,), jnp.float32),
        "be3": 0.1 * jax.random.normal(ks[11], (c_out,), jnp.float32),
    }


if __name__ == "__main__":
    key = jax.random.PRNGKey(0)
    kx, kp = jax.random.split(key)

    N, C_IN, C_OUT = 2, 16, 8                     # tem = 4
    params = init_params(kp, C_IN, C_OUT)

    # Config S=12: multi-tile grid, cross-tile halo reads, padded columns
    # (host-side stats correction), non-power-of-two image width.
    # Config S=8: single tile, halo served by the extra zero tile, no padding.
    for s_img in (12, 8):
        x = jax.random.normal(kx, (N, C_IN, s_img, s_img), jnp.float32)
        ref = ref_decoder(x, params)

        fwd_f32 = jax.jit(functools.partial(decoder_forward, act_dtype=jnp.float32))
        out32 = jax.block_until_ready(fwd_f32(x, params))
        assert out32.shape == (N, C_OUT, 2 * s_img, 2 * s_img), out32.shape
        err32 = float(jnp.max(jnp.abs(out32 - ref)))
        assert err32 < 3e-3, f"f32 mismatch vs reference (S={s_img}): {err32}"

        fwd_bf16 = jax.jit(functools.partial(decoder_forward, act_dtype=jnp.bfloat16))
        out16 = jax.block_until_ready(fwd_bf16(x, params))
        assert out16.shape == (N, C_OUT, 2 * s_img, 2 * s_img), out16.shape
        # bf16 activation/weight storage: loose sanity bound (f32 path is the gate).
        err16 = float(jnp.max(jnp.abs(out16 - ref)))
        assert err16 < 3e-1, f"bf16 mismatch vs reference (S={s_img}): {err16}"

    print("KERNEL_OK")
</pallas_src>

<mosaic_0001>
module attributes {stable_mosaic.version = 11 : i64} {
  func.func @_convT_phase_kernel(%arg0: i32, %arg1: memref<4x128xf32, #tpu.memory_space<vmem>>, %arg2: memref<4x128xf32, #tpu.memory_space<vmem>>, %arg3: memref<4x16x4xf32, #tpu.memory_space<vmem>>, %arg4: memref<3x128xf32, #tpu.memory_space<vmem>>, %arg5: memref<4x1xf32, #tpu.memory_space<vmem>>, %arg6: memref<4x1xf32, #tpu.memory_space<vmem>>, %arg7: memref<16x128xf32, #tpu.memory_space<vmem>>, %arg8: memref<1x16x1xf32, #tpu.memory_space<vmem>>, %arg9: memref<1x16x1xf32, #tpu.memory_space<vmem>>) attributes {dimension_semantics = [#tpu.dimension_semantics<parallel>], iteration_bounds = array<i64: 3>, scalar_prefetch = 0 : i64, scratch_operands = 0 : i64, tpu.core_type = #tpu.core_type<tc>, window_params = [{transform_indices = @transform_0, window_bounds = array<i64: 4, 128>}, {transform_indices = @transform_1, window_bounds = array<i64: 4, 128>}, {pipeline_mode = #tpu.pipeline_mode<synchronous>, transform_indices = @transform_2, window_bounds = array<i64: 4, 16, 4>}, {transform_indices = @transform_3, window_bounds = array<i64: 3, 128>}, {pipeline_mode = #tpu.pipeline_mode<synchronous>, transform_indices = @transform_4, window_bounds = array<i64: 4, 1>}, {pipeline_mode = #tpu.pipeline_mode<synchronous>, transform_indices = @transform_5, window_bounds = array<i64: 4, 1>}, {transform_indices = @transform_6, window_bounds = array<i64: 16, 128>}, {transform_indices = @transform_7, window_bounds = array<i64: 1, 16, 1>}, {transform_indices = @transform_8, window_bounds = array<i64: 1, 16, 1>}]} {
    %c0 = arith.constant 0 : index
    %c0_0 = arith.constant 0 : index
    %0 = vector.load %arg1[%c0, %c0_0] : memref<4x128xf32, #tpu.memory_space<vmem>>, vector<4x128xf32>
    %c0_1 = arith.constant 0 : index
    %c0_2 = arith.constant 0 : index
    %1 = vector.load %arg2[%c0_1, %c0_2] : memref<4x128xf32, #tpu.memory_space<vmem>>, vector<4x128xf32>
    %2 = tpu.concatenate %0, %1 in 1 : vector<4x128xf32>, vector<4x128xf32> -> vector<4x256xf32>
    %c0_3 = arith.constant 0 : index
    %c0_4 = arith.constant 0 : index
    %3 = vector.load %arg5[%c0_3, %c0_4] : memref<4x1xf32, #tpu.memory_space<vmem>>, vector<4x1xf32>
    %4 = vector.broadcast %3 : vector<4x1xf32> to vector<4x256xf32>
    %5 = arith.mulf %2, %4 : vector<4x256xf32>
    %c0_5 = arith.constant 0 : index
    %c0_6 = arith.constant 0 : index
    %6 = vector.load %arg6[%c0_5, %c0_6] : memref<4x1xf32, #tpu.memory_space<vmem>>, vector<4x1xf32>
    %7 = vector.broadcast %6 : vector<4x1xf32> to vector<4x256xf32>
    %8 = arith.addf %5, %7 : vector<4x256xf32>
    %cst = arith.constant 0.000000e+00 : f32
    %9 = vector.broadcast %cst : f32 to vector<4x256xf32>
    %10 = arith.maximumf %8, %9 : vector<4x256xf32>
    %c0_7 = arith.constant 0 : index
    %c0_8 = arith.constant 0 : index
    %11 = vector.load %arg4[%c0_7, %c0_8] : memref<3x128xf32, #tpu.memory_space<vmem>>, vector<1x128xf32>
    %c1 = arith.constant 1 : index
    %c0_9 = arith.constant 0 : index
    %12 = vector.load %arg4[%c1, %c0_9] : memref<3x128xf32, #tpu.memory_space<vmem>>, vector<1x128xf32>
    %c2 = arith.constant 2 : index
    %c0_10 = arith.constant 0 : index
    %13 = vector.load %arg4[%c2, %c0_10] : memref<3x128xf32, #tpu.memory_space<vmem>>, vector<1x128xf32>
    %14 = arith.mulf %12, %13 : vector<1x128xf32>
    %15 = vector.extract_strided_slice %10 {offsets = [0, 0], sizes = [4, 128], strides = [1, 1]} : vector<4x256xf32> to vector<4x128xf32>
    %16 = vector.broadcast %11 : vector<1x128xf32> to vector<4x128xf32>
    %17 = arith.mulf %15, %16 : vector<4x128xf32>
    %c0_11 = arith.constant 0 : index
    %c0_12 = arith.constant 0 : index
    %c0_13 = arith.constant 0 : index
    %18 = vector.load %arg3[%c0_11, %c0_12, %c0_13] : memref<4x16x4xf32, #tpu.memory_space<vmem>>, vector<1x16x4xf32>
    %19 = vector.shape_cast %18 : vector<1x16x4xf32> to vector<16x4xf32>
    %cst_14 = arith.constant dense<0.000000e+00> : vector<16x128xf32>
    %20 = tpu.matmul %19, %17, %cst_14 {dimension_numbers = #tpu.dot_dimension_numbers<[1], [0], [0], [1], [0, 0, 1, 1], [], []>} : vector<16x4xf32>, vector<4x128xf32>, vector<16x128xf32> -> vector<16x128xf32>
    %21 = vector.extract_strided_slice %10 {offsets = [0, 1], sizes = [4, 128], strides = [1, 1]} : vector<4x256xf32> to vector<4x128xf32>
    %22 = vector.broadcast %12 : vector<1x128xf32> to vector<4x128xf32>
    %23 = arith.mulf %21, %22 : vector<4x128xf32>
    %c1_15 = arith.constant 1 : index
    %c0_16 = arith.constant 0 : index
    %c0_17 = arith.constant 0 : index
    %24 = vector.load %arg3[%c1_15, %c0_16, %c0_17] : memref<4x16x4xf32, #tpu.memory_space<vmem>>, vector<1x16x4xf32>
    %25 = vector.shape_cast %24 : vector<1x16x4xf32> to vector<16x4xf32>
    %cst_18 = arith.constant dense<0.000000e+00> : vector<16x128xf32>
    %26 = tpu.matmul %25, %23, %cst_18 {dimension_numbers = #tpu.dot_dimension_numbers<[1], [0], [0], [1], [0, 0, 1, 1], [], []>} : vector<16x4xf32>, vector<4x128xf32>, vector<16x128xf32> -> vector<16x128xf32>
    %27 = arith.addf %20, %26 : vector<16x128xf32>
    %28 = vector.extract_strided_slice %10 {offsets = [0, 12], sizes = [4, 128], strides = [1, 1]} : vector<4x256xf32> to vector<4x128xf32>
    %29 = vector.broadcast %13 : vector<1x128xf32> to vector<4x128xf32>
    %30 = arith.mulf %28, %29 : vector<4x128xf32>
    %c2_19 = arith.constant 2 : index
    %c0_20 = arith.constant 0 : index
    %c0_21 = arith.constant 0 : index
    %31 = vector.load %arg3[%c2_19, %c0_20, %c0_21] : memref<4x16x4xf32, #tpu.memory_space<vmem>>, vector<1x16x4xf32>
    %32 = vector.shape_cast %31 : vector<1x16x4xf32> to vector<16x4xf32>
    %cst_22 = arith.constant dense<0.000000e+00> : vector<16x128xf32>
    %33 = tpu.matmul %32, %30, %cst_22 {dimension_numbers = #tpu.dot_dimension_numbers<[1], [0], [0], [1], [0, 0, 1, 1], [], []>} : vector<16x4xf32>, vector<4x128xf32>, vector<16x128xf32> -> vector<16x128xf32>
    %34 = arith.addf %27, %33 : vector<16x128xf32>
    %35 = vector.extract_strided_slice %10 {offsets = [0, 13], sizes = [4, 128], strides = [1, 1]} : vector<4x256xf32> to vector<4x128xf32>
    %36 = vector.broadcast %14 : vector<1x128xf32> to vector<4x128xf32>
    %37 = arith.mulf %35, %36 : vector<4x128xf32>
    %c3 = arith.constant 3 : index
    %c0_23 = arith.constant 0 : index
    %c0_24 = arith.constant 0 : index
    %38 = vector.load %arg3[%c3, %c0_23, %c0_24] : memref<4x16x4xf32, #tpu.memory_space<vmem>>, vector<1x16x4xf32>
    %39 = vector.shape_cast %38 : vector<1x16x4xf32> to vector<16x4xf32>
    %cst_25 = arith.constant dense<0.000000e+00> : vector<16x128xf32>
    %40 = tpu.matmul %39, %37, %cst_25 {dimension_numbers = #tpu.dot_dimension_numbers<[1], [0], [0], [1], [0, 0, 1, 1], [], []>} : vector<16x4xf32>, vector<4x128xf32>, vector<16x128xf32> -> vector<16x128xf32>
    %41 = arith.addf %34, %40 : vector<16x128xf32>
    %c0_26 = arith.constant 0 : index
    %c0_27 = arith.constant 0 : index
    %42 = vector.load %arg7[%c0_26, %c0_27] : memref<16x128xf32, #tpu.memory_space<vmem>>, vector<16x128xf32>
    tpu.vector_store %arg7[%c0_26, %c0_27], %41 {strides = array<i32>} : memref<16x128xf32, #tpu.memory_space<vmem>>, vector<16x128xf32>,
    %cst_28 = arith.constant dense<0.000000e+00> : vector<16xf32>
    %43 = vector.multi_reduction <add>, %41, %cst_28 [1] : vector<16x128xf32> to vector<16xf32>
    %44 = vector.shape_cast %43 : vector<16xf32> to vector<16x1xf32>
    %45 = vector.shape_cast %44 : vector<16x1xf32> to vector<1x16x1xf32>
    %c0_29 = arith.constant 0 : index
    %c0_30 = arith.constant 0 : index
    %c0_31 = arith.constant 0 : index
    %46 = vector.load %arg8[%c0_29, %c0_30, %c0_31] : memref<1x16x1xf32, #tpu.memory_space<vmem>>, vector<1x16x1xf32>
    tpu.vector_store %arg8[%c0_29, %c0_30, %c0_31], %45 {strides = array<i32>} : memref<1x16x1xf32, #tpu.memory_space<vmem>>, vector<1x16x1xf32>,
    %47 = arith.mulf %41, %41 : vector<16x128xf32>
    %cst_32 = arith.constant dense<0.000000e+00> : vector<16xf32>
    %48 = vector.multi_reduction <add>, %47, %cst_32 [1] : vector<16x128xf32> to vector<16xf32>
    %49 = vector.shape_cast %48 : vector<16xf32> to vector<16x1xf32>
    %50 = vector.shape_cast %49 : vector<16x1xf32> to vector<1x16x1xf32>
    %c0_33 = arith.constant 0 : index
    %c0_34 = arith.constant 0 : index
    %c0_35 = arith.constant 0 : index
    %51 = vector.load %arg9[%c0_33, %c0_34, %c0_35] : memref<1x16x1xf32, #tpu.memory_space<vmem>>, vector<1x16x1xf32>
    tpu.vector_store %arg9[%c0_33, %c0_34, %c0_35], %50 {strides = array<i32>} : memref<1x16x1xf32, #tpu.memory_space<vmem>>, vector<1x16x1xf32>,
    return
  }
  func.func @transform_0(%arg0: i32) -> (i32, i32) {
    %c0_i32 = arith.constant 0 : i32
    %c0_i32_0 = arith.constant 0 : i32
    return %c0_i32, %arg0 : i32, i32
  }
  func.func @transform_1(%arg0: i32) -> (i32, i32) {
    %c1_i32 = arith.constant 1 : i32
    %0 = arith.addi %arg0, %c1_i32 : i32
    %c1_i32_0 = arith.constant 1 : i32
    %1 = arith.muli %0, %c1_i32_0 : i32
    %c0_i32 = arith.constant 0 : i32
    %c0_i32_1 = arith.constant 0 : i32
    return %c0_i32, %1 : i32, i32
  }
  func.func @transform_2(%arg0: i32) -> (i32, i32, i32) {
    %c0_i32 = arith.constant 0 : i32
    %c0_i32_0 = arith.constant 0 : i32
    %c0_i32_1 = arith.constant 0 : i32
    %c0_i32_2 = arith.constant 0 : i32
    return %c0_i32, %c0_i32_0, %c0_i32_1 : i32, i32, i32
  }
  func.func @transform_3(%arg0: i32) -> (i32, i32) {
    %c0_i32 = arith.constant 0 : i32
    %c0_i32_0 = arith.constant 0 : i32
    return %c0_i32, %arg0 : i32, i32
  }
  func.func @transform_4(%arg0: i32) -> (i32, i32) {
    %c0_i32 = arith.constant 0 : i32
    %c0_i32_0 = arith.constant 0 : i32
    %c0_i32_1 = arith.constant 0 : i32
    return %c0_i32, %c0_i32_0 : i32, i32
  }
  func.func @transform_5(%arg0: i32) -> (i32, i32) {
    %c0_i32 = arith.constant 0 : i32
    %c0_i32_0 = arith.constant 0 : i32
    %c0_i32_1 = arith.constant 0 : i32
    return %c0_i32, %c0_i32_0 : i32, i32
  }
  func.func @transform_6(%arg0: i32) -> (i32, i32) {
    %c0_i32 = arith.constant 0 : i32
    %c0_i32_0 = arith.constant 0 : i32
    return %c0_i32, %arg0 : i32, i32
  }
  func.func @transform_7(%arg0: i32) -> (i32, i32, i32) {
    %c0_i32 = arith.constant 0 : i32
    %c0_i32_0 = arith.constant 0 : i32
    %c0_i32_1 = arith.constant 0 : i32
    return %arg0, %c0_i32, %c0_i32_0 : i32, i32, i32
  }
  func.func @transform_8(%arg0: i32) -> (i32, i32, i32) {
    %c0_i32 = arith.constant 0 : i32
    %c0_i32_0 = arith.constant 0 : i32
    %c0_i32_1 = arith.constant 0 : i32
    return %arg0, %c0_i32, %c0_i32_0 : i32, i32, i32
  }
}

module attributes {stable_mosaic.version = 11 : i64} {
  func.func @_mm_stats_kernel(%arg0: i32, %arg1: memref<16x128xf32, #tpu.memory_space<vmem>>, %arg2: memref<4x16xf32, #tpu.memory_space<vmem>>, %arg3: memref<4x128xf32, #tpu.memory_space<vmem>>, %arg4: memref<1x4x1xf32, #tpu.memory_space<vmem>>, %arg5: memref<1x4x1xf32, #tpu.memory_space<vmem>>) attributes {dimension_semantics = [#tpu.dimension_semantics<parallel>], iteration_bounds = array<i64: 4>, scalar_prefetch = 0 : i64, scratch_operands = 0 : i64, tpu.core_type = #tpu.core_type<tc>, window_params = [{transform_indices = @transform_0, window_bounds = array<i64: 16, 128>}, {pipeline_mode = #tpu.pipeline_mode<synchronous>, transform_indices = @transform_1, window_bounds = array<i64: 4, 16>}, {transform_indices = @transform_2, window_bounds = array<i64: 4, 128>}, {transform_indices = @transform_3, window_bounds = array<i64: 1, 4, 1>}, {transform_indices = @transform_4, window_bounds = array<i64: 1, 4, 1>}]} {
    %c0 = arith.constant 0 : index
    %c0_0 = arith.constant 0 : index
    %0 = vector.load %arg1[%c0, %c0_0] : memref<16x128xf32, #tpu.memory_space<vmem>>, vector<16x128xf32>
    %c0_1 = arith.constant 0 : index
    %c0_2 = arith.constant 0 : index
    %1 = vector.load %arg2[%c0_1, %c0_2] : memref<4x16xf32, #tpu.memory_space<vmem>>, vector<4x16xf32>
    %cst = arith.constant dense<0.000000e+00> : vector<4x128xf32>
    %2 = tpu.matmul %1, %0, %cst {dimension_numbers = #tpu.dot_dimension_numbers<[1], [0], [0], [1], [0, 0, 1, 1], [], []>} : vector<4x16xf32>, vector<16x128xf32>, vector<4x128xf32> -> vector<4x128xf32>
    %c0_3 = arith.constant 0 : index
    %c0_4 = arith.constant 0 : index
    %3 = vector.load %arg3[%c0_3, %c0_4] : memref<4x128xf32, #tpu.memory_space<vmem>>, vector<4x128xf32>
    tpu.vector_store %arg3[%c0_3, %c0_4], %2 {strides = array<i32>} : memref<4x128xf32, #tpu.memory_space<vmem>>, vector<4x128xf32>,
    %cst_5 = arith.constant dense<0.000000e+00> : vector<4xf32>
    %4 = vector.multi_reduction <add>, %2, %cst_5 [1] : vector<4x128xf32> to vector<4xf32>
    %5 = vector.shape_cast %4 : vector<4xf32> to vector<4x1xf32>
    %6 = vector.shape_cast %5 : vector<4x1xf32> to vector<1x4x1xf32>
    %c0_6 = arith.constant 0 : index
    %c0_7 = arith.constant 0 : index
    %c0_8 = arith.constant 0 : index
    %7 = vector.load %arg4[%c0_6, %c0_7, %c0_8] : memref<1x4x1xf32, #tpu.memory_space<vmem>>, vector<1x4x1xf32>
    tpu.vector_store %arg4[%c0_6, %c0_7, %c0_8], %6 {strides = array<i32>} : memref<1x4x1xf32, #tpu.memory_space<vmem>>, vector<1x4x1xf32>,
    %8 = arith.mulf %2, %2 : vector<4x128xf32>
    %cst_9 = arith.constant dense<0.000000e+00> : vector<4xf32>
    %9 = vector.multi_reduction <add>, %8, %cst_9 [1] : vector<4x128xf32> to vector<4xf32>
    %10 = vector.shape_cast %9 : vector<4xf32> to vector<4x1xf32>
    %11 = vector.shape_cast %10 : vector<4x1xf32> to vector<1x4x1xf32>
    %c0_10 = arith.constant 0 : index
    %c0_11 = arith.constant 0 : index
    %c0_12 = arith.constant 0 : index
    %12 = vector.load %arg5[%c0_10, %c0_11, %c0_12] : memref<1x4x1xf32, #tpu.memory_space<vmem>>, vector<1x4x1xf32>
    tpu.vector_store %arg5[%c0_10, %c0_11, %c0_12], %11 {strides = array<i32>} : memref<1x4x1xf32, #tpu.memory_space<vmem>>, vector<1x4x1xf32>,
    return
  }
  func.func @transform_0(%arg0: i32) -> (i32, i32) {
    %c0_i32 = arith.constant 0 : i32
    %c0_i32_0 = arith.constant 0 : i32
    return %c0_i32, %arg0 : i32, i32
  }
  func.func @transform_1(%arg0: i32) -> (i32, i32) {
    %c0_i32 = arith.constant 0 : i32
    %c0_i32_0 = arith.constant 0 : i32
    %c0_i32_1 = arith.constant 0 : i32
    return %c0_i32, %c0_i32_0 : i32, i32
  }
  func.func @transform_2(%arg0: i32) -> (i32, i32) {
    %c0_i32 = arith.constant 0 : i32
    %c0_i32_0 = arith.constant 0 : i32
    return %c0_i32, %arg0 : i32, i32
  }
  func.func @transform_3(%arg0: i32) -> (i32, i32, i32) {
    %c0_i32 = arith.constant 0 : i32
    %c0_i32_0 = arith.constant 0 : i32
    %c0_i32_1 = arith.constant 0 : i32
    return %arg0, %c0_i32, %c0_i32_0 : i32, i32, i32
  }
  func.func @transform_4(%arg0: i32) -> (i32, i32, i32) {
    %c0_i32 = arith.constant 0 : i32
    %c0_i32_0 = arith.constant 0 : i32
    %c0_i32_1 = arith.constant 0 : i32
    return %arg0, %c0_i32, %c0_i32_0 : i32, i32, i32
  }
}

module attributes {stable_mosaic.version = 11 : i64} {
  func.func @_affine_relu_kernel(%arg0: i32, %arg1: memref<32x128xf32, #tpu.memory_space<vmem>>, %arg2: memref<32x1xf32, #tpu.memory_space<vmem>>, %arg3: memref<32x1xf32, #tpu.memory_space<vmem>>, %arg4: memref<32x128xf32, #tpu.memory_space<vmem>>) attributes {dimension_semantics = [#tpu.dimension_semantics<parallel>], iteration_bounds = array<i64: 3>, scalar_prefetch = 0 : i64, scratch_operands = 0 : i64, tpu.core_type = #tpu.core_type<tc>, window_params = [{transform_indices = @transform_0, window_bounds = array<i64: 32, 128>}, {pipeline_mode = #tpu.pipeline_mode<synchronous>, transform_indices = @transform_1, window_bounds = array<i64: 32, 1>}, {pipeline_mode = #tpu.pipeline_mode<synchronous>, transform_indices = @transform_2, window_bounds = array<i64: 32, 1>}, {transform_indices = @transform_3, window_bounds = array<i64: 32, 128>}]} {
    %c0 = arith.constant 0 : index
    %c0_0 = arith.constant 0 : index
    %0 = vector.load %arg1[%c0, %c0_0] : memref<32x128xf32, #tpu.memory_space<vmem>>, vector<32x128xf32>
    %c0_1 = arith.constant 0 : index
    %c0_2 = arith.constant 0 : index
    %1 = vector.load %arg2[%c0_1, %c0_2] : memref<32x1xf32, #tpu.memory_space<vmem>>, vector<32x1xf32>
    %2 = vector.broadcast %1 : vector<32x1xf32> to vector<32x128xf32>
    %3 = arith.mulf %0, %2 : vector<32x128xf32>
    %c0_3 = arith.constant 0 : index
    %c0_4 = arith.constant 0 : index
    %4 = vector.load %arg3[%c0_3, %c0_4] : memref<32x1xf32, #tpu.memory_space<vmem>>, vector<32x1xf32>
    %5 = vector.broadcast %4 : vector<32x1xf32> to vector<32x128xf32>
    %6 = arith.addf %3, %5 : vector<32x128xf32>
    %cst = arith.constant 0.000000e+00 : f32
    %7 = vector.broadcast %cst : f32 to vector<32x128xf32>
    %8 = arith.maximumf %6, %7 : vector<32x128xf32>
    %c0_5 = arith.constant 0 : index
    %c0_6 = arith.constant 0 : index
    %9 = vector.load %arg4[%c0_5, %c0_6] : memref<32x128xf32, #tpu.memory_space<vmem>>, vector<32x128xf32>
    tpu.vector_store %arg4[%c0_5, %c0_6], %8 {strides = array<i32>} : memref<32x128xf32, #tpu.memory_space<vmem>>, vector<32x128xf32>,
    return
  }
  func.func @transform_0(%arg0: i32) -> (i32, i32) {
    %c0_i32 = arith.constant 0 : i32
    %c0_i32_0 = arith.constant 0 : i32
    return %c0_i32, %arg0 : i32, i32
  }
  func.func @transform_1(%arg0: i32) -> (i32, i32) {
    %c0_i32 = arith.constant 0 : i32
    %c0_i32_0 = arith.constant 0 : i32
    %c0_i32_1 = arith.constant 0 : i32
    return %c0_i32, %c0_i32_0 : i32, i32
  }
  func.func @transform_2(%arg0: i32) -> (i32, i32) {
    %c0_i32 = arith.constant 0 : i32
    %c0_i32_0 = arith.constant 0 : i32
    %c0_i32_1 = arith.constant 0 : i32
    return %c0_i32, %c0_i32_0 : i32, i32
  }
  func.func @transform_3(%arg0: i32) -> (i32, i32) {
    %c0_i32 = arith.constant 0 : i32
    %c0_i32_0 = arith.constant 0 : i32
    return %c0_i32, %arg0 : i32, i32
  }
}

module attributes {stable_mosaic.version = 11 : i64} {
  func.func @_mm_stats_kernel(%arg0: i32, %arg1: memref<16x128xf32, #tpu.memory_space<vmem>>, %arg2: memref<32x16xf32, #tpu.memory_space<vmem>>, %arg3: memref<16x1xf32, #tpu.memory_space<vmem>>, %arg4: memref<16x1xf32, #tpu.memory_space<vmem>>, %arg5: memref<32x128xf32, #tpu.memory_space<vmem>>, %arg6: memref<1x32x1xf32, #tpu.memory_space<vmem>>, %arg7: memref<1x32x1xf32, #tpu.memory_space<vmem>>) attributes {dimension_semantics = [#tpu.dimension_semantics<parallel>], iteration_bounds = array<i64: 3>, scalar_prefetch = 0 : i64, scratch_operands = 0 : i64, tpu.core_type = #tpu.core_type<tc>, window_params = [{transform_indices = @transform_0, window_bounds = array<i64: 16, 128>}, {pipeline_mode = #tpu.pipeline_mode<synchronous>, transform_indices = @transform_1, window_bounds = array<i64: 32, 16>}, {pipeline_mode = #tpu.pipeline_mode<synchronous>, transform_indices = @transform_2, window_bounds = array<i64: 16, 1>}, {pipeline_mode = #tpu.pipeline_mode<synchronous>, transform_indices = @transform_3, window_bounds = array<i64: 16, 1>}, {transform_indices = @transform_4, window_bounds = array<i64: 32, 128>}, {transform_indices = @transform_5, window_bounds = array<i64: 1, 32, 1>}, {transform_indices = @transform_6, window_bounds = array<i64: 1, 32, 1>}]} {
    %c0 = arith.constant 0 : index
    %c0_0 = arith.constant 0 : index
    %0 = vector.load %arg1[%c0, %c0_0] : memref<16x128xf32, #tpu.memory_space<vmem>>, vector<16x128xf32>
    %c0_1 = arith.constant 0 : index
    %c0_2 = arith.constant 0 : index
    %1 = vector.load %arg3[%c0_1, %c0_2] : memref<16x1xf32, #tpu.memory_space<vmem>>, vector<16x1xf32>
    %2 = vector.broadcast %1 : vector<16x1xf32> to vector<16x128xf32>
    %3 = arith.mulf %0, %2 : vector<16x128xf32>
    %c0_3 = arith.constant 0 : index
    %c0_4 = arith.constant 0 : index
    %4 = vector.load %arg4[%c0_3, %c0_4] : memref<16x1xf32, #tpu.memory_space<vmem>>, vector<16x1xf32>
    %5 = vector.broadcast %4 : vector<16x1xf32> to vector<16x128xf32>
    %6 = arith.addf %3, %5 : vector<16x128xf32>
    %cst = arith.constant 0.000000e+00 : f32
    %7 = vector.broadcast %cst : f32 to vector<16x128xf32>
    %8 = arith.maximumf %6, %7 : vector<16x128xf32>
    %c0_5 = arith.constant 0 : index
    %c0_6 = arith.constant 0 : index
    %9 = vector.load %arg2[%c0_5, %c0_6] : memref<32x16xf32, #tpu.memory_space<vmem>>, vector<32x16xf32>
    %cst_7 = arith.constant dense<0.000000e+00> : vector<32x128xf32>
    %10 = tpu.matmul %9, %8, %cst_7 {dimension_numbers = #tpu.dot_dimension_numbers<[1], [0], [0], [1], [0, 0, 1, 1], [], []>} : vector<32x16xf32>, vector<16x128xf32>, vector<32x128xf32> -> vector<32x128xf32>
    %c0_8 = arith.constant 0 : index
    %c0_9 = arith.constant 0 : index
    %11 = vector.load %arg5[%c0_8, %c0_9] : memref<32x128xf32, #tpu.memory_space<vmem>>, vector<32x128xf32>
    tpu.vector_store %arg5[%c0_8, %c0_9], %10 {strides = array<i32>} : memref<32x128xf32, #tpu.memory_space<vmem>>, vector<32x128xf32>,
    %cst_10 = arith.constant dense<0.000000e+00> : vector<32xf32>
    %12 = vector.multi_reduction <add>, %10, %cst_10 [1] : vector<32x128xf32> to vector<32xf32>
    %13 = vector.shape_cast %12 : vector<32xf32> to vector<32x1xf32>
    %14 = vector.shape_cast %13 : vector<32x1xf32> to vector<1x32x1xf32>
    %c0_11 = arith.constant 0 : index
    %c0_12 = arith.constant 0 : index
    %c0_13 = arith.constant 0 : index
    %15 = vector.load %arg6[%c0_11, %c0_12, %c0_13] : memref<1x32x1xf32, #tpu.memory_space<vmem>>, vector<1x32x1xf32>
    tpu.vector_store %arg6[%c0_11, %c0_12, %c0_13], %14 {strides = array<i32>} : memref<1x32x1xf32, #tpu.memory_space<vmem>>, vector<1x32x1xf32>,
    %16 = arith.mulf %10, %10 : vector<32x128xf32>
    %cst_14 = arith.constant dense<0.000000e+00> : vector<32xf32>
    %17 = vector.multi_reduction <add>, %16, %cst_14 [1] : vector<32x128xf32> to vector<32xf32>
    %18 = vector.shape_cast %17 : vector<32xf32> to vector<32x1xf32>
    %19 = vector.shape_cast %18 : vector<32x1xf32> to vector<1x32x1xf32>
    %c0_15 = arith.constant 0 : index
    %c0_16 = arith.constant 0 : index
    %c0_17 = arith.constant 0 : index
    %20 = vector.load %arg7[%c0_15, %c0_16, %c0_17] : memref<1x32x1xf32, #tpu.memory_space<vmem>>, vector<1x32x1xf32>
    tpu.vector_store %arg7[%c0_15, %c0_16, %c0_17], %19 {strides = array<i32>} : memref<1x32x1xf32, #tpu.memory_space<vmem>>, vector<1x32x1xf32>,
    return
  }
  func.func @transform_0(%arg0: i32) -> (i32, i32) {
    %c0_i32 = arith.constant 0 : i32
    %c0_i32_0 = arith.constant 0 : i32
    return %c0_i32, %arg0 : i32, i32
  }
  func.func @transform_1(%arg0: i32) -> (i32, i32) {
    %c0_i32 = arith.constant 0 : i32
    %c0_i32_0 = arith.constant 0 : i32
    %c0_i32_1 = arith.constant 0 : i32
    return %c0_i32, %c0_i32_0 : i32, i32
  }
  func.func @transform_2(%arg0: i32) -> (i32, i32) {
    %c0_i32 = arith.constant 0 : i32
    %c0_i32_0 = arith.constant 0 : i32
    %c0_i32_1 = arith.constant 0 : i32
    return %c0_i32, %c0_i32_0 : i32, i32
  }
  func.func @transform_3(%arg0: i32) -> (i32, i32) {
    %c0_i32 = arith.constant 0 : i32
    %c0_i32_0 = arith.constant 0 : i32
    %c0_i32_1 = arith.constant 0 : i32
    return %c0_i32, %c0_i32_0 : i32, i32
  }
  func.func @transform_4(%arg0: i32) -> (i32, i32) {
    %c0_i32 = arith.constant 0 : i32
    %c0_i32_0 = arith.constant 0 : i32
    return %c0_i32, %arg0 : i32, i32
  }
  func.func @transform_5(%arg0: i32) -> (i32, i32, i32) {
    %c0_i32 = arith.constant 0 : i32
    %c0_i32_0 = arith.constant 0 : i32
    %c0_i32_1 = arith.constant 0 : i32
    return %arg0, %c0_i32, %c0_i32_0 : i32, i32, i32
  }
  func.func @transform_6(%arg0: i32) -> (i32, i32, i32) {
    %c0_i32 = arith.constant 0 : i32
    %c0_i32_0 = arith.constant 0 : i32
    %c0_i32_1 = arith.constant 0 : i32
    return %arg0, %c0_i32, %c0_i32_0 : i32, i32, i32
  }
}

</mosaic_0001>

<llo_original>
// kernel: decoder_forward.4
$region0: #{decoder_forward.4}
  #allocation0 [shape = 'u32[]', space=smem, size = 0x4, offset = 0x4, fixed_abs, tag = 'smem constant byte address 0x4 - core index']
  #allocation1 [shape = 'u32[144,128]{1,0:T(1,128)}', space=vmem, size = 0x12000, scoped, tag = 'internal scratch']
  %s0 = inlined_call_operand.vmem [shape: f32[16,512], index: 0, kind: input, shape index: {}]
  %s1 = inlined_call_operand.vmem [shape: f32[4,16], index: 1, kind: input, shape index: {}]
  %s2 = inlined_call_operand.vmem [shape: f32[4,512], index: 2, kind: output, shape index: {0}]
  %s3 = inlined_call_operand.vmem [shape: f32[4,4,1], index: 3, kind: output, shape index: {1}]
  %s4 = inlined_call_operand.vmem [shape: f32[4,4,1], index: 4, kind: output, shape index: {2}]
  %5 = xla_tuple %s2, %s3, %s4
  %s6 = sld [smem:[#allocation0]]
  $region95: #{decoder_forward.4} parent=0
    _
  %s8 = ssub.s32 1, %s6
  %s9 = scalar_select 0, %s8, %s6
  $region1: #{decoder_forward.4} parent=0
    #allocation2 [shape = 'u8[16384]{0}', space=vmem, size = 0x4000, scoped, tag = 'input window, operand 0']
    loop: start=0, step=1, limit=6
    $region2: #{decoder_forward.4} parent=1 // loop_pre_header
      _
    $region3: #{decoder_forward.4} parent=1 // loop_header
      %s11 = sphi 0, %s15
      %p12 = scmp.ge.s32.totalorder %s11, 6
      %s21 = sphi 0, %s23
      %s24 = sphi 0, %s21
      %s25 = sphi 0, %s24
      %s41 = sphi 0, %s25
      %s45 = sphi 0, %s45
      %s47 = sphi 0, %s45
      %s48 = sphi 0, %s47
      %s62 = sphi 0, %s48
      %s68 = sphi 0, %s70
      %s71 = sphi 0, %s68
      %s72 = sphi 0, %s71
      %s88 = sphi 0, %s72
      %s94 = sphi 0, %s96
      %s97 = sphi 0, %s94
      %s98 = sphi 0, %s97
      %s114 = sphi 0, %s98
      %s120 = sphi 0, %s122
      %s123 = sphi 0, %s120
      %s124 = sphi 0, %s123
      %s140 = sphi 0, %s124
    $region4: #{decoder_forward.4} parent=1 // loop_header_branch
      %14 = sbr.rel (%p12) target = $region8
    $region5: #{decoder_forward.4} parent=1 // loop_body
      %s16 = ssub.s32 %s11, 1
      %s17 = ssub.s32 %s11, 2
      %s18 = sadd.s32 %s11, 1
      %s19 = ssub.s32 %s11, %s18
      %p20 = scmp.eq.s32.totalorder %s19, 0
      %s22 = sadd.s32 %s21, 1
      %s23 = scalar_select %p20, %s21, %s22
      %p26 = pneg %p20
      %p27 = scmp.eq.s32.totalorder %s11, 3
      %p28 = por %p26, %p27
      %p29 = scmp.ne.s32.totalorder %s21, %s24
      %p30 = scmp.eq.s32.totalorder %s11, 0
      %p31 = por %p29, %p30
      %p32 = scmp.ne.s32.totalorder %s21, %s24
      %p33 = scmp.eq.s32.totalorder %s16, 3
      %p34 = por %p32, %p33
      %p35 = scmp.ne.s32.totalorder %s24, %s25
      %p36 = scmp.eq.s32.totalorder %s16, 0
      %p37 = por %p35, %p36
      %p38 = scmp.ne.s32.totalorder %s24, %s25
      %p39 = scmp.eq.s32.totalorder %s17, 3
      %p40 = por %p38, %p39
      %p42 = scmp.ne.s32.totalorder %s25, %s41
      %p43 = scmp.eq.s32.totalorder %s17, 0
      %p44 = por %p42, %p43
      %s46 = sadd.s32 %s45, 1
      %p49 = scmp.eq.s32.totalorder %s11, 3
      %p50 = scmp.ne.s32.totalorder %s45, %s47
      %p51 = scmp.eq.s32.totalorder %s11, 0
      %p52 = por %p50, %p51
      %p53 = scmp.ne.s32.totalorder %s45, %s47
      %p54 = scmp.eq.s32.totalorder %s16, 3
      %p55 = por %p53, %p54
      %p56 = scmp.ne.s32.totalorder %s47, %s48
      %p57 = scmp.eq.s32.totalorder %s16, 0
      %p58 = por %p56, %p57
      %p59 = scmp.ne.s32.totalorder %s47, %s48
      %p60 = scmp.eq.s32.totalorder %s17, 3
      %p61 = por %p59, %p60
      %p63 = scmp.ne.s32.totalorder %s48, %s62
      %p64 = scmp.eq.s32.totalorder %s17, 0
      %p65 = por %p63, %p64
      %s66 = ssub.s32 %s11, %s18
      %p67 = scmp.eq.s32.totalorder %s66, 0
      %s69 = sadd.s32 %s68, 1
      %s70 = scalar_select %p67, %s68, %s69
      %p73 = pneg %p67
      %p74 = scmp.eq.s32.totalorder %s11, 3
      %p75 = por %p73, %p74
      %p76 = scmp.ne.s32.totalorder %s68, %s71
      %p77 = scmp.eq.s32.totalorder %s11, 0
      %p78 = por %p76, %p77
      %p79 = scmp.ne.s32.totalorder %s68, %s71
      %p80 = scmp.eq.s32.totalorder %s16, 3
      %p81 = por %p79, %p80
      %p82 = scmp.ne.s32.totalorder %s71, %s72
      %p83 = scmp.eq.s32.totalorder %s16, 0
      %p84 = por %p82, %p83
      %p85 = scmp.ne.s32.totalorder %s71, %s72
      %p86 = scmp.eq.s32.totalorder %s17, 3
      %p87 = por %p85, %p86
      %p89 = scmp.ne.s32.totalorder %s72, %s88
      %p90 = scmp.eq.s32.totalorder %s17, 0
      %p91 = por %p89, %p90
      %s92 = ssub.s32 %s11, %s18
      %p93 = scmp.eq.s32.totalorder %s92, 0
      %s95 = sadd.s32 %s94, 1
      %s96 = scalar_select %p93, %s94, %s95
      %p99 = pneg %p93
      %p100 = scmp.eq.s32.totalorder %s11, 3
      %p101 = por %p99, %p100
      %p102 = scmp.ne.s32.totalorder %s94, %s97
      %p103 = scmp.eq.s32.totalorder %s11, 0
      %p104 = por %p102, %p103
      %p105 = scmp.ne.s32.totalorder %s94, %s97
      %p106 = scmp.eq.s32.totalorder %s16, 3
      %p107 = por %p105, %p106
      %p108 = scmp.ne.s32.totalorder %s97, %s98
      %p109 = scmp.eq.s32.totalorder %s16, 0
      %p110 = por %p108, %p109
      %p111 = scmp.ne.s32.totalorder %s97, %s98
      %p112 = scmp.eq.s32.totalorder %s17, 3
      %p113 = por %p111, %p112
      %p115 = scmp.ne.s32.totalorder %s98, %s114
      %p116 = scmp.eq.s32.totalorder %s17, 0
      %p117 = por %p115, %p116
      %s118 = ssub.s32 %s11, %s18
      %p119 = scmp.eq.s32.totalorder %s118, 0
      %s121 = sadd.s32 %s120, 1
      %s122 = scalar_select %p119, %s120, %s121
      %p125 = pneg %p119
      %p126 = scmp.eq.s32.totalorder %s11, 3
      %p127 = por %p125, %p126
      %p128 = scmp.ne.s32.totalorder %s120, %s123
      %p129 = scmp.eq.s32.totalorder %s11, 0
      %p130 = por %p128, %p129
      %p131 = scmp.ne.s32.totalorder %s120, %s123
      %p132 = scmp.eq.s32.totalorder %s16, 3
      %p133 = por %p131, %p132
      %p134 = scmp.ne.s32.totalorder %s123, %s124
      %p135 = scmp.eq.s32.totalorder %s16, 0
      %p136 = por %p134, %p135
      %p137 = scmp.ne.s32.totalorder %s123, %s124
      %p138 = scmp.eq.s32.totalorder %s17, 3
      %p139 = por %p137, %p138
      %p141 = scmp.ne.s32.totalorder %s124, %s140
      %p142 = scmp.eq.s32.totalorder %s17, 0
      %p143 = por %p141, %p142
      %p144 = scmp.le.s32.totalorder 1, %s11
      %p145 = scmp.lt.s32.totalorder %s11, 5
      %p146 = pnand %p144, %p145
      %p147 = pneg %p146
      // Predicated region
      $region9: #{decoder_forward.4} parent=5 // pred_check
        _
      $region10: #{decoder_forward.4} parent=5 // pred_check_branch
        %149 = sbr.rel (%p146) target = $region12
      $region11: #{decoder_forward.4} parent=5 // pred_region
        %s150 = ssub.s32 %s11, 1
        // Predicated region
        $region13: #{decoder_forward.4} parent=11 // pred_check
          %p151 = pneg %p58
        $region14: #{decoder_forward.4} parent=11 // pred_check_branch
          %153 = sbr.rel (%p151) target = $region16
        $region15: #{decoder_forward.4} parent=11 // pred_region
          _
        $region16: #{decoder_forward.4} parent=11 // pred_fallthru
          _
      $region12: #{decoder_forward.4} parent=5 // pred_fallthru
        _
      %p154 = scmp.lt.s32.totalorder %s11, 4
      // Predicated region
      $region17: #{decoder_forward.4} parent=5 // pred_check
        %p155 = pneg %p154
      $region18: #{decoder_forward.4} parent=5 // pred_check_branch
        %157 = sbr.rel (%p155) target = $region20
      $region19: #{decoder_forward.4} parent=5 // pred_region
        // Predicated region
        $region21: #{decoder_forward.4} parent=19 // pred_check
          %p158 = pneg %p31
        $region22: #{decoder_forward.4} parent=19 // pred_check_branch
          %160 = sbr.rel (%p158) target = $region24
        $region23: #{decoder_forward.4} parent=19 // pred_region
          %s161 = sand.u32 %s21, 1
          %s162 = sand.u32 %s21, 1
          %s163 = smul.addr %s162, 16
          %s164 = scalar_lea.vmem [#allocation2], %s163
          %s165 = smul.addr %s11, 8
          %s166 = scalar_lea.vmem %s0, %s165
          // Predicated region
          $region25: #{decoder_forward.4} parent=23 // pred_check
            _
          $region26: #{decoder_forward.4} parent=23 // pred_check_branch
            %168 = sbr.rel (0) target = $region28
          $region27: #{decoder_forward.4} parent=23 // pred_region
            // Predicated region
            $region29: #{decoder_forward.4} parent=27 // pred_check
              _
            $region30: #{decoder_forward.4} parent=27 // pred_check_branch
              %170 = sbr.rel (0) target = $region32
            $region31: #{decoder_forward.4} parent=27 // pred_region
              // Predicated region
              $region44: #{decoder_forward.4} parent=31 // pred_check
                _
              $region45: #{decoder_forward.4} parent=31 // pred_check_branch
                %187 = sbr.rel (0) target = $region47
              $region46: #{decoder_forward.4} parent=31 // pred_region
                loop: start=0, step=1, limit=1
                $region48: #{decoder_forward.4} parent=46 // loop_pre_header
                  _
                $region49: #{decoder_forward.4} parent=46 // loop_header
                  %s189 = sphi 0, %s193
                  %p190 = scmp.ge.s32.totalorder %s189, 1
                  %s194 = sphi %s166, %s166
                  %s195 = sphi %s164, %s164
                $region50: #{decoder_forward.4} parent=46 // loop_header_branch
                  %192 = sbr.rel (%p190) target = $region54
                $region51: #{decoder_forward.4} parent=46 // loop_body
                  %v196 = vld [vmem:[%s194] sm:$0xff]
                  %197 = vst [vmem:[%s195] sm:$0xff] %v196
                  %v198 = vld [vmem:[%s194 + $0x20] sm:$0xff]
                  %199 = vst [vmem:[%s195 + $0x8] sm:$0xff] %v198
                $region52: #{decoder_forward.4} parent=46 // loop_footer
                  %s193 = sadd.s32 1, %s189
                $region53: #{decoder_forward.4} parent=46 // loop_footer_branch
                  %188 = sbr.rel target = $region49
                $region54: #{decoder_forward.4} parent=46 // loop_exit
                  _
              $region47: #{decoder_forward.4} parent=31 // pred_fallthru
                _
              // Predicated region
              $region55: #{decoder_forward.4} parent=31 // pred_check
                _
              $region56: #{decoder_forward.4} parent=31 // pred_check_branch
                %201 = sbr.rel target = $region58
              $region57: #{decoder_forward.4} parent=31 // pred_region
                _
              $region58: #{decoder_forward.4} parent=31 // pred_fallthru
                _
            $region32: #{decoder_forward.4} parent=27 // pred_fallthru
              _
            // Predicated region
            $region33: #{decoder_forward.4} parent=27 // pred_check
              _
            $region34: #{decoder_forward.4} parent=27 // pred_check_branch
              %172 = sbr.rel target = $region36
            $region35: #{decoder_forward.4} parent=27 // pred_region
              loop: start=0, step=1, limit=1
              $region37: #{decoder_forward.4} parent=35 // loop_pre_header
                _
              $region38: #{decoder_forward.4} parent=35 // loop_header
                %s175 = sphi 0, %s179
                %p176 = scmp.ge.s32.totalorder %s175, 1
                %s180 = sphi %s166, %s166
                %s181 = sphi %s164, %s164
              $region39: #{decoder_forward.4} parent=35 // loop_header_branch
                %178 = sbr.rel (%p176) target = $region43
              $region40: #{decoder_forward.4} parent=35 // loop_body
                %v182 = vld [vmem:[%s180] sm:$0xff]
                %183 = vst [vmem:[%s181] sm:$0xff] %v182
                %v184 = vld [vmem:[%s180 + $0x20] sm:$0xff]
                %185 = vst [vmem:[%s181 + $0x8] sm:$0xff] %v184
              $region41: #{decoder_forward.4} parent=35 // loop_footer
                %s179 = sadd.s32 1, %s175
              $region42: #{decoder_forward.4} parent=35 // loop_footer_branch
                %174 = sbr.rel target = $region38
              $region43: #{decoder_forward.4} parent=35 // loop_exit
                _
            $region36: #{decoder_forward.4} parent=27 // pred_fallthru
              _
          $region28: #{decoder_forward.4} parent=23 // pred_fallthru
            _
          %202 = vnop
        $region24: #{decoder_forward.4} parent=19 // pred_fallthru
          _
      $region20: #{decoder_forward.4} parent=5 // pred_fallthru
        _
      %p203 = scmp.le.s32.totalorder 1, %s11
      %p204 = scmp.lt.s32.totalorder %s11, 5
      %p205 = pnand %p203, %p204
      %p206 = pneg %p205
      // Predicated region
      $region59: #{decoder_forward.4} parent=5 // pred_check
        _
      $region60: #{decoder_forward.4} parent=5 // pred_check_branch
        %208 = sbr.rel (%p205) target = $region62
      $region61: #{decoder_forward.4} parent=5 // pred_region
        %s209 = ssub.s32 %s11, 1
        %s210 = sand.u32 %s24, 1
        %s211 = sand.u32 %s24, 1
        %s212 = smul.addr %s211, 16
        %s213 = scalar_lea.vmem [#allocation2], %s212
        // Predicated region
        $region63: #{decoder_forward.4} parent=61 // pred_check
          %p214 = pneg %p37
        $region64: #{decoder_forward.4} parent=61 // pred_check_branch
          %216 = sbr.rel (%p214) target = $region66
        $region65: #{decoder_forward.4} parent=61 // pred_region
          _
        $region66: #{decoder_forward.4} parent=61 // pred_fallthru
          _
        %s217 = sand.u32 %s24, 1
        %s218 = sand.u32 %s24, 1
        %s219 = smul.addr %s218, 16
        %s220 = scalar_lea.vmem [#allocation2], %s219
        %p221 = pneg %p37
        %p222 = pneg %p34
        %p223 = pneg %p58
        %p224 = pneg %p55
        %p225 = pneg %p84
        %p226 = pneg %p81
        %p227 = scmp.lt.s32.totalorder %s16, 3
        %s228 = scalar_select %p227, %s16, 3
        %s229 = smul.addr %s228, 4
        %s230 = scalar_lea.vmem %s2, %s229
        %p231 = pneg %p110
        %p232 = pneg %p107
        %p233 = scmp.lt.s32.totalorder %s16, 3
        %s234 = scalar_select %p233, %s16, 3
        %s235 = smul.addr %s234, 4
        %s236 = scalar_lea.vmem %s3, %s235
        %p237 = pneg %p136
        %p238 = pneg %p133
        %p239 = scmp.lt.s32.totalorder %s16, 3
        %s240 = scalar_select %p239, %s16, 3
        %s241 = smul.addr %s240, 4
        %s242 = scalar_lea.vmem %s4, %s241
        %p243 = scmp.lt.s32.totalorder %s16, 3
        %s244 = scalar_select %p243, %s16, 3
        %s245 = smul.addr %s244, 4
        %s246 = scalar_lea.vmem %s2, %s245
        %p247 = scmp.lt.s32.totalorder %s16, 3
        %s248 = scalar_select %p247, %s16, 3
        %s249 = smul.addr %s248, 4
        %s250 = scalar_lea.vmem %s3, %s249
        %p251 = scmp.lt.s32.totalorder %s16, 3
        %s252 = scalar_select %p251, %s16, 3
        %s253 = smul.addr %s252, 4
        %s254 = scalar_lea.vmem %s4, %s253
        %v255 = vld [vmem:[%s213] sm:$0xff]
        %v256 = vld [vmem:[%s213 + $0x8] sm:$0xff]
        %v257 = vld [vmem:[%s1] sm:$0xf]
        %vm258 = vcmask 130048
        %v260 = vsel %vm258, %v257, 0
        %262 = vmatprep.subr.mxu0 0.0
        %263 = vmatpush1.msra.mxu0 %v255
        %264 = vmatprep.subr.mxu0 0.0
        %265 = vmatpush1.msra.mxu0 %v256
        %266 = vmatprep.subr.mxu0 0.0
        %267 = vmatpush1.msra.mxu0 0.0
        %268 = vmatprep.subr.mxu0 0.0
        %269 = vmatpush1.msra.mxu0 0.0
        %270 = vmatprep.subr.mxu0 0.0
        %271 = vmatpush1.msra.mxu0 0.0
        %272 = vmatprep.subr.mxu0 0.0
        %273 = vmatpush1.msra.mxu0 0.0
        %274 = vmatprep.subr.mxu0 0.0
        %275 = vmatpush1.msra.mxu0 0.0
        %276 = vmatprep.subr.mxu0 0.0
        %277 = vmatpush1.msra.mxu0 0.0
        %278 = vmatprep.subr.mxu0 0.0
        %279 = vmatpush1.msra.mxu0 0.0
        %280 = vmatprep.subr.mxu0 0.0
        %281 = vmatpush1.msra.mxu0 0.0
        %282 = vmatprep.subr.mxu0 0.0
        %283 = vmatpush1.msra.mxu0 0.0
        %284 = vmatprep.subr.mxu0 0.0
        %285 = vmatpush1.msra.mxu0 0.0
        %286 = vmatprep.subr.mxu0 0.0
        %287 = vmatpush1.msra.mxu0 0.0
        %288 = vmatprep.subr.mxu0 0.0
        %289 = vmatpush1.msra.mxu0 0.0
        %290 = vmatprep.subr.mxu0 0.0
        %291 = vmatpush1.msra.mxu0 0.0
        %292 = vmatprep.subr.mxu0 0.0
        %293 = vmatpush1.msra.mxu0 0.0
        %294 = vmatprep.subr.mxu0 0.0
        %295 = vmatpush1.msra.mxu0 0.0
        %296 = vmatprep.subr.mxu0 0.0
        %297 = vmatpush1.msra.mxu0 0.0
        %298 = vmatprep.subr.mxu0 0.0
        %299 = vmatpush1.msra.mxu0 0.0
        %300 = vmatprep.subr.mxu0 0.0
        %301 = vmatpush1.msra.mxu0 0.0
        %302 = vmatprep.subr.mxu0 0.0
        %303 = vmatpush1.msra.mxu0 0.0
        %304 = vmatprep.subr.mxu0 0.0
        %305 = vmatpush1.msra.mxu0 0.0
        %306 = vmatprep.subr.mxu0 0.0
        %307 = vmatpush1.msra.mxu0 0.0
        %308 = vmatprep.subr.mxu0 0.0
        %309 = vmatpush1.msra.mxu0 0.0
        %310 = vmatprep.subr.mxu0 0.0
        %311 = vmatpush1.msra.mxu0 0.0
        %312 = vmatprep.subr.mxu0 0.0
        %313 = vmatpush1.msra.mxu0 0.0
        %314 = vmatprep.subr.mxu0 0.0
        %315 = vmatpush1.msra.mxu0 0.0
        %316 = vmatprep.subr.mxu0 0.0
        %317 = vmatpush1.msra.mxu0 0.0
        %318 = vmatprep.subr.mxu0 0.0
        %319 = vmatpush1.msra.mxu0 0.0
        %320 = vmatprep.subr.mxu0 0.0
        %321 = vmatpush1.msra.mxu0 0.0
        %322 = vmatprep.subr.mxu0 0.0
        %323 = vmatpush1.msra.mxu0 0.0
        %324 = vmatprep.subr.mxu0 0.0
        %325 = vmatpush1.msra.mxu0 0.0
        %326 = vmatprep.mubr.f32.mxu0 0.0
        %327 = vmatmul.mubr.f32.gmra.mrb[0].mxu0 %v260
        %v328 = vpop.f32.mrb[0].mxu0
        %v329 = vadd.f32 0.0, %v328
        %v330 = vpop.f32.mrb[0].mxu0
        %331 = vdwg.mxu0
        %332 = vst [vmem:[%s246] sm:$0xf] %v329
        %vm333 = vcmask 1043456
        %v334 = vsel %vm333, %v329, 0.0
        %335 = vadd.xlane.f32.xlu0 %v334
        %v336 = vpop.xlane.xlu0 %335
        %vm337 = vcmask 3072
        %338 = vst.msk [vmem:[%s250] sm:$0xf] %vm337, %v336
        %v339 = vmul.f32 %v329, %v329
        %v340 = vsel %vm333, %v339, 0.0
        %341 = vadd.xlane.f32.xlu0 %v340
        %v342 = vpop.xlane.xlu0 %341
        %343 = vst.msk [vmem:[%s254] sm:$0xf] %vm337, %v342
        %p344 = scmp.lt.s32.totalorder %s16, 3
        %s345 = scalar_select %p344, %s16, 3
        %s346 = smul.addr %s345, 4
        %s347 = scalar_lea.vmem %s2, %s346
        %p348 = scmp.lt.s32.totalorder %s16, 3
        %s349 = scalar_select %p348, %s16, 3
        %s350 = smul.addr %s349, 4
        %s351 = scalar_lea.vmem %s3, %s350
        %p352 = scmp.lt.s32.totalorder %s16, 3
        %s353 = scalar_select %p352, %s16, 3
        %s354 = smul.addr %s353, 4
        %s355 = scalar_lea.vmem %s4, %s354
        // Predicated region
        $region67: #{decoder_forward.4} parent=61 // pred_check
          %p356 = pneg %p81
        $region68: #{decoder_forward.4} parent=61 // pred_check_branch
          %358 = sbr.rel (%p356) target = $region70
        $region69: #{decoder_forward.4} parent=61 // pred_region
          _
        $region70: #{decoder_forward.4} parent=61 // pred_fallthru
          _
        // Predicated region
        $region71: #{decoder_forward.4} parent=61 // pred_check
          %p359 = pneg %p107
        $region72: #{decoder_forward.4} parent=61 // pred_check_branch
          %361 = sbr.rel (%p359) target = $region74
        $region73: #{decoder_forward.4} parent=61 // pred_region
          _
        $region74: #{decoder_forward.4} parent=61 // pred_fallthru
          _
        // Predicated region
        $region75: #{decoder_forward.4} parent=61 // pred_check
          %p362 = pneg %p133
        $region76: #{decoder_forward.4} parent=61 // pred_check_branch
          %364 = sbr.rel (%p362) target = $region78
        $region77: #{decoder_forward.4} parent=61 // pred_region
          _
        $region78: #{decoder_forward.4} parent=61 // pred_fallthru
          _
      $region62: #{decoder_forward.4} parent=5 // pred_fallthru
        _
      %p365 = scmp.le.s32.totalorder 2, %s11
      // Predicated region
      $region79: #{decoder_forward.4} parent=5 // pred_check
        %p366 = pneg %p365
      $region80: #{decoder_forward.4} parent=5 // pred_check_branch
        %368 = sbr.rel (%p366) target = $region82
      $region81: #{decoder_forward.4} parent=5 // pred_region
        %s369 = ssub.s32 %s11, 2
        // Predicated region
        $region83: #{decoder_forward.4} parent=81 // pred_check
          %p370 = pneg %p87
        $region84: #{decoder_forward.4} parent=81 // pred_check_branch
          %372 = sbr.rel (%p370) target = $region86
        $region85: #{decoder_forward.4} parent=81 // pred_region
          %p373 = scmp.lt.s32.totalorder %s17, 3
          %s374 = scalar_select %p373, %s17, 3
          %s375 = smul.addr %s374, 4
          %s376 = scalar_lea.vmem %s2, %s375
        $region86: #{decoder_forward.4} parent=81 // pred_fallthru
          _
        // Predicated region
        $region87: #{decoder_forward.4} parent=81 // pred_check
          %p377 = pneg %p113
        $region88: #{decoder_forward.4} parent=81 // pred_check_branch
          %379 = sbr.rel (%p377) target = $region90
        $region89: #{decoder_forward.4} parent=81 // pred_region
          %p380 = scmp.lt.s32.totalorder %s17, 3
          %s381 = scalar_select %p380, %s17, 3
          %s382 = smul.addr %s381, 4
          %s383 = scalar_lea.vmem %s3, %s382
        $region90: #{decoder_forward.4} parent=81 // pred_fallthru
          _
        // Predicated region
        $region91: #{decoder_forward.4} parent=81 // pred_check
          %p384 = pneg %p139
        $region92: #{decoder_forward.4} parent=81 // pred_check_branch
          %386 = sbr.rel (%p384) target = $region94
        $region93: #{decoder_forward.4} parent=81 // pred_region
          %p387 = scmp.lt.s32.totalorder %s17, 3
          %s388 = scalar_select %p387, %s17, 3
          %s389 = smul.addr %s388, 4
          %s390 = scalar_lea.vmem %s4, %s389
        $region94: #{decoder_forward.4} parent=81 // pred_fallthru
          _
      $region82: #{decoder_forward.4} parent=5 // pred_fallthru
        _
    $region6: #{decoder_forward.4} parent=1 // loop_footer
      %s15 = sadd.s32 1, %s11
    $region7: #{decoder_forward.4} parent=1 // loop_footer_branch
      %10 = sbr.rel target = $region3
    $region8: #{decoder_forward.4} parent=1 // loop_exit
      _

// kernel: decoder_forward.5
$region0: #{decoder_forward.5}
  #allocation0 [shape = 'u32[]', space=smem, size = 0x4, offset = 0x4, fixed_abs, tag = 'smem constant byte address 0x4 - core index']
  #allocation1 [shape = 'u32[144,128]{1,0:T(1,128)}', space=vmem, size = 0x12000, scoped, tag = 'internal scratch']
  %s0 = inlined_call_operand.vmem [shape: f32[4,512], index: 0, kind: input, shape index: {}, may-alias: {0,1}]
  %s1 = inlined_call_operand.vmem [shape: f32[4,512], index: 1, kind: input, shape index: {}, may-alias: {0,1}]
  %s2 = inlined_call_operand.vmem [shape: f32[4,16,4], index: 2, kind: input, shape index: {}]
  %s3 = inlined_call_operand.vmem [shape: f32[3,384], index: 3, kind: input, shape index: {}]
  %s4 = inlined_call_operand.vmem [shape: f32[4,1], index: 4, kind: input, shape index: {}]
  %s5 = inlined_call_operand.vmem [shape: f32[4,1], index: 5, kind: input, shape index: {}]
  %s6 = inlined_call_operand.vmem [shape: f32[16,384], index: 6, kind: output, shape index: {0}]
  %s7 = inlined_call_operand.vmem [shape: f32[3,16,1], index: 7, kind: output, shape index: {1}]
  %s8 = inlined_call_operand.vmem [shape: f32[3,16,1], index: 8, kind: output, shape index: {2}]
  %9 = xla_tuple %s6, %s7, %s8
  %s10 = sld [smem:[#allocation0]]
  $region107: #{decoder_forward.5} parent=0
    _
  %s12 = ssub.s32 1, %s10
  %s13 = scalar_select 0, %s12, %s10
  $region1: #{decoder_forward.5} parent=0
    #allocation2 [shape = 'u8[16384]{0}', space=vmem, size = 0x4000, scoped, tag = 'output window, operand 0']
    loop: start=0, step=1, limit=5
    $region2: #{decoder_forward.5} parent=1 // loop_pre_header
      _
    $region3: #{decoder_forward.5} parent=1 // loop_header
      %s15 = sphi 0, %s19
      %p16 = scmp.ge.s32.totalorder %s15, 5
      %s25 = sphi 0, %s27
      %s28 = sphi 0, %s25
      %s29 = sphi 0, %s28
      %s45 = sphi 0, %s29
      %s53 = sphi 0, %s55
      %s56 = sphi 0, %s53
      %s57 = sphi 0, %s56
      %s73 = sphi 0, %s57
      %s77 = sphi 0, %s77
      %s79 = sphi 0, %s77
      %s80 = sphi 0, %s79
      %s94 = sphi 0, %s80
      %s100 = sphi 0, %s102
      %s103 = sphi 0, %s100
      %s104 = sphi 0, %s103
      %s120 = sphi 0, %s104
      %s124 = sphi 0, %s124
      %s126 = sphi 0, %s124
      %s127 = sphi 0, %s126
      %s141 = sphi 0, %s127
      %s145 = sphi 0, %s145
      %s147 = sphi 0, %s145
      %s148 = sphi 0, %s147
      %s162 = sphi 0, %s148
      %s168 = sphi 0, %s170
      %s171 = sphi 0, %s168
      %s172 = sphi 0, %s171
      %s188 = sphi 0, %s172
      %s194 = sphi 0, %s196
      %s197 = sphi 0, %s194
      %s198 = sphi 0, %s197
      %s214 = sphi 0, %s198
      %s220 = sphi 0, %s222
      %s223 = sphi 0, %s220
      %s224 = sphi 0, %s223
      %s240 = sphi 0, %s224
    $region4: #{decoder_forward.5} parent=1 // loop_header_branch
      %18 = sbr.rel (%p16) target = $region8
    $region5: #{decoder_forward.5} parent=1 // loop_body
      %s20 = ssub.s32 %s15, 1
      %s21 = ssub.s32 %s15, 2
      %s22 = sadd.s32 %s15, 1
      %s23 = ssub.s32 %s15, %s22
      %p24 = scmp.eq.s32.totalorder %s23, 0
      %s26 = sadd.s32 %s25, 1
      %s27 = scalar_select %p24, %s25, %s26
      %p30 = pneg %p24
      %p31 = scmp.eq.s32.totalorder %s15, 2
      %p32 = por %p30, %p31
      %p33 = scmp.ne.s32.totalorder %s25, %s28
      %p34 = scmp.eq.s32.totalorder %s15, 0
      %p35 = por %p33, %p34
      %p36 = scmp.ne.s32.totalorder %s25, %s28
      %p37 = scmp.eq.s32.totalorder %s20, 2
      %p38 = por %p36, %p37
      %p39 = scmp.ne.s32.totalorder %s28, %s29
      %p40 = scmp.eq.s32.totalorder %s20, 0
      %p41 = por %p39, %p40
      %p42 = scmp.ne.s32.totalorder %s28, %s29
      %p43 = scmp.eq.s32.totalorder %s21, 2
      %p44 = por %p42, %p43
      %p46 = scmp.ne.s32.totalorder %s29, %s45
      %p47 = scmp.eq.s32.totalorder %s21, 0
      %p48 = por %p46, %p47
      %s49 = sadd.s32 %s15, 1
      %s50 = sadd.s32 %s22, 1
      %s51 = ssub.s32 %s49, %s50
      %p52 = scmp.eq.s32.totalorder %s51, 0
      %s54 = sadd.s32 %s53, 1
      %s55 = scalar_select %p52, %s53, %s54
      %p58 = pneg %p52
      %p59 = scmp.eq.s32.totalorder %s15, 2
      %p60 = por %p58, %p59
      %p61 = scmp.ne.s32.totalorder %s53, %s56
      %p62 = scmp.eq.s32.totalorder %s15, 0
      %p63 = por %p61, %p62
      %p64 = scmp.ne.s32.totalorder %s53, %s56
      %p65 = scmp.eq.s32.totalorder %s20, 2
      %p66 = por %p64, %p65
      %p67 = scmp.ne.s32.totalorder %s56, %s57
      %p68 = scmp.eq.s32.totalorder %s20, 0
      %p69 = por %p67, %p68
      %p70 = scmp.ne.s32.totalorder %s56, %s57
      %p71 = scmp.eq.s32.totalorder %s21, 2
      %p72 = por %p70, %p71
      %p74 = scmp.ne.s32.totalorder %s57, %s73
      %p75 = scmp.eq.s32.totalorder %s21, 0
      %p76 = por %p74, %p75
      %s78 = sadd.s32 %s77, 1
      %p81 = scmp.eq.s32.totalorder %s15, 2
      %p82 = scmp.ne.s32.totalorder %s77, %s79
      %p83 = scmp.eq.s32.totalorder %s15, 0
      %p84 = por %p82, %p83
      %p85 = scmp.ne.s32.totalorder %s77, %s79
      %p86 = scmp.eq.s32.totalorder %s20, 2
      %p87 = por %p85, %p86
      %p88 = scmp.ne.s32.totalorder %s79, %s80
      %p89 = scmp.eq.s32.totalorder %s20, 0
      %p90 = por %p88, %p89
      %p91 = scmp.ne.s32.totalorder %s79, %s80
      %p92 = scmp.eq.s32.totalorder %s21, 2
      %p93 = por %p91, %p92
      %p95 = scmp.ne.s32.totalorder %s80, %s94
      %p96 = scmp.eq.s32.totalorder %s21, 0
      %p97 = por %p95, %p96
      %s98 = ssub.s32 %s15, %s22
      %p99 = scmp.eq.s32.totalorder %s98, 0
      %s101 = sadd.s32 %s100, 1
      %s102 = scalar_select %p99, %s100, %s101
      %p105 = pneg %p99
      %p106 = scmp.eq.s32.totalorder %s15, 2
      %p107 = por %p105, %p106
      %p108 = scmp.ne.s32.totalorder %s100, %s103
      %p109 = scmp.eq.s32.totalorder %s15, 0
      %p110 = por %p108, %p109
      %p111 = scmp.ne.s32.totalorder %s100, %s103
      %p112 = scmp.eq.s32.totalorder %s20, 2
      %p113 = por %p111, %p112
      %p114 = scmp.ne.s32.totalorder %s103, %s104
      %p115 = scmp.eq.s32.totalorder %s20, 0
      %p116 = por %p114, %p115
      %p117 = scmp.ne.s32.totalorder %s103, %s104
      %p118 = scmp.eq.s32.totalorder %s21, 2
      %p119 = por %p117, %p118
      %p121 = scmp.ne.s32.totalorder %s104, %s120
      %p122 = scmp.eq.s32.totalorder %s21, 0
      %p123 = por %p121, %p122
      %s125 = sadd.s32 %s124, 1
      %p128 = scmp.eq.s32.totalorder %s15, 2
      %p129 = scmp.ne.s32.totalorder %s124, %s126
      %p130 = scmp.eq.s32.totalorder %s15, 0
      %p131 = por %p129, %p130
      %p132 = scmp.ne.s32.totalorder %s124, %s126
      %p133 = scmp.eq.s32.totalorder %s20, 2
      %p134 = por %p132, %p133
      %p135 = scmp.ne.s32.totalorder %s126, %s127
      %p136 = scmp.eq.s32.totalorder %s20, 0
      %p137 = por %p135, %p136
      %p138 = scmp.ne.s32.totalorder %s126, %s127
      %p139 = scmp.eq.s32.totalorder %s21, 2
      %p140 = por %p138, %p139
      %p142 = scmp.ne.s32.totalorder %s127, %s141
      %p143 = scmp.eq.s32.totalorder %s21, 0
      %p144 = por %p142, %p143
      %s146 = sadd.s32 %s145, 1
      %p149 = scmp.eq.s32.totalorder %s15, 2
      %p150 = scmp.ne.s32.totalorder %s145, %s147
      %p151 = scmp.eq.s32.totalorder %s15, 0
      %p152 = por %p150, %p151
      %p153 = scmp.ne.s32.totalorder %s145, %s147
      %p154 = scmp.eq.s32.totalorder %s20, 2
      %p155 = por %p153, %p154
      %p156 = scmp.ne.s32.totalorder %s147, %s148
      %p157 = scmp.eq.s32.totalorder %s20, 0
      %p158 = por %p156, %p157
      %p159 = scmp.ne.s32.totalorder %s147, %s148
      %p160 = scmp.eq.s32.totalorder %s21, 2
      %p161 = por %p159, %p160
      %p163 = scmp.ne.s32.totalorder %s148, %s162
      %p164 = scmp.eq.s32.totalorder %s21, 0
      %p165 = por %p163, %p164
      %s166 = ssub.s32 %s15, %s22
      %p167 = scmp.eq.s32.totalorder %s166, 0
      %s169 = sadd.s32 %s168, 1
      %s170 = scalar_select %p167, %s168, %s169
      %p173 = pneg %p167
      %p174 = scmp.eq.s32.totalorder %s15, 2
      %p175 = por %p173, %p174
      %p176 = scmp.ne.s32.totalorder %s168, %s171
      %p177 = scmp.eq.s32.totalorder %s15, 0
      %p178 = por %p176, %p177
      %p179 = scmp.ne.s32.totalorder %s168, %s171
      %p180 = scmp.eq.s32.totalorder %s20, 2
      %p181 = por %p179, %p180
      %p182 = scmp.ne.s32.totalorder %s171, %s172
      %p183 = scmp.eq.s32.totalorder %s20, 0
      %p184 = por %p182, %p183
      %p185 = scmp.ne.s32.totalorder %s171, %s172
      %p186 = scmp.eq.s32.totalorder %s21, 2
      %p187 = por %p185, %p186
      %p189 = scmp.ne.s32.totalorder %s172, %s188
      %p190 = scmp.eq.s32.totalorder %s21, 0
      %p191 = por %p189, %p190
      %s192 = ssub.s32 %s15, %s22
      %p193 = scmp.eq.s32.totalorder %s192, 0
      %s195 = sadd.s32 %s194, 1
      %s196 = scalar_select %p193, %s194, %s195
      %p199 = pneg %p193
      %p200 = scmp.eq.s32.totalorder %s15, 2
      %p201 = por %p199, %p200
      %p202 = scmp.ne.s32.totalorder %s194, %s197
      %p203 = scmp.eq.s32.totalorder %s15, 0
      %p204 = por %p202, %p203
      %p205 = scmp.ne.s32.totalorder %s194, %s197
      %p206 = scmp.eq.s32.totalorder %s20, 2
      %p207 = por %p205, %p206
      %p208 = scmp.ne.s32.totalorder %s197, %s198
      %p209 = scmp.eq.s32.totalorder %s20, 0
      %p210 = por %p208, %p209
      %p211 = scmp.ne.s32.totalorder %s197, %s198
      %p212 = scmp.eq.s32.totalorder %s21, 2
      %p213 = por %p211, %p212
      %p215 = scmp.ne.s32.totalorder %s198, %s214
      %p216 = scmp.eq.s32.totalorder %s21, 0
      %p217 = por %p215, %p216
      %s218 = ssub.s32 %s15, %s22
      %p219 = scmp.eq.s32.totalorder %s218, 0
      %s221 = sadd.s32 %s220, 1
      %s222 = scalar_select %p219, %s220, %s221
      %p225 = pneg %p219
      %p226 = scmp.eq.s32.totalorder %s15, 2
      %p227 = por %p225, %p226
      %p228 = scmp.ne.s32.totalorder %s220, %s223
      %p229 = scmp.eq.s32.totalorder %s15, 0
      %p230 = por %p228, %p229
      %p231 = scmp.ne.s32.totalorder %s220, %s223
      %p232 = scmp.eq.s32.totalorder %s20, 2
      %p233 = por %p231, %p232
      %p234 = scmp.ne.s32.totalorder %s223, %s224
      %p235 = scmp.eq.s32.totalorder %s20, 0
      %p236 = por %p234, %p235
      %p237 = scmp.ne.s32.totalorder %s223, %s224
      %p238 = scmp.eq.s32.totalorder %s21, 2
      %p239 = por %p237, %p238
      %p241 = scmp.ne.s32.totalorder %s224, %s240
      %p242 = scmp.eq.s32.totalorder %s21, 0
      %p243 = por %p241, %p242
      %p244 = scmp.le.s32.totalorder 1, %s15
      %p245 = scmp.lt.s32.totalorder %s15, 4
      %p246 = pnand %p244, %p245
      %p247 = pneg %p246
      // Predicated region
      $region9: #{decoder_forward.5} parent=5 // pred_check
        _
      $region10: #{decoder_forward.5} parent=5 // pred_check_branch
        %249 = sbr.rel (%p246) target = $region12
      $region11: #{decoder_forward.5} parent=5 // pred_region
        %s250 = ssub.s32 %s15, 1
        // Predicated region
        $region13: #{decoder_forward.5} parent=11 // pred_check
          %p251 = pneg %p90
        $region14: #{decoder_forward.5} parent=11 // pred_check_branch
          %253 = sbr.rel (%p251) target = $region16
        $region15: #{decoder_forward.5} parent=11 // pred_region
          _
        $region16: #{decoder_forward.5} parent=11 // pred_fallthru
          _
        // Predicated region
        $region17: #{decoder_forward.5} parent=11 // pred_check
          %p254 = pneg %p137
        $region18: #{decoder_forward.5} parent=11 // pred_check_branch
          %256 = sbr.rel (%p254) target = $region20
        $region19: #{decoder_forward.5} parent=11 // pred_region
          _
        $region20: #{decoder_forward.5} parent=11 // pred_fallthru
          _
        // Predicated region
        $region21: #{decoder_forward.5} parent=11 // pred_check
          %p257 = pneg %p158
        $region22: #{decoder_forward.5} parent=11 // pred_check_branch
          %259 = sbr.rel (%p257) target = $region24
        $region23: #{decoder_forward.5} parent=11 // pred_region
          _
        $region24: #{decoder_forward.5} parent=11 // pred_fallthru
          _
      $region12: #{decoder_forward.5} parent=5 // pred_fallthru
        _
      %p260 = scmp.lt.s32.totalorder %s15, 3
      // Predicated region
      $region25: #{decoder_forward.5} parent=5 // pred_check
        %p261 = pneg %p260
      $region26: #{decoder_forward.5} parent=5 // pred_check_branch
        %263 = sbr.rel (%p261) target = $region28
      $region27: #{decoder_forward.5} parent=5 // pred_region
        // Predicated region
        $region29: #{decoder_forward.5} parent=27 // pred_check
          %p264 = pneg %p35
        $region30: #{decoder_forward.5} parent=27 // pred_check_branch
          %266 = sbr.rel (%p264) target = $region32
        $region31: #{decoder_forward.5} parent=27 // pred_region
          %p267 = scmp.lt.s32.totalorder %s15, 3
          %s268 = scalar_select %p267, %s15, 3
          %s269 = smul.addr %s268, 4
          %s270 = scalar_lea.vmem %s0, %s269
        $region32: #{decoder_forward.5} parent=27 // pred_fallthru
          _
        // Predicated region
        $region33: #{decoder_forward.5} parent=27 // pred_check
          %p271 = pneg %p63
        $region34: #{decoder_forward.5} parent=27 // pred_check_branch
          %273 = sbr.rel (%p271) target = $region36
        $region35: #{decoder_forward.5} parent=27 // pred_region
          %s274 = sadd.s32 %s15, 1
          %p275 = scmp.lt.s32.totalorder %s274, 3
          %s276 = scalar_select %p275, %s274, 3
          %s277 = smul.addr %s276, 4
          %s278 = scalar_lea.vmem %s1, %s277
          %s279 = sadd.s32 %s15, 1
        $region36: #{decoder_forward.5} parent=27 // pred_fallthru
          _
        // Predicated region
        $region37: #{decoder_forward.5} parent=27 // pred_check
          %p280 = pneg %p110
        $region38: #{decoder_forward.5} parent=27 // pred_check_branch
          %282 = sbr.rel (%p280) target = $region40
        $region39: #{decoder_forward.5} parent=27 // pred_region
          %p283 = scmp.lt.s32.totalorder %s15, 2
          %s284 = scalar_select %p283, %s15, 2
          %s285 = smul.addr %s284, 4
          %s286 = scalar_lea.vmem %s3, %s285
        $region40: #{decoder_forward.5} parent=27 // pred_fallthru
          _
      $region28: #{decoder_forward.5} parent=5 // pred_fallthru
        _
      %p287 = scmp.le.s32.totalorder 1, %s15
      %p288 = scmp.lt.s32.totalorder %s15, 4
      %p289 = pnand %p287, %p288
      %p290 = pneg %p289
      // Predicated region
      $region41: #{decoder_forward.5} parent=5 // pred_check
        _
      $region42: #{decoder_forward.5} parent=5 // pred_check_branch
        %292 = sbr.rel (%p289) target = $region44
      $region43: #{decoder_forward.5} parent=5 // pred_region
        %s293 = ssub.s32 %s15, 1
        %p294 = scmp.lt.s32.totalorder %s20, 3
        %s295 = scalar_select %p294, %s20, 3
        %s296 = smul.addr %s295, 4
        %s297 = scalar_lea.vmem %s0, %s296
        %p298 = pneg %p41
        %p299 = pneg %p38
        %s300 = sadd.s32 %s20, 1
        %p301 = scmp.lt.s32.totalorder %s300, 3
        %s302 = scalar_select %p301, %s300, 3
        %s303 = smul.addr %s302, 4
        %s304 = scalar_lea.vmem %s1, %s303
        %p305 = pneg %p69
        %p306 = pneg %p66
        %p307 = pneg %p90
        %p308 = pneg %p87
        %p309 = scmp.lt.s32.totalorder %s20, 2
        %s310 = scalar_select %p309, %s20, 2
        %s311 = smul.addr %s310, 4
        %s312 = scalar_lea.vmem %s3, %s311
        %p313 = pneg %p116
        %p314 = pneg %p113
        %p315 = pneg %p137
        %p316 = pneg %p134
        %p317 = pneg %p158
        %p318 = pneg %p155
        %p319 = pneg %p184
        %p320 = pneg %p181
        %s321 = sand.u32 %s171, 1
        %s322 = sand.u32 %s171, 1
        %s323 = smul.addr %s322, 16
        %s324 = scalar_lea.vmem [#allocation2], %s323
        %p325 = pneg %p210
        %p326 = pneg %p207
        %p327 = scmp.lt.s32.totalorder %s20, 2
        %s328 = scalar_select %p327, %s20, 2
        %s329 = smul.addr %s328, 2
        %s330 = smul.addr %s329, 8
        %s331 = scalar_lea.vmem %s7, %s330
        %p332 = pneg %p236
        %p333 = pneg %p233
        %p334 = scmp.lt.s32.totalorder %s20, 2
        %s335 = scalar_select %p334, %s20, 2
        %s336 = smul.addr %s335, 2
        %s337 = smul.addr %s336, 8
        %s338 = scalar_lea.vmem %s8, %s337
        %p339 = scmp.lt.s32.totalorder %s20, 3
        %s340 = scalar_select %p339, %s20, 3
        %s341 = smul.addr %s340, 4
        %s342 = scalar_lea.vmem %s0, %s341
        %s343 = sadd.s32 %s20, 1
        %p344 = scmp.lt.s32.totalorder %s343, 3
        %s345 = scalar_select %p344, %s343, 3
        %s346 = smul.addr %s345, 4
        %s347 = scalar_lea.vmem %s1, %s346
        %s348 = sadd.s32 %s20, 1
        %p349 = scmp.lt.s32.totalorder %s20, 2
        %s350 = scalar_select %p349, %s20, 2
        %s351 = smul.addr %s350, 4
        %s352 = scalar_lea.vmem %s3, %s351
        %p353 = scmp.lt.s32.totalorder %s20, 2
        %s354 = scalar_select %p353, %s20, 2
        %s355 = smul.addr %s354, 2
        %s356 = smul.addr %s355, 8
        %s357 = scalar_lea.vmem %s7, %s356
        %p358 = scmp.lt.s32.totalorder %s20, 2
        %s359 = scalar_select %p358, %s20, 2
        %s360 = smul.addr %s359, 2
        %s361 = smul.addr %s360, 8
        %s362 = scalar_lea.vmem %s8, %s361
        %v363 = vld [vmem:[%s342] sm:$0xf]
        %v364 = vld [vmem:[%s347] sm:$0xf]
        %v365 = vld [vmem:[%s4] sm:$0xf]
        %367 = vset.pattern.permute.xlu0 0
        %368 = vperm.xlu0 %367, %v365
        %v369 = vpop.permute.xlu0 %368
        %v371 = vmul.f32 %v363, %v369
        %v372 = vmul.f32 %v364, %v369
        %v373 = vld [vmem:[%s5] sm:$0xf]
        %375 = vset.pattern.permute.xlu0 0
        %376 = vperm.xlu0 %375, %v373
        %v377 = vpop.permute.xlu0 %376
        %v379 = vadd.f32 %v371, %v377
        %v380 = vadd.f32 %v372, %v377
        %v381 = vmax.f32 %v379, 0.0
        %v382 = vmax.f32 %v380, 0.0
        %v383 = vld [vmem:[%s352] sm:$0x1]
        %v384 = vld [vmem:[%s352 + $0x1] sm:$0x1]
        %v385 = vld [vmem:[%s352 + $0x2] sm:$0x1]
        %v386 = vmul.f32 %v384, %v385
        %v387 = vlaneseq
        %v388 = vshrl.u32 %v387, 7
        %v389 = vsub.s32 0, %v388
        %v390 = vrot.slane %v383, %v389
        %v391 = vmul.f32 %v381, %v390
        %v392 = vld [vmem:[%s2] sm:$0xff]
        %v393 = vld [vmem:[%s2 + $0x8] sm:$0xff]
        %v394 = vlaneseq
        %v395 = vshrl.u32 %v394, 7
        %v396 = vsub.s32 0, %v395
        %v397 = vrot.slane %v384, %v396
        %399 = vrot.lane.b32.xlu0 %v397, 1
        %v400 = vpop.permute.xlu0 %399
        %v402 = vmul.f32 %v381, %v400
        %v403 = vmul.f32 %v382, %v400
        %s404 = scalar_lea.vmem %s2, 16
        %v405 = vld [vmem:[%s404] sm:$0xff]
        %v406 = vld [vmem:[%s404 + $0x8] sm:$0xff]
        %409 = vrot.lane.b32.xlu0 %v402, 127
        %v410 = vpop.permute.xlu0 %409
        %411 = vrot.lane.b32.xlu0 %v403, 127
        %v412 = vpop.permute.xlu0 %411
        %vm413 = vcmask 1039360
        %v414 = vsel %vm413, %v410, %v412
        %vm415 = vcmask 31744
        %v417 = vsel %vm415, %v405, 0
        %v420 = vsel %vm415, %v406, 0
        %vm422 = vcmask 1043456
        %v423 = vsel %vm422, %v414, 0
        %425 = vmatprep.subr.mxu0 0.0
        %426 = vmatpush1.msra.mxu0 %v423
        %427 = vmatprep.subr.mxu0 0.0
        %428 = vmatpush1.msra.mxu0 0.0
        %429 = vmatprep.subr.mxu0 0.0
        %430 = vmatpush1.msra.mxu0 0.0
        %431 = vmatprep.subr.mxu0 0.0
        %432 = vmatpush1.msra.mxu0 0.0
        %433 = vmatprep.subr.mxu0 0.0
        %434 = vmatpush1.msra.mxu0 0.0
        %435 = vmatprep.subr.mxu0 0.0
        %436 = vmatpush1.msra.mxu0 0.0
        %437 = vmatprep.subr.mxu0 0.0
        %438 = vmatpush1.msra.mxu0 0.0
        %439 = vmatprep.subr.mxu0 0.0
        %440 = vmatpush1.msra.mxu0 0.0
        %441 = vmatprep.subr.mxu0 0.0
        %442 = vmatpush1.msra.mxu0 0.0
        %443 = vmatprep.subr.mxu0 0.0
        %444 = vmatpush1.msra.mxu0 0.0
        %445 = vmatprep.subr.mxu0 0.0
        %446 = vmatpush1.msra.mxu0 0.0
        %447 = vmatprep.subr.mxu0 0.0
        %448 = vmatpush1.msra.mxu0 0.0
        %449 = vmatprep.subr.mxu0 0.0
        %450 = vmatpush1.msra.mxu0 0.0
        %451 = vmatprep.subr.mxu0 0.0
        %452 = vmatpush1.msra.mxu0 0.0
        %453 = vmatprep.subr.mxu0 0.0
        %454 = vmatpush1.msra.mxu0 0.0
        %455 = vmatprep.subr.mxu0 0.0
        %456 = vmatpush1.msra.mxu0 0.0
        %457 = vmatprep.subr.mxu0 0.0
        %458 = vmatpush1.msra.mxu0 0.0
        %459 = vmatprep.subr.mxu0 0.0
        %460 = vmatpush1.msra.mxu0 0.0
        %461 = vmatprep.subr.mxu0 0.0
        %462 = vmatpush1.msra.mxu0 0.0
        %463 = vmatprep.subr.mxu0 0.0
        %464 = vmatpush1.msra.mxu0 0.0
        %465 = vmatprep.subr.mxu0 0.0
        %466 = vmatpush1.msra.mxu0 0.0
        %467 = vmatprep.subr.mxu0 0.0
        %468 = vmatpush1.msra.mxu0 0.0
        %469 = vmatprep.subr.mxu0 0.0
        %470 = vmatpush1.msra.mxu0 0.0
        %471 = vmatprep.subr.mxu0 0.0
        %472 = vmatpush1.msra.mxu0 0.0
        %473 = vmatprep.subr.mxu0 0.0
        %474 = vmatpush1.msra.mxu0 0.0
        %475 = vmatprep.subr.mxu0 0.0
        %476 = vmatpush1.msra.mxu0 0.0
        %477 = vmatprep.subr.mxu0 0.0
        %478 = vmatpush1.msra.mxu0 0.0
        %479 = vmatprep.subr.mxu0 0.0
        %480 = vmatpush1.msra.mxu0 0.0
        %481 = vmatprep.subr.mxu0 0.0
        %482 = vmatpush1.msra.mxu0 0.0
        %483 = vmatprep.subr.mxu0 0.0
        %484 = vmatpush1.msra.mxu0 0.0
        %485 = vmatprep.subr.mxu0 0.0
        %486 = vmatpush1.msra.mxu0 0.0
        %487 = vmatprep.subr.mxu0 0.0
        %488 = vmatpush1.msra.mxu0 0.0
        %489 = vmatprep.mubr.f32.mxu0 0.0
        %490 = vmatmul.mubr.f32.gmra.mrb[0].mxu0 %v417
        %v491 = vpop.f32.mrb[0].mxu0
        %v492 = vadd.f32 0.0, %v491
        %v493 = vpop.f32.mrb[0].mxu0
        %494 = vmatprep.mubr.f32.mxu0 0.0
        %495 = vmatmul.mubr.f32.gmra.mrb[0].mxu0 %v420
        %v496 = vpop.f32.mrb[0].mxu0
        %v497 = vadd.f32 0.0, %v496
        %v498 = vpop.f32.mrb[0].mxu0
        %499 = vdwg.mxu0
        %v501 = vsel %vm415, %v392, 0
        %v504 = vsel %vm415, %v393, 0
        %v507 = vsel %vm422, %v391, 0
        %509 = vmatprep.subr.mxu0 0.0
        %510 = vmatpush1.msra.mxu0 %v507
        %511 = vmatprep.subr.mxu0 0.0
        %512 = vmatpush1.msra.mxu0 0.0
        %513 = vmatprep.subr.mxu0 0.0
        %514 = vmatpush1.msra.mxu0 0.0
        %515 = vmatprep.subr.mxu0 0.0
        %516 = vmatpush1.msra.mxu0 0.0
        %517 = vmatprep.subr.mxu0 0.0
        %518 = vmatpush1.msra.mxu0 0.0
        %519 = vmatprep.subr.mxu0 0.0
        %520 = vmatpush1.msra.mxu0 0.0
        %521 = vmatprep.subr.mxu0 0.0
        %522 = vmatpush1.msra.mxu0 0.0
        %523 = vmatprep.subr.mxu0 0.0
        %524 = vmatpush1.msra.mxu0 0.0
        %525 = vmatprep.subr.mxu0 0.0
        %526 = vmatpush1.msra.mxu0 0.0
        %527 = vmatprep.subr.mxu0 0.0
        %528 = vmatpush1.msra.mxu0 0.0
        %529 = vmatprep.subr.mxu0 0.0
        %530 = vmatpush1.msra.mxu0 0.0
        %531 = vmatprep.subr.mxu0 0.0
        %532 = vmatpush1.msra.mxu0 0.0
        %533 = vmatprep.subr.mxu0 0.0
        %534 = vmatpush1.msra.mxu0 0.0
        %535 = vmatprep.subr.mxu0 0.0
        %536 = vmatpush1.msra.mxu0 0.0
        %537 = vmatprep.subr.mxu0 0.0
        %538 = vmatpush1.msra.mxu0 0.0
        %539 = vmatprep.subr.mxu0 0.0
        %540 = vmatpush1.msra.mxu0 0.0
        %541 = vmatprep.subr.mxu0 0.0
        %542 = vmatpush1.msra.mxu0 0.0
        %543 = vmatprep.subr.mxu0 0.0
        %544 = vmatpush1.msra.mxu0 0.0
        %545 = vmatprep.subr.mxu0 0.0
        %546 = vmatpush1.msra.mxu0 0.0
        %547 = vmatprep.subr.mxu0 0.0
        %548 = vmatpush1.msra.mxu0 0.0
        %549 = vmatprep.subr.mxu0 0.0
        %550 = vmatpush1.msra.mxu0 0.0
        %551 = vmatprep.subr.mxu0 0.0
        %552 = vmatpush1.msra.mxu0 0.0
        %553 = vmatprep.subr.mxu0 0.0
        %554 = vmatpush1.msra.mxu0 0.0
        %555 = vmatprep.subr.mxu0 0.0
        %556 = vmatpush1.msra.mxu0 0.0
        %557 = vmatprep.subr.mxu0 0.0
        %558 = vmatpush1.msra.mxu0 0.0
        %559 = vmatprep.subr.mxu0 0.0
        %560 = vmatpush1.msra.mxu0 0.0
        %561 = vmatprep.subr.mxu0 0.0
        %562 = vmatpush1.msra.mxu0 0.0
        %563 = vmatprep.subr.mxu0 0.0
        %564 = vmatpush1.msra.mxu0 0.0
        %565 = vmatprep.subr.mxu0 0.0
        %566 = vmatpush1.msra.mxu0 0.0
        %567 = vmatprep.subr.mxu0 0.0
        %568 = vmatpush1.msra.mxu0 0.0
        %569 = vmatprep.subr.mxu0 0.0
        %570 = vmatpush1.msra.mxu0 0.0
        %571 = vmatprep.subr.mxu0 0.0
        %572 = vmatpush1.msra.mxu0 0.0
        %573 = vmatprep.mubr.f32.mxu0 0.0
        %574 = vmatmul.mubr.f32.gmra.mrb[0].mxu0 %v501
        %v575 = vpop.f32.mrb[0].mxu0
        %v576 = vadd.f32 %v492, %v575
        %v577 = vpop.f32.mrb[0].mxu0
        %578 = vmatprep.mubr.f32.mxu0 0.0
        %579 = vmatmul.mubr.f32.gmra.mrb[0].mxu0 %v504
        %v580 = vpop.f32.mrb[0].mxu0
        %v581 = vadd.f32 %v497, %v580
        %v582 = vpop.f32.mrb[0].mxu0
        %583 = vdwg.mxu0
        %v584 = vlaneseq
        %v585 = vshrl.u32 %v584, 7
        %v586 = vsub.s32 0, %v585
        %v587 = vrot.slane %v385, %v586
        %589 = vrot.lane.b32.xlu0 %v587, 12
        %v590 = vpop.permute.xlu0 %589
        %v592 = vmul.f32 %v381, %v590
        %v593 = vmul.f32 %v382, %v590
        %s594 = scalar_lea.vmem %s2, 32
        %v595 = vld [vmem:[%s594] sm:$0xff]
        %v596 = vld [vmem:[%s594 + $0x8] sm:$0xff]
        %599 = vrot.lane.b32.xlu0 %v592, 116
        %v600 = vpop.permute.xlu0 %599
        %601 = vrot.lane.b32.xlu0 %v593, 116
        %v602 = vpop.permute.xlu0 %601
        %vm603 = vcmask 949248
        %v604 = vsel %vm603, %v600, %v602
        %v606 = vsel %vm415, %v595, 0
        %v609 = vsel %vm415, %v596, 0
        %v611 = vsel %vm422, %v604, 0
        %613 = vmatprep.subr.mxu0 0.0
        %614 = vmatpush1.msra.mxu0 %v611
        %615 = vmatprep.subr.mxu0 0.0
        %616 = vmatpush1.msra.mxu0 0.0
        %617 = vmatprep.subr.mxu0 0.0
        %618 = vmatpush1.msra.mxu0 0.0
        %619 = vmatprep.subr.mxu0 0.0
        %620 = vmatpush1.msra.mxu0 0.0
        %621 = vmatprep.subr.mxu0 0.0
        %622 = vmatpush1.msra.mxu0 0.0
        %623 = vmatprep.subr.mxu0 0.0
        %624 = vmatpush1.msra.mxu0 0.0
        %625 = vmatprep.subr.mxu0 0.0
        %626 = vmatpush1.msra.mxu0 0.0
        %627 = vmatprep.subr.mxu0 0.0
        %628 = vmatpush1.msra.mxu0 0.0
        %629 = vmatprep.subr.mxu0 0.0
        %630 = vmatpush1.msra.mxu0 0.0
        %631 = vmatprep.subr.mxu0 0.0
        %632 = vmatpush1.msra.mxu0 0.0
        %633 = vmatprep.subr.mxu0 0.0
        %634 = vmatpush1.msra.mxu0 0.0
        %635 = vmatprep.subr.mxu0 0.0
        %636 = vmatpush1.msra.mxu0 0.0
        %637 = vmatprep.subr.mxu0 0.0
        %638 = vmatpush1.msra.mxu0 0.0
        %639 = vmatprep.subr.mxu0 0.0
        %640 = vmatpush1.msra.mxu0 0.0
        %641 = vmatprep.subr.mxu0 0.0
        %642 = vmatpush1.msra.mxu0 0.0
        %643 = vmatprep.subr.mxu0 0.0
        %644 = vmatpush1.msra.mxu0 0.0
        %645 = vmatprep.subr.mxu0 0.0
        %646 = vmatpush1.msra.mxu0 0.0
        %647 = vmatprep.subr.mxu0 0.0
        %648 = vmatpush1.msra.mxu0 0.0
        %649 = vmatprep.subr.mxu0 0.0
        %650 = vmatpush1.msra.mxu0 0.0
        %651 = vmatprep.subr.mxu0 0.0
        %652 = vmatpush1.msra.mxu0 0.0
        %653 = vmatprep.subr.mxu0 0.0
        %654 = vmatpush1.msra.mxu0 0.0
        %655 = vmatprep.subr.mxu0 0.0
        %656 = vmatpush1.msra.mxu0 0.0
        %657 = vmatprep.subr.mxu0 0.0
        %658 = vmatpush1.msra.mxu0 0.0
        %659 = vmatprep.subr.mxu0 0.0
        %660 = vmatpush1.msra.mxu0 0.0
        %661 = vmatprep.subr.mxu0 0.0
        %662 = vmatpush1.msra.mxu0 0.0
        %663 = vmatprep.subr.mxu0 0.0
        %664 = vmatpush1.msra.mxu0 0.0
        %665 = vmatprep.subr.mxu0 0.0
        %666 = vmatpush1.msra.mxu0 0.0
        %667 = vmatprep.subr.mxu0 0.0
        %668 = vmatpush1.msra.mxu0 0.0
        %669 = vmatprep.subr.mxu0 0.0
        %670 = vmatpush1.msra.mxu0 0.0
        %671 = vmatprep.subr.mxu0 0.0
        %672 = vmatpush1.msra.mxu0 0.0
        %673 = vmatprep.subr.mxu0 0.0
        %674 = vmatpush1.msra.mxu0 0.0
        %675 = vmatprep.subr.mxu0 0.0
        %676 = vmatpush1.msra.mxu0 0.0
        %677 = vmatprep.mubr.f32.mxu0 0.0
        %678 = vmatmul.mubr.f32.gmra.mrb[0].mxu0 %v606
        %v679 = vpop.f32.mrb[0].mxu0
        %v680 = vadd.f32 0.0, %v679
        %v681 = vpop.f32.mrb[0].mxu0
        %682 = vmatprep.mubr.f32.mxu0 0.0
        %683 = vmatmul.mubr.f32.gmra.mrb[0].mxu0 %v609
        %v684 = vpop.f32.mrb[0].mxu0
        %v685 = vadd.f32 0.0, %v684
        %v686 = vpop.f32.mrb[0].mxu0
        %687 = vdwg.mxu0
        %v688 = vadd.f32 %v576, %v680
        %v689 = vadd.f32 %v581, %v685
        %v690 = vlaneseq
        %v691 = vshrl.u32 %v690, 7
        %v692 = vsub.s32 0, %v691
        %v693 = vrot.slane %v386, %v692
        %695 = vrot.lane.b32.xlu0 %v693, 13
        %v696 = vpop.permute.xlu0 %695
        %v698 = vmul.f32 %v381, %v696
        %v699 = vmul.f32 %v382, %v696
        %s700 = scalar_lea.vmem %s2, 48
        %v701 = vld [vmem:[%s700] sm:$0xff]
        %v702 = vld [vmem:[%s700 + $0x8] sm:$0xff]
        %705 = vrot.lane.b32.xlu0 %v698, 115
        %v706 = vpop.permute.xlu0 %705
        %707 = vrot.lane.b32.xlu0 %v699, 115
        %v708 = vpop.permute.xlu0 %707
        %vm709 = vcmask 941056
        %v710 = vsel %vm709, %v706, %v708
        %v712 = vsel %vm415, %v701, 0
        %v715 = vsel %vm415, %v702, 0
        %v717 = vsel %vm422, %v710, 0
        %719 = vmatprep.subr.mxu0 0.0
        %720 = vmatpush1.msra.mxu0 %v717
        %721 = vmatprep.subr.mxu0 0.0
        %722 = vmatpush1.msra.mxu0 0.0
        %723 = vmatprep.subr.mxu0 0.0
        %724 = vmatpush1.msra.mxu0 0.0
        %725 = vmatprep.subr.mxu0 0.0
        %726 = vmatpush1.msra.mxu0 0.0
        %727 = vmatprep.subr.mxu0 0.0
        %728 = vmatpush1.msra.mxu0 0.0
        %729 = vmatprep.subr.mxu0 0.0
        %730 = vmatpush1.msra.mxu0 0.0
        %731 = vmatprep.subr.mxu0 0.0
        %732 = vmatpush1.msra.mxu0 0.0
        %733 = vmatprep.subr.mxu0 0.0
        %734 = vmatpush1.msra.mxu0 0.0
        %735 = vmatprep.subr.mxu0 0.0
        %736 = vmatpush1.msra.mxu0 0.0
        %737 = vmatprep.subr.mxu0 0.0
        %738 = vmatpush1.msra.mxu0 0.0
        %739 = vmatprep.subr.mxu0 0.0
        %740 = vmatpush1.msra.mxu0 0.0
        %741 = vmatprep.subr.mxu0 0.0
        %742 = vmatpush1.msra.mxu0 0.0
        %743 = vmatprep.subr.mxu0 0.0
        %744 = vmatpush1.msra.mxu0 0.0
        %745 = vmatprep.subr.mxu0 0.0
        %746 = vmatpush1.msra.mxu0 0.0
        %747 = vmatprep.subr.mxu0 0.0
        %748 = vmatpush1.msra.mxu0 0.0
        %749 = vmatprep.subr.mxu0 0.0
        %750 = vmatpush1.msra.mxu0 0.0
        %751 = vmatprep.subr.mxu0 0.0
        %752 = vmatpush1.msra.mxu0 0.0
        %753 = vmatprep.subr.mxu0 0.0
        %754 = vmatpush1.msra.mxu0 0.0
        %755 = vmatprep.subr.mxu0 0.0
        %756 = vmatpush1.msra.mxu0 0.0
        %757 = vmatprep.subr.mxu0 0.0
        %758 = vmatpush1.msra.mxu0 0.0
        %759 = vmatprep.subr.mxu0 0.0
        %760 = vmatpush1.msra.mxu0 0.0
        %761 = vmatprep.subr.mxu0 0.0
        %762 = vmatpush1.msra.mxu0 0.0
        %763 = vmatprep.subr.mxu0 0.0
        %764 = vmatpush1.msra.mxu0 0.0
        %765 = vmatprep.subr.mxu0 0.0
        %766 = vmatpush1.msra.mxu0 0.0
        %767 = vmatprep.subr.mxu0 0.0
        %768 = vmatpush1.msra.mxu0 0.0
        %769 = vmatprep.subr.mxu0 0.0
        %770 = vmatpush1.msra.mxu0 0.0
        %771 = vmatprep.subr.mxu0 0.0
        %772 = vmatpush1.msra.mxu0 0.0
        %773 = vmatprep.subr.mxu0 0.0
        %774 = vmatpush1.msra.mxu0 0.0
        %775 = vmatprep.subr.mxu0 0.0
        %776 = vmatpush1.msra.mxu0 0.0
        %777 = vmatprep.subr.mxu0 0.0
        %778 = vmatpush1.msra.mxu0 0.0
        %779 = vmatprep.subr.mxu0 0.0
        %780 = vmatpush1.msra.mxu0 0.0
        %781 = vmatprep.subr.mxu0 0.0
        %782 = vmatpush1.msra.mxu0 0.0
        %783 = vmatprep.mubr.f32.mxu0 0.0
        %784 = vmatmul.mubr.f32.gmra.mrb[0].mxu0 %v712
        %v785 = vpop.f32.mrb[0].mxu0
        %v786 = vadd.f32 0.0, %v785
        %v787 = vpop.f32.mrb[0].mxu0
        %788 = vmatprep.mubr.f32.mxu0 0.0
        %789 = vmatmul.mubr.f32.gmra.mrb[0].mxu0 %v715
        %v790 = vpop.f32.mrb[0].mxu0
        %v791 = vadd.f32 0.0, %v790
        %v792 = vpop.f32.mrb[0].mxu0
        %793 = vdwg.mxu0
        %v794 = vadd.f32 %v688, %v786
        %v795 = vadd.f32 %v689, %v791
        %796 = vst [vmem:[%s324] sm:$0xff] %v794
        %797 = vst [vmem:[%s324 + $0x8] sm:$0xff] %v795
        %798 = vadd.xlane.f32.xlu0 %v794
        %v799 = vpop.xlane.xlu0 %798
        %800 = vadd.xlane.f32.xlu0 %v795
        %v801 = vpop.xlane.xlu0 %800
        %vm802 = vcmask 7168
        %803 = vst.msk [vmem:[%s357] sm:$0xff] %vm802, %v799
        %804 = vst.msk [vmem:[%s357 + $0x8] sm:$0xff] %vm802, %v801
        %v805 = vmul.f32 %v794, %v794
        %v806 = vmul.f32 %v795, %v795
        %807 = vadd.xlane.f32.xlu0 %v805
        %v808 = vpop.xlane.xlu0 %807
        %809 = vadd.xlane.f32.xlu0 %v806
        %v810 = vpop.xlane.xlu0 %809
        %811 = vst.msk [vmem:[%s362] sm:$0xff] %vm802, %v808
        %812 = vst.msk [vmem:[%s362 + $0x8] sm:$0xff] %vm802, %v810
        %s813 = sand.u32 %s171, 1
        %s814 = sand.u32 %s171, 1
        %s815 = smul.addr %s814, 16
        %s816 = scalar_lea.vmem [#allocation2], %s815
        %p817 = scmp.lt.s32.totalorder %s20, 2
        %s818 = scalar_select %p817, %s20, 2
        %s819 = smul.addr %s818, 2
        %s820 = smul.addr %s819, 8
        %s821 = scalar_lea.vmem %s7, %s820
        %p822 = scmp.lt.s32.totalorder %s20, 2
        %s823 = scalar_select %p822, %s20, 2
        %s824 = smul.addr %s823, 2
        %s825 = smul.addr %s824, 8
        %s826 = scalar_lea.vmem %s8, %s825
        // Predicated region
        $region45: #{decoder_forward.5} parent=43 // pred_check
          %p827 = pneg %p181
        $region46: #{decoder_forward.5} parent=43 // pred_check_branch
          %829 = sbr.rel (%p827) target = $region48
        $region47: #{decoder_forward.5} parent=43 // pred_region
          %s830 = smul.addr %s20, 8
          %s831 = scalar_lea.vmem %s6, %s830
          // Predicated region
          $region49: #{decoder_forward.5} parent=47 // pred_check
            _
          $region50: #{decoder_forward.5} parent=47 // pred_check_branch
            %833 = sbr.rel (0) target = $region52
          $region51: #{decoder_forward.5} parent=47 // pred_region
            // Predicated region
            $region53: #{decoder_forward.5} parent=51 // pred_check
              _
            $region54: #{decoder_forward.5} parent=51 // pred_check_branch
              %835 = sbr.rel (0) target = $region56
            $region55: #{decoder_forward.5} parent=51 // pred_region
              // Predicated region
              $region68: #{decoder_forward.5} parent=55 // pred_check
                _
              $region69: #{decoder_forward.5} parent=55 // pred_check_branch
                %852 = sbr.rel (0) target = $region71
              $region70: #{decoder_forward.5} parent=55 // pred_region
                loop: start=0, step=1, limit=1
                $region72: #{decoder_forward.5} parent=70 // loop_pre_header
                  _
                $region73: #{decoder_forward.5} parent=70 // loop_header
                  %s854 = sphi 0, %s858
                  %p855 = scmp.ge.s32.totalorder %s854, 1
                  %s859 = sphi %s816, %s816
                  %s860 = sphi %s831, %s831
                $region74: #{decoder_forward.5} parent=70 // loop_header_branch
                  %857 = sbr.rel (%p855) target = $region78
                $region75: #{decoder_forward.5} parent=70 // loop_body
                  %v861 = vld [vmem:[%s859] sm:$0xff]
                  %862 = vst [vmem:[%s860] sm:$0xff] %v861
                  %v863 = vld [vmem:[%s859 + $0x8] sm:$0xff]
                  %864 = vst [vmem:[%s860 + $0x18] sm:$0xff] %v863
                $region76: #{decoder_forward.5} parent=70 // loop_footer
                  %s858 = sadd.s32 1, %s854
                $region77: #{decoder_forward.5} parent=70 // loop_footer_branch
                  %853 = sbr.rel target = $region73
                $region78: #{decoder_forward.5} parent=70 // loop_exit
                  _
              $region71: #{decoder_forward.5} parent=55 // pred_fallthru
                _
              // Predicated region
              $region79: #{decoder_forward.5} parent=55 // pred_check
                _
              $region80: #{decoder_forward.5} parent=55 // pred_check_branch
                %866 = sbr.rel target = $region82
              $region81: #{decoder_forward.5} parent=55 // pred_region
                _
              $region82: #{decoder_forward.5} parent=55 // pred_fallthru
                _
            $region56: #{decoder_forward.5} parent=51 // pred_fallthru
              _
            // Predicated region
            $region57: #{decoder_forward.5} parent=51 // pred_check
              _
            $region58: #{decoder_forward.5} parent=51 // pred_check_branch
              %837 = sbr.rel target = $region60
            $region59: #{decoder_forward.5} parent=51 // pred_region
              loop: start=0, step=1, limit=1
              $region61: #{decoder_forward.5} parent=59 // loop_pre_header
                _
              $region62: #{decoder_forward.5} parent=59 // loop_header
                %s840 = sphi 0, %s844
                %p841 = scmp.ge.s32.totalorder %s840, 1
                %s845 = sphi %s816, %s816
                %s846 = sphi %s831, %s831
              $region63: #{decoder_forward.5} parent=59 // loop_header_branch
                %843 = sbr.rel (%p841) target = $region67
              $region64: #{decoder_forward.5} parent=59 // loop_body
                %v847 = vld [vmem:[%s845] sm:$0xff]
                %848 = vst [vmem:[%s846] sm:$0xff] %v847
                %v849 = vld [vmem:[%s845 + $0x8] sm:$0xff]
                %850 = vst [vmem:[%s846 + $0x18] sm:$0xff] %v849
              $region65: #{decoder_forward.5} parent=59 // loop_footer
                %s844 = sadd.s32 1, %s840
              $region66: #{decoder_forward.5} parent=59 // loop_footer_branch
                %839 = sbr.rel target = $region62
              $region67: #{decoder_forward.5} parent=59 // loop_exit
                _
            $region60: #{decoder_forward.5} parent=51 // pred_fallthru
              _
          $region52: #{decoder_forward.5} parent=47 // pred_fallthru
            _
          %867 = vnop
        $region48: #{decoder_forward.5} parent=43 // pred_fallthru
          _
        // Predicated region
        $region83: #{decoder_forward.5} parent=43 // pred_check
          %p868 = pneg %p207
        $region84: #{decoder_forward.5} parent=43 // pred_check_branch
          %870 = sbr.rel (%p868) target = $region86
        $region85: #{decoder_forward.5} parent=43 // pred_region
          _
        $region86: #{decoder_forward.5} parent=43 // pred_fallthru
          _
        // Predicated region
        $region87: #{decoder_forward.5} parent=43 // pred_check
          %p871 = pneg %p233
        $region88: #{decoder_forward.5} parent=43 // pred_check_branch
          %873 = sbr.rel (%p871) target = $region90
        $region89: #{decoder_forward.5} parent=43 // pred_region
          _
        $region90: #{decoder_forward.5} parent=43 // pred_fallthru
          _
      $region44: #{decoder_forward.5} parent=5 // pred_fallthru
        _
      %p874 = scmp.le.s32.totalorder 2, %s15
      // Predicated region
      $region91: #{decoder_forward.5} parent=5 // pred_check
        %p875 = pneg %p874
      $region92: #{decoder_forward.5} parent=5 // pred_check_branch
        %877 = sbr.rel (%p875) target = $region94
      $region93: #{decoder_forward.5} parent=5 // pred_region
        %s878 = ssub.s32 %s15, 2
        // Predicated region
        $region95: #{decoder_forward.5} parent=93 // pred_check
          %p879 = pneg %p187
        $region96: #{decoder_forward.5} parent=93 // pred_check_branch
          %881 = sbr.rel (%p879) target = $region98
        $region97: #{decoder_forward.5} parent=93 // pred_region
          %s882 = sand.u32 %s172, 1
          %s883 = sand.u32 %s172, 1
          %s884 = smul.addr %s883, 16
          %s885 = scalar_lea.vmem [#allocation2], %s884
        $region98: #{decoder_forward.5} parent=93 // pred_fallthru
          _
        // Predicated region
        $region99: #{decoder_forward.5} parent=93 // pred_check
          %p886 = pneg %p213
        $region100: #{decoder_forward.5} parent=93 // pred_check_branch
          %888 = sbr.rel (%p886) target = $region102
        $region101: #{decoder_forward.5} parent=93 // pred_region
          %p889 = scmp.lt.s32.totalorder %s21, 2
          %s890 = scalar_select %p889, %s21, 2
          %s891 = smul.addr %s890, 2
          %s892 = smul.addr %s891, 8
          %s893 = scalar_lea.vmem %s7, %s892
        $region102: #{decoder_forward.5} parent=93 // pred_fallthru
          _
        // Predicated region
        $region103: #{decoder_forward.5} parent=93 // pred_check
          %p894 = pneg %p239
        $region104: #{decoder_forward.5} parent=93 // pred_check_branch
          %896 = sbr.rel (%p894) target = $region106
        $region105: #{decoder_forward.5} parent=93 // pred_region
          %p897 = scmp.lt.s32.totalorder %s21, 2
          %s898 = scalar_select %p897, %s21, 2
          %s899 = smul.addr %s898, 2
          %s900 = smul.addr %s899, 8
          %s901 = scalar_lea.vmem %s8, %s900
        $region106: #{decoder_forward.5} parent=93 // pred_fallthru
          _
      $region94: #{decoder_forward.5} parent=5 // pred_fallthru
        _
    $region6: #{decoder_forward.5} parent=1 // loop_footer
      %s19 = sadd.s32 1, %s15
    $region7: #{decoder_forward.5} parent=1 // loop_footer_branch
      %14 = sbr.rel target = $region3
    $region8: #{decoder_forward.5} parent=1 // loop_exit
      _

// kernel: tile.28
$region0: #{tile.28}
  #allocation0 [shape = 's32[1]{0}', space=sflag, size = 0x4, scoped, tag = 'scoped memory for tile.28']
  %s0 = inlined_call_operand.vmem [shape: f32[4], index: 0, kind: input, shape index: {}]
  %s1 = inlined_call_operand.vmem [shape: f32[4,4], index: 1, kind: output, shape index: {}]
  // Predicated region
  $region2: #{tile.28} parent=0 // pred_check
    _
  $region3: #{tile.28} parent=0 // pred_check_branch
    %3 = sbr.rel (0) target = $region5
  $region4: #{tile.28} parent=0 // pred_region
    _
  $region5: #{tile.28} parent=0 // pred_fallthru
    _
  %v4 = vld [vmem:[%s0] ss:$0 sm:$0xff]
  %5 = vst [vmem:[%s1] sm:$0xf] %v4

// kernel: tile.0
$region0: #{tile.0}
  %s0 = inlined_call_operand.vmem [shape: f32[4,4], index: 0, kind: input, shape index: {}]
  %s1 = inlined_call_operand.vmem [shape: f32[16,1], index: 1, kind: output, shape index: {}]
  $region1: #{tile.0} parent=0
    #allocation0 [shape = 'u8[4096]{0}', space=vmem, size = 0x1000, scoped, tag = 'scoped mem for input reshape']
    %s3 = sshllo.u32 0, 4
    %v4 = vld [vmem:[%s0] sm:%s3]
    %5 = vst [vmem:[#allocation0] sm:%s3] %v4
    %v6 = vld [vmem:[#allocation0] sm:$0xf]
    %vm7 = vcmask 7168
    %8 = vst.msk [vmem:[%s1] ss:$4 sm:$0xf] %vm7, %v6
    %v9 = vld [vmem:[#allocation0] sm:$0xf]
    %10 = vrot.lane.b32.xlu0 %v9, 127
    %v11 = vpop.permute.xlu0 %10
    %vm12 = vcmask 7168
    %s13 = scalar_lea.vmem %s1, 1
    %14 = vst.msk [vmem:[%s13] ss:$4 sm:$0xf] %vm12, %v11
    %v15 = vld [vmem:[#allocation0] sm:$0xf]
    %16 = vrot.lane.b32.xlu0 %v15, 126
    %v17 = vpop.permute.xlu0 %16
    %vm18 = vcmask 7168
    %s19 = scalar_lea.vmem %s1, 2
    %20 = vst.msk [vmem:[%s19] ss:$4 sm:$0xf] %vm18, %v17
    %v21 = vld [vmem:[#allocation0] sm:$0xf]
    %22 = vrot.lane.b32.xlu0 %v21, 125
    %v23 = vpop.permute.xlu0 %22
    %vm24 = vcmask 7168
    %s25 = scalar_lea.vmem %s1, 3
    %26 = vst.msk [vmem:[%s25] ss:$4 sm:$0xf] %vm24, %v23

// kernel: tile.39
$region0: #{tile.39}
  #allocation0 [shape = 's32[1]{0}', space=sflag, size = 0x4, scoped, tag = 'scoped memory for tile.39']
  %s0 = inlined_call_operand.vmem [shape: f32[8], index: 0, kind: input, shape index: {}]
  %s1 = inlined_call_operand.vmem [shape: f32[4,8], index: 1, kind: output, shape index: {}]
  // Predicated region
  $region2: #{tile.39} parent=0 // pred_check
    _
  $region3: #{tile.39} parent=0 // pred_check_branch
    %3 = sbr.rel (0) target = $region5
  $region4: #{tile.39} parent=0 // pred_region
    _
  $region5: #{tile.39} parent=0 // pred_fallthru
    _
  %v4 = vld [vmem:[%s0] ss:$0 sm:$0xff]
  %5 = vst [vmem:[%s1] sm:$0xf] %v4

// kernel: tile.2
$region0: #{tile.2}
  %s0 = inlined_call_operand.vmem [shape: f32[4,8], index: 0, kind: input, shape index: {}]
  %s1 = inlined_call_operand.vmem [shape: f32[32,1], index: 1, kind: output, shape index: {}]
  $region1: #{tile.2} parent=0
    #allocation0 [shape = 'u8[4096]{0}', space=vmem, size = 0x1000, scoped, tag = 'scoped mem for input reshape']
    %s3 = sshllo.u32 0, 4
    %v4 = vld [vmem:[%s0] sm:%s3]
    %5 = vst [vmem:[#allocation0] sm:%s3] %v4
    %v6 = vld [vmem:[#allocation0] sm:$0xf]
    %vm7 = vcmask 7168
    %8 = vst.msk [vmem:[%s1] ss:$8 sm:$0xf] %vm7, %v6
    %v9 = vld [vmem:[#allocation0] sm:$0xf]
    %10 = vrot.lane.b32.xlu0 %v9, 127
    %v11 = vpop.permute.xlu0 %10
    %vm12 = vcmask 7168
    %s13 = scalar_lea.vmem %s1, 1
    %14 = vst.msk [vmem:[%s13] ss:$8 sm:$0xf] %vm12, %v11
    %v15 = vld [vmem:[#allocation0] sm:$0xf]
    %16 = vrot.lane.b32.xlu0 %v15, 126
    %v17 = vpop.permute.xlu0 %16
    %vm18 = vcmask 7168
    %s19 = scalar_lea.vmem %s1, 2
    %20 = vst.msk [vmem:[%s19] ss:$8 sm:$0xf] %vm18, %v17
    %v21 = vld [vmem:[#allocation0] sm:$0xf]
    %22 = vrot.lane.b32.xlu0 %v21, 125
    %v23 = vpop.permute.xlu0 %22
    %vm24 = vcmask 7168
    %s25 = scalar_lea.vmem %s1, 3
    %26 = vst.msk [vmem:[%s25] ss:$8 sm:$0xf] %vm24, %v23
    %v27 = vld [vmem:[#allocation0] sm:$0xf]
    %28 = vrot.lane.b32.xlu0 %v27, 124
    %v29 = vpop.permute.xlu0 %28
    %vm30 = vcmask 7168
    %s31 = scalar_lea.vmem %s1, 4
    %32 = vst.msk [vmem:[%s31] ss:$8 sm:$0xf] %vm30, %v29
    %v33 = vld [vmem:[#allocation0] sm:$0xf]
    %34 = vrot.lane.b32.xlu0 %v33, 123
    %v35 = vpop.permute.xlu0 %34
    %vm36 = vcmask 7168
    %s37 = scalar_lea.vmem %s1, 5
    %38 = vst.msk [vmem:[%s37] ss:$8 sm:$0xf] %vm36, %v35
    %v39 = vld [vmem:[#allocation0] sm:$0xf]
    %40 = vrot.lane.b32.xlu0 %v39, 122
    %v41 = vpop.permute.xlu0 %40
    %vm42 = vcmask 7168
    %s43 = scalar_lea.vmem %s1, 6
    %44 = vst.msk [vmem:[%s43] ss:$8 sm:$0xf] %vm42, %v41
    %v45 = vld [vmem:[#allocation0] sm:$0xf]
    %46 = vrot.lane.b32.xlu0 %v45, 121
    %v47 = vpop.permute.xlu0 %46
    %vm48 = vcmask 7168
    %s49 = scalar_lea.vmem %s1, 7
    %50 = vst.msk [vmem:[%s49] ss:$8 sm:$0xf] %vm48, %v47

// kernel: decoder_forward.7
$region0: #{decoder_forward.7}
  #allocation0 [shape = 'u32[]', space=smem, size = 0x4, offset = 0x4, fixed_abs, tag = 'smem constant byte address 0x4 - core index']
  #allocation1 [shape = 'u32[144,128]{1,0:T(1,128)}', space=vmem, size = 0x12000, scoped, tag = 'internal scratch']
  %s0 = inlined_call_operand.vmem [shape: f32[32,384], index: 0, kind: input, shape index: {}]
  %s1 = inlined_call_operand.vmem [shape: f32[32,1], index: 1, kind: input, shape index: {}]
  %s2 = inlined_call_operand.vmem [shape: f32[32,1], index: 2, kind: input, shape index: {}]
  %s3 = inlined_call_operand.vmem [shape: f32[32,384], index: 3, kind: output, shape index: {}]
  %s4 = sld [smem:[#allocation0]]
  $region117: #{decoder_forward.7} parent=0
    _
  %s6 = ssub.s32 1, %s4
  %s7 = scalar_select 0, %s6, %s4
  $region1: #{decoder_forward.7} parent=0
    #allocation2 [shape = 'u8[32768]{0}', space=vmem, size = 0x8000, scoped, tag = 'input window, operand 0']
    #allocation3 [shape = 'u8[32768]{0}', space=vmem, size = 0x8000, scoped, tag = 'output window, operand 0']
    loop: start=0, step=1, limit=5
    $region2: #{decoder_forward.7} parent=1 // loop_pre_header
      _
    $region3: #{decoder_forward.7} parent=1 // loop_header
      %s9 = sphi 0, %s13
      %p10 = scmp.ge.s32.totalorder %s9, 5
      %s19 = sphi 0, %s21
      %s22 = sphi 0, %s19
      %s23 = sphi 0, %s22
      %s39 = sphi 0, %s23
      %s43 = sphi 0, %s43
      %s45 = sphi 0, %s43
      %s46 = sphi 0, %s45
      %s60 = sphi 0, %s46
      %s64 = sphi 0, %s64
      %s66 = sphi 0, %s64
      %s67 = sphi 0, %s66
      %s81 = sphi 0, %s67
      %s87 = sphi 0, %s89
      %s90 = sphi 0, %s87
      %s91 = sphi 0, %s90
      %s107 = sphi 0, %s91
    $region4: #{decoder_forward.7} parent=1 // loop_header_branch
      %12 = sbr.rel (%p10) target = $region8
    $region5: #{decoder_forward.7} parent=1 // loop_body
      %s14 = ssub.s32 %s9, 1
      %s15 = ssub.s32 %s9, 2
      %s16 = sadd.s32 %s9, 1
      %s17 = ssub.s32 %s9, %s16
      %p18 = scmp.eq.s32.totalorder %s17, 0
      %s20 = sadd.s32 %s19, 1
      %s21 = scalar_select %p18, %s19, %s20
      %p24 = pneg %p18
      %p25 = scmp.eq.s32.totalorder %s9, 2
      %p26 = por %p24, %p25
      %p27 = scmp.ne.s32.totalorder %s19, %s22
      %p28 = scmp.eq.s32.totalorder %s9, 0
      %p29 = por %p27, %p28
      %p30 = scmp.ne.s32.totalorder %s19, %s22
      %p31 = scmp.eq.s32.totalorder %s14, 2
      %p32 = por %p30, %p31
      %p33 = scmp.ne.s32.totalorder %s22, %s23
      %p34 = scmp.eq.s32.totalorder %s14, 0
      %p35 = por %p33, %p34
      %p36 = scmp.ne.s32.totalorder %s22, %s23
      %p37 = scmp.eq.s32.totalorder %s15, 2
      %p38 = por %p36, %p37
      %p40 = scmp.ne.s32.totalorder %s23, %s39
      %p41 = scmp.eq.s32.totalorder %s15, 0
      %p42 = por %p40, %p41
      %s44 = sadd.s32 %s43, 1
      %p47 = scmp.eq.s32.totalorder %s9, 2
      %p48 = scmp.ne.s32.totalorder %s43, %s45
      %p49 = scmp.eq.s32.totalorder %s9, 0
      %p50 = por %p48, %p49
      %p51 = scmp.ne.s32.totalorder %s43, %s45
      %p52 = scmp.eq.s32.totalorder %s14, 2
      %p53 = por %p51, %p52
      %p54 = scmp.ne.s32.totalorder %s45, %s46
      %p55 = scmp.eq.s32.totalorder %s14, 0
      %p56 = por %p54, %p55
      %p57 = scmp.ne.s32.totalorder %s45, %s46
      %p58 = scmp.eq.s32.totalorder %s15, 2
      %p59 = por %p57, %p58
      %p61 = scmp.ne.s32.totalorder %s46, %s60
      %p62 = scmp.eq.s32.totalorder %s15, 0
      %p63 = por %p61, %p62
      %s65 = sadd.s32 %s64, 1
      %p68 = scmp.eq.s32.totalorder %s9, 2
      %p69 = scmp.ne.s32.totalorder %s64, %s66
      %p70 = scmp.eq.s32.totalorder %s9, 0
      %p71 = por %p69, %p70
      %p72 = scmp.ne.s32.totalorder %s64, %s66
      %p73 = scmp.eq.s32.totalorder %s14, 2
      %p74 = por %p72, %p73
      %p75 = scmp.ne.s32.totalorder %s66, %s67
      %p76 = scmp.eq.s32.totalorder %s14, 0
      %p77 = por %p75, %p76
      %p78 = scmp.ne.s32.totalorder %s66, %s67
      %p79 = scmp.eq.s32.totalorder %s15, 2
      %p80 = por %p78, %p79
      %p82 = scmp.ne.s32.totalorder %s67, %s81
      %p83 = scmp.eq.s32.totalorder %s15, 0
      %p84 = por %p82, %p83
      %s85 = ssub.s32 %s9, %s16
      %p86 = scmp.eq.s32.totalorder %s85, 0
      %s88 = sadd.s32 %s87, 1
      %s89 = scalar_select %p86, %s87, %s88
      %p92 = pneg %p86
      %p93 = scmp.eq.s32.totalorder %s9, 2
      %p94 = por %p92, %p93
      %p95 = scmp.ne.s32.totalorder %s87, %s90
      %p96 = scmp.eq.s32.totalorder %s9, 0
      %p97 = por %p95, %p96
      %p98 = scmp.ne.s32.totalorder %s87, %s90
      %p99 = scmp.eq.s32.totalorder %s14, 2
      %p100 = por %p98, %p99
      %p101 = scmp.ne.s32.totalorder %s90, %s91
      %p102 = scmp.eq.s32.totalorder %s14, 0
      %p103 = por %p101, %p102
      %p104 = scmp.ne.s32.totalorder %s90, %s91
      %p105 = scmp.eq.s32.totalorder %s15, 2
      %p106 = por %p104, %p105
      %p108 = scmp.ne.s32.totalorder %s91, %s107
      %p109 = scmp.eq.s32.totalorder %s15, 0
      %p110 = por %p108, %p109
      %p111 = scmp.le.s32.totalorder 1, %s9
      %p112 = scmp.lt.s32.totalorder %s9, 4
      %p113 = pnand %p111, %p112
      %p114 = pneg %p113
      // Predicated region
      $region9: #{decoder_forward.7} parent=5 // pred_check
        _
      $region10: #{decoder_forward.7} parent=5 // pred_check_branch
        %116 = sbr.rel (%p113) target = $region12
      $region11: #{decoder_forward.7} parent=5 // pred_region
        %s117 = ssub.s32 %s9, 1
        // Predicated region
        $region13: #{decoder_forward.7} parent=11 // pred_check
          %p118 = pneg %p56
        $region14: #{decoder_forward.7} parent=11 // pred_check_branch
          %120 = sbr.rel (%p118) target = $region16
        $region15: #{decoder_forward.7} parent=11 // pred_region
          _
        $region16: #{decoder_forward.7} parent=11 // pred_fallthru
          _
        // Predicated region
        $region17: #{decoder_forward.7} parent=11 // pred_check
          %p121 = pneg %p77
        $region18: #{decoder_forward.7} parent=11 // pred_check_branch
          %123 = sbr.rel (%p121) target = $region20
        $region19: #{decoder_forward.7} parent=11 // pred_region
          _
        $region20: #{decoder_forward.7} parent=11 // pred_fallthru
          _
      $region12: #{decoder_forward.7} parent=5 // pred_fallthru
        _
      %p124 = scmp.lt.s32.totalorder %s9, 3
      // Predicated region
      $region21: #{decoder_forward.7} parent=5 // pred_check
        %p125 = pneg %p124
      $region22: #{decoder_forward.7} parent=5 // pred_check_branch
        %127 = sbr.rel (%p125) target = $region24
      $region23: #{decoder_forward.7} parent=5 // pred_region
        // Predicated region
        $region25: #{decoder_forward.7} parent=23 // pred_check
          %p128 = pneg %p29
        $region26: #{decoder_forward.7} parent=23 // pred_check_branch
          %130 = sbr.rel (%p128) target = $region28
        $region27: #{decoder_forward.7} parent=23 // pred_region
          %s131 = sand.u32 %s19, 1
          %s132 = sand.u32 %s19, 1
          %s133 = smul.addr %s132, 32
          %s134 = scalar_lea.vmem [#allocation2], %s133
          %s135 = smul.addr %s9, 8
          %s136 = scalar_lea.vmem %s0, %s135
          // Predicated region
          $region29: #{decoder_forward.7} parent=27 // pred_check
            _
          $region30: #{decoder_forward.7} parent=27 // pred_check_branch
            %138 = sbr.rel (0) target = $region32
          $region31: #{decoder_forward.7} parent=27 // pred_region
            // Predicated region
            $region33: #{decoder_forward.7} parent=31 // pred_check
              _
            $region34: #{decoder_forward.7} parent=31 // pred_check_branch
              %140 = sbr.rel (0) target = $region36
            $region35: #{decoder_forward.7} parent=31 // pred_region
              // Predicated region
              $region48: #{decoder_forward.7} parent=35 // pred_check
                _
              $region49: #{decoder_forward.7} parent=35 // pred_check_branch
                %161 = sbr.rel (0) target = $region51
              $region50: #{decoder_forward.7} parent=35 // pred_region
                loop: start=0, step=1, limit=1
                $region52: #{decoder_forward.7} parent=50 // loop_pre_header
                  _
                $region53: #{decoder_forward.7} parent=50 // loop_header
                  %s163 = sphi 0, %s167
                  %p164 = scmp.ge.s32.totalorder %s163, 1
                  %s168 = sphi %s136, %s136
                  %s169 = sphi %s134, %s134
                $region54: #{decoder_forward.7} parent=50 // loop_header_branch
                  %166 = sbr.rel (%p164) target = $region58
                $region55: #{decoder_forward.7} parent=50 // loop_body
                  %v170 = vld [vmem:[%s168] sm:$0xff]
                  %171 = vst [vmem:[%s169] sm:$0xff] %v170
                  %v172 = vld [vmem:[%s168 + $0x18] sm:$0xff]
                  %173 = vst [vmem:[%s169 + $0x8] sm:$0xff] %v172
                  %v174 = vld [vmem:[%s168 + $0x30] sm:$0xff]
                  %175 = vst [vmem:[%s169 + $0x10] sm:$0xff] %v174
                  %v176 = vld [vmem:[%s168 + $0x48] sm:$0xff]
                  %177 = vst [vmem:[%s169 + $0x18] sm:$0xff] %v176
                $region56: #{decoder_forward.7} parent=50 // loop_footer
                  %s167 = sadd.s32 1, %s163
                $region57: #{decoder_forward.7} parent=50 // loop_footer_branch
                  %162 = sbr.rel target = $region53
                $region58: #{decoder_forward.7} parent=50 // loop_exit
                  _
              $region51: #{decoder_forward.7} parent=35 // pred_fallthru
                _
              // Predicated region
              $region59: #{decoder_forward.7} parent=35 // pred_check
                _
              $region60: #{decoder_forward.7} parent=35 // pred_check_branch
                %179 = sbr.rel target = $region62
              $region61: #{decoder_forward.7} parent=35 // pred_region
                _
              $region62: #{decoder_forward.7} parent=35 // pred_fallthru
                _
            $region36: #{decoder_forward.7} parent=31 // pred_fallthru
              _
            // Predicated region
            $region37: #{decoder_forward.7} parent=31 // pred_check
              _
            $region38: #{decoder_forward.7} parent=31 // pred_check_branch
              %142 = sbr.rel target = $region40
            $region39: #{decoder_forward.7} parent=31 // pred_region
              loop: start=0, step=1, limit=1
              $region41: #{decoder_forward.7} parent=39 // loop_pre_header
                _
              $region42: #{decoder_forward.7} parent=39 // loop_header
                %s145 = sphi 0, %s149
                %p146 = scmp.ge.s32.totalorder %s145, 1
                %s150 = sphi %s136, %s136
                %s151 = sphi %s134, %s134
              $region43: #{decoder_forward.7} parent=39 // loop_header_branch
                %148 = sbr.rel (%p146) target = $region47
              $region44: #{decoder_forward.7} parent=39 // loop_body
                %v152 = vld [vmem:[%s150] sm:$0xff]
                %153 = vst [vmem:[%s151] sm:$0xff] %v152
                %v154 = vld [vmem:[%s150 + $0x18] sm:$0xff]
                %155 = vst [vmem:[%s151 + $0x8] sm:$0xff] %v154
                %v156 = vld [vmem:[%s150 + $0x30] sm:$0xff]
                %157 = vst [vmem:[%s151 + $0x10] sm:$0xff] %v156
                %v158 = vld [vmem:[%s150 + $0x48] sm:$0xff]
                %159 = vst [vmem:[%s151 + $0x18] sm:$0xff] %v158
              $region45: #{decoder_forward.7} parent=39 // loop_footer
                %s149 = sadd.s32 1, %s145
              $region46: #{decoder_forward.7} parent=39 // loop_footer_branch
                %144 = sbr.rel target = $region42
              $region47: #{decoder_forward.7} parent=39 // loop_exit
                _
            $region40: #{decoder_forward.7} parent=31 // pred_fallthru
              _
          $region32: #{decoder_forward.7} parent=27 // pred_fallthru
            _
          %180 = vnop
        $region28: #{decoder_forward.7} parent=23 // pred_fallthru
          _
      $region24: #{decoder_forward.7} parent=5 // pred_fallthru
        _
      %p181 = scmp.le.s32.totalorder 1, %s9
      %p182 = scmp.lt.s32.totalorder %s9, 4
      %p183 = pnand %p181, %p182
      %p184 = pneg %p183
      // Predicated region
      $region63: #{decoder_forward.7} parent=5 // pred_check
        _
      $region64: #{decoder_forward.7} parent=5 // pred_check_branch
        %186 = sbr.rel (%p183) target = $region66
      $region65: #{decoder_forward.7} parent=5 // pred_region
        %s187 = ssub.s32 %s9, 1
        %s188 = sand.u32 %s22, 1
        %s189 = sand.u32 %s22, 1
        %s190 = smul.addr %s189, 32
        %s191 = scalar_lea.vmem [#allocation2], %s190
        // Predicated region
        $region67: #{decoder_forward.7} parent=65 // pred_check
          %p192 = pneg %p35
        $region68: #{decoder_forward.7} parent=65 // pred_check_branch
          %194 = sbr.rel (%p192) target = $region70
        $region69: #{decoder_forward.7} parent=65 // pred_region
          _
        $region70: #{decoder_forward.7} parent=65 // pred_fallthru
          _
        %s195 = sand.u32 %s22, 1
        %s196 = sand.u32 %s22, 1
        %s197 = smul.addr %s196, 32
        %s198 = scalar_lea.vmem [#allocation2], %s197
        %p199 = pneg %p35
        %p200 = pneg %p32
        %p201 = pneg %p56
        %p202 = pneg %p53
        %p203 = pneg %p77
        %p204 = pneg %p74
        %p205 = pneg %p103
        %p206 = pneg %p100
        %s207 = sand.u32 %s90, 1
        %s208 = sand.u32 %s90, 1
        %s209 = smul.addr %s208, 32
        %s210 = scalar_lea.vmem [#allocation3], %s209
        %v211 = vld [vmem:[%s191] sm:$0xff]
        %v212 = vld [vmem:[%s191 + $0x8] sm:$0xff]
        %v213 = vld [vmem:[%s191 + $0x10] sm:$0xff]
        %v214 = vld [vmem:[%s191 + $0x18] sm:$0xff]
        %v215 = vld [vmem:[%s1] sm:$0xff]
        %v216 = vld [vmem:[%s1 + $0x8] sm:$0xff]
        %v217 = vld [vmem:[%s1 + $0x10] sm:$0xff]
        %v218 = vld [vmem:[%s1 + $0x18] sm:$0xff]
        %220 = vset.pattern.permute.xlu0 0
        %221 = vperm.xlu0 %220, %v215
        %v222 = vpop.permute.xlu0 %221
        %225 = vset.pattern.permute.xlu0 0
        %226 = vperm.xlu0 %225, %v216
        %v227 = vpop.permute.xlu0 %226
        %230 = vset.pattern.permute.xlu0 0
        %231 = vperm.xlu0 %230, %v217
        %v232 = vpop.permute.xlu0 %231
        %235 = vset.pattern.permute.xlu0 0
        %236 = vperm.xlu0 %235, %v218
        %v237 = vpop.permute.xlu0 %236
        %v239 = vmul.f32 %v211, %v222
        %v240 = vmul.f32 %v212, %v227
        %v241 = vmul.f32 %v213, %v232
        %v242 = vmul.f32 %v214, %v237
        %v243 = vld [vmem:[%s2] sm:$0xff]
        %v244 = vld [vmem:[%s2 + $0x8] sm:$0xff]
        %v245 = vld [vmem:[%s2 + $0x10] sm:$0xff]
        %v246 = vld [vmem:[%s2 + $0x18] sm:$0xff]
        %248 = vset.pattern.permute.xlu0 0
        %249 = vperm.xlu0 %248, %v243
        %v250 = vpop.permute.xlu0 %249
        %253 = vset.pattern.permute.xlu0 0
        %254 = vperm.xlu0 %253, %v244
        %v255 = vpop.permute.xlu0 %254
        %258 = vset.pattern.permute.xlu0 0
        %259 = vperm.xlu0 %258, %v245
        %v260 = vpop.permute.xlu0 %259
        %263 = vset.pattern.permute.xlu0 0
        %264 = vperm.xlu0 %263, %v246
        %v265 = vpop.permute.xlu0 %264
        %v267 = vadd.f32 %v239, %v250
        %v268 = vadd.f32 %v240, %v255
        %v269 = vadd.f32 %v241, %v260
        %v270 = vadd.f32 %v242, %v265
        %v271 = vmax.f32 %v267, 0.0
        %v272 = vmax.f32 %v268, 0.0
        %v273 = vmax.f32 %v269, 0.0
        %v274 = vmax.f32 %v270, 0.0
        %275 = vst [vmem:[%s210] sm:$0xff] %v271
        %276 = vst [vmem:[%s210 + $0x8] sm:$0xff] %v272
        %277 = vst [vmem:[%s210 + $0x10] sm:$0xff] %v273
        %278 = vst [vmem:[%s210 + $0x18] sm:$0xff] %v274
        %s279 = sand.u32 %s90, 1
        %s280 = sand.u32 %s90, 1
        %s281 = smul.addr %s280, 32
        %s282 = scalar_lea.vmem [#allocation3], %s281
        // Predicated region
        $region71: #{decoder_forward.7} parent=65 // pred_check
          %p283 = pneg %p100
        $region72: #{decoder_forward.7} parent=65 // pred_check_branch
          %285 = sbr.rel (%p283) target = $region74
        $region73: #{decoder_forward.7} parent=65 // pred_region
          %s286 = smul.addr %s14, 8
          %s287 = scalar_lea.vmem %s3, %s286
          // Predicated region
          $region75: #{decoder_forward.7} parent=73 // pred_check
            _
          $region76: #{decoder_forward.7} parent=73 // pred_check_branch
            %289 = sbr.rel (0) target = $region78
          $region77: #{decoder_forward.7} parent=73 // pred_region
            // Predicated region
            $region79: #{decoder_forward.7} parent=77 // pred_check
              _
            $region80: #{decoder_forward.7} parent=77 // pred_check_branch
              %291 = sbr.rel (0) target = $region82
            $region81: #{decoder_forward.7} parent=77 // pred_region
              // Predicated region
              $region94: #{decoder_forward.7} parent=81 // pred_check
                _
              $region95: #{decoder_forward.7} parent=81 // pred_check_branch
                %312 = sbr.rel (0) target = $region97
              $region96: #{decoder_forward.7} parent=81 // pred_region
                loop: start=0, step=1, limit=1
                $region98: #{decoder_forward.7} parent=96 // loop_pre_header
                  _
                $region99: #{decoder_forward.7} parent=96 // loop_header
                  %s314 = sphi 0, %s318
                  %p315 = scmp.ge.s32.totalorder %s314, 1
                  %s319 = sphi %s282, %s282
                  %s320 = sphi %s287, %s287
                $region100: #{decoder_forward.7} parent=96 // loop_header_branch
                  %317 = sbr.rel (%p315) target = $region104
                $region101: #{decoder_forward.7} parent=96 // loop_body
                  %v321 = vld [vmem:[%s319] sm:$0xff]
                  %322 = vst [vmem:[%s320] sm:$0xff] %v321
                  %v323 = vld [vmem:[%s319 + $0x8] sm:$0xff]
                  %324 = vst [vmem:[%s320 + $0x18] sm:$0xff] %v323
                  %v325 = vld [vmem:[%s319 + $0x10] sm:$0xff]
                  %326 = vst [vmem:[%s320 + $0x30] sm:$0xff] %v325
                  %v327 = vld [vmem:[%s319 + $0x18] sm:$0xff]
                  %328 = vst [vmem:[%s320 + $0x48] sm:$0xff] %v327
                $region102: #{decoder_forward.7} parent=96 // loop_footer
                  %s318 = sadd.s32 1, %s314
                $region103: #{decoder_forward.7} parent=96 // loop_footer_branch
                  %313 = sbr.rel target = $region99
                $region104: #{decoder_forward.7} parent=96 // loop_exit
                  _
              $region97: #{decoder_forward.7} parent=81 // pred_fallthru
                _
              // Predicated region
              $region105: #{decoder_forward.7} parent=81 // pred_check
                _
              $region106: #{decoder_forward.7} parent=81 // pred_check_branch
                %330 = sbr.rel target = $region108
              $region107: #{decoder_forward.7} parent=81 // pred_region
                _
              $region108: #{decoder_forward.7} parent=81 // pred_fallthru
                _
            $region82: #{decoder_forward.7} parent=77 // pred_fallthru
              _
            // Predicated region
            $region83: #{decoder_forward.7} parent=77 // pred_check
              _
            $region84: #{decoder_forward.7} parent=77 // pred_check_branch
              %293 = sbr.rel target = $region86
            $region85: #{decoder_forward.7} parent=77 // pred_region
              loop: start=0, step=1, limit=1
              $region87: #{decoder_forward.7} parent=85 // loop_pre_header
                _
              $region88: #{decoder_forward.7} parent=85 // loop_header
                %s296 = sphi 0, %s300
                %p297 = scmp.ge.s32.totalorder %s296, 1
                %s301 = sphi %s282, %s282
                %s302 = sphi %s287, %s287
              $region89: #{decoder_forward.7} parent=85 // loop_header_branch
                %299 = sbr.rel (%p297) target = $region93
              $region90: #{decoder_forward.7} parent=85 // loop_body
                %v303 = vld [vmem:[%s301] sm:$0xff]
                %304 = vst [vmem:[%s302] sm:$0xff] %v303
                %v305 = vld [vmem:[%s301 + $0x8] sm:$0xff]
                %306 = vst [vmem:[%s302 + $0x18] sm:$0xff] %v305
                %v307 = vld [vmem:[%s301 + $0x10] sm:$0xff]
                %308 = vst [vmem:[%s302 + $0x30] sm:$0xff] %v307
                %v309 = vld [vmem:[%s301 + $0x18] sm:$0xff]
                %310 = vst [vmem:[%s302 + $0x48] sm:$0xff] %v309
              $region91: #{decoder_forward.7} parent=85 // loop_footer
                %s300 = sadd.s32 1, %s296
              $region92: #{decoder_forward.7} parent=85 // loop_footer_branch
                %295 = sbr.rel target = $region88
              $region93: #{decoder_forward.7} parent=85 // loop_exit
                _
            $region86: #{decoder_forward.7} parent=77 // pred_fallthru
              _
          $region78: #{decoder_forward.7} parent=73 // pred_fallthru
            _
          %331 = vnop
        $region74: #{decoder_forward.7} parent=65 // pred_fallthru
          _
      $region66: #{decoder_forward.7} parent=5 // pred_fallthru
        _
      %p332 = scmp.le.s32.totalorder 2, %s9
      // Predicated region
      $region109: #{decoder_forward.7} parent=5 // pred_check
        %p333 = pneg %p332
      $region110: #{decoder_forward.7} parent=5 // pred_check_branch
        %335 = sbr.rel (%p333) target = $region112
      $region111: #{decoder_forward.7} parent=5 // pred_region
        %s336 = ssub.s32 %s9, 2
        // Predicated region
        $region113: #{decoder_forward.7} parent=111 // pred_check
          %p337 = pneg %p106
        $region114: #{decoder_forward.7} parent=111 // pred_check_branch
          %339 = sbr.rel (%p337) target = $region116
        $region115: #{decoder_forward.7} parent=111 // pred_region
          %s340 = sand.u32 %s91, 1
          %s341 = sand.u32 %s91, 1
          %s342 = smul.addr %s341, 32
          %s343 = scalar_lea.vmem [#allocation3], %s342
        $region116: #{decoder_forward.7} parent=111 // pred_fallthru
          _
      $region112: #{decoder_forward.7} parent=5 // pred_fallthru
        _
    $region6: #{decoder_forward.7} parent=1 // loop_footer
      %s13 = sadd.s32 1, %s9
    $region7: #{decoder_forward.7} parent=1 // loop_footer_branch
      %8 = sbr.rel target = $region3
    $region8: #{decoder_forward.7} parent=1 // loop_exit
      _

// kernel: decoder_forward.6
$region0: #{decoder_forward.6}
  #allocation0 [shape = 'u32[]', space=smem, size = 0x4, offset = 0x4, fixed_abs, tag = 'smem constant byte address 0x4 - core index']
  #allocation1 [shape = 'u32[144,128]{1,0:T(1,128)}', space=vmem, size = 0x12000, scoped, tag = 'internal scratch']
  %s0 = inlined_call_operand.vmem [shape: f32[16,384], index: 0, kind: input, shape index: {}]
  %s1 = inlined_call_operand.vmem [shape: f32[32,16], index: 1, kind: input, shape index: {}]
  %s2 = inlined_call_operand.vmem [shape: f32[16,1], index: 2, kind: input, shape index: {}]
  %s3 = inlined_call_operand.vmem [shape: f32[16,1], index: 3, kind: input, shape index: {}]
  %s4 = inlined_call_operand.vmem [shape: f32[32,384], index: 4, kind: output, shape index: {0}]
  %s5 = inlined_call_operand.vmem [shape: f32[3,32,1], index: 5, kind: output, shape index: {1}]
  %s6 = inlined_call_operand.vmem [shape: f32[3,32,1], index: 6, kind: output, shape index: {2}]
  %7 = xla_tuple %s4, %s5, %s6
  %s8 = sld [smem:[#allocation0]]
  $region137: #{decoder_forward.6} parent=0
    _
  %s10 = ssub.s32 1, %s8
  %s11 = scalar_select 0, %s10, %s8
  $region1: #{decoder_forward.6} parent=0
    #allocation2 [shape = 'u8[16384]{0}', space=vmem, size = 0x4000, scoped, tag = 'input window, operand 0']
    #allocation3 [shape = 'u8[32768]{0}', space=vmem, size = 0x8000, scoped, tag = 'output window, operand 0']
    loop: start=0, step=1, limit=5
    $region2: #{decoder_forward.6} parent=1 // loop_pre_header
      _
    $region3: #{decoder_forward.6} parent=1 // loop_header
      %s13 = sphi 0, %s17
      %p14 = scmp.ge.s32.totalorder %s13, 5
      %s23 = sphi 0, %s25
      %s26 = sphi 0, %s23
      %s27 = sphi 0, %s26
      %s43 = sphi 0, %s27
      %s47 = sphi 0, %s47
      %s49 = sphi 0, %s47
      %s50 = sphi 0, %s49
      %s64 = sphi 0, %s50
      %s68 = sphi 0, %s68
      %s70 = sphi 0, %s68
      %s71 = sphi 0, %s70
      %s85 = sphi 0, %s71
      %s89 = sphi 0, %s89
      %s91 = sphi 0, %s89
      %s92 = sphi 0, %s91
      %s106 = sphi 0, %s92
      %s112 = sphi 0, %s114
      %s115 = sphi 0, %s112
      %s116 = sphi 0, %s115
      %s132 = sphi 0, %s116
      %s138 = sphi 0, %s140
      %s141 = sphi 0, %s138
      %s142 = sphi 0, %s141
      %s158 = sphi 0, %s142
      %s164 = sphi 0, %s166
      %s167 = sphi 0, %s164
      %s168 = sphi 0, %s167
      %s184 = sphi 0, %s168
    $region4: #{decoder_forward.6} parent=1 // loop_header_branch
      %16 = sbr.rel (%p14) target = $region8
    $region5: #{decoder_forward.6} parent=1 // loop_body
      %s18 = ssub.s32 %s13, 1
      %s19 = ssub.s32 %s13, 2
      %s20 = sadd.s32 %s13, 1
      %s21 = ssub.s32 %s13, %s20
      %p22 = scmp.eq.s32.totalorder %s21, 0
      %s24 = sadd.s32 %s23, 1
      %s25 = scalar_select %p22, %s23, %s24
      %p28 = pneg %p22
      %p29 = scmp.eq.s32.totalorder %s13, 2
      %p30 = por %p28, %p29
      %p31 = scmp.ne.s32.totalorder %s23, %s26
      %p32 = scmp.eq.s32.totalorder %s13, 0
      %p33 = por %p31, %p32
      %p34 = scmp.ne.s32.totalorder %s23, %s26
      %p35 = scmp.eq.s32.totalorder %s18, 2
      %p36 = por %p34, %p35
      %p37 = scmp.ne.s32.totalorder %s26, %s27
      %p38 = scmp.eq.s32.totalorder %s18, 0
      %p39 = por %p37, %p38
      %p40 = scmp.ne.s32.totalorder %s26, %s27
      %p41 = scmp.eq.s32.totalorder %s19, 2
      %p42 = por %p40, %p41
      %p44 = scmp.ne.s32.totalorder %s27, %s43
      %p45 = scmp.eq.s32.totalorder %s19, 0
      %p46 = por %p44, %p45
      %s48 = sadd.s32 %s47, 1
      %p51 = scmp.eq.s32.totalorder %s13, 2
      %p52 = scmp.ne.s32.totalorder %s47, %s49
      %p53 = scmp.eq.s32.totalorder %s13, 0
      %p54 = por %p52, %p53
      %p55 = scmp.ne.s32.totalorder %s47, %s49
      %p56 = scmp.eq.s32.totalorder %s18, 2
      %p57 = por %p55, %p56
      %p58 = scmp.ne.s32.totalorder %s49, %s50
      %p59 = scmp.eq.s32.totalorder %s18, 0
      %p60 = por %p58, %p59
      %p61 = scmp.ne.s32.totalorder %s49, %s50
      %p62 = scmp.eq.s32.totalorder %s19, 2
      %p63 = por %p61, %p62
      %p65 = scmp.ne.s32.totalorder %s50, %s64
      %p66 = scmp.eq.s32.totalorder %s19, 0
      %p67 = por %p65, %p66
      %s69 = sadd.s32 %s68, 1
      %p72 = scmp.eq.s32.totalorder %s13, 2
      %p73 = scmp.ne.s32.totalorder %s68, %s70
      %p74 = scmp.eq.s32.totalorder %s13, 0
      %p75 = por %p73, %p74
      %p76 = scmp.ne.s32.totalorder %s68, %s70
      %p77 = scmp.eq.s32.totalorder %s18, 2
      %p78 = por %p76, %p77
      %p79 = scmp.ne.s32.totalorder %s70, %s71
      %p80 = scmp.eq.s32.totalorder %s18, 0
      %p81 = por %p79, %p80
      %p82 = scmp.ne.s32.totalorder %s70, %s71
      %p83 = scmp.eq.s32.totalorder %s19, 2
      %p84 = por %p82, %p83
      %p86 = scmp.ne.s32.totalorder %s71, %s85
      %p87 = scmp.eq.s32.totalorder %s19, 0
      %p88 = por %p86, %p87
      %s90 = sadd.s32 %s89, 1
      %p93 = scmp.eq.s32.totalorder %s13, 2
      %p94 = scmp.ne.s32.totalorder %s89, %s91
      %p95 = scmp.eq.s32.totalorder %s13, 0
      %p96 = por %p94, %p95
      %p97 = scmp.ne.s32.totalorder %s89, %s91
      %p98 = scmp.eq.s32.totalorder %s18, 2
      %p99 = por %p97, %p98
      %p100 = scmp.ne.s32.totalorder %s91, %s92
      %p101 = scmp.eq.s32.totalorder %s18, 0
      %p102 = por %p100, %p101
      %p103 = scmp.ne.s32.totalorder %s91, %s92
      %p104 = scmp.eq.s32.totalorder %s19, 2
      %p105 = por %p103, %p104
      %p107 = scmp.ne.s32.totalorder %s92, %s106
      %p108 = scmp.eq.s32.totalorder %s19, 0
      %p109 = por %p107, %p108
      %s110 = ssub.s32 %s13, %s20
      %p111 = scmp.eq.s32.totalorder %s110, 0
      %s113 = sadd.s32 %s112, 1
      %s114 = scalar_select %p111, %s112, %s113
      %p117 = pneg %p111
      %p118 = scmp.eq.s32.totalorder %s13, 2
      %p119 = por %p117, %p118
      %p120 = scmp.ne.s32.totalorder %s112, %s115
      %p121 = scmp.eq.s32.totalorder %s13, 0
      %p122 = por %p120, %p121
      %p123 = scmp.ne.s32.totalorder %s112, %s115
      %p124 = scmp.eq.s32.totalorder %s18, 2
      %p125 = por %p123, %p124
      %p126 = scmp.ne.s32.totalorder %s115, %s116
      %p127 = scmp.eq.s32.totalorder %s18, 0
      %p128 = por %p126, %p127
      %p129 = scmp.ne.s32.totalorder %s115, %s116
      %p130 = scmp.eq.s32.totalorder %s19, 2
      %p131 = por %p129, %p130
      %p133 = scmp.ne.s32.totalorder %s116, %s132
      %p134 = scmp.eq.s32.totalorder %s19, 0
      %p135 = por %p133, %p134
      %s136 = ssub.s32 %s13, %s20
      %p137 = scmp.eq.s32.totalorder %s136, 0
      %s139 = sadd.s32 %s138, 1
      %s140 = scalar_select %p137, %s138, %s139
      %p143 = pneg %p137
      %p144 = scmp.eq.s32.totalorder %s13, 2
      %p145 = por %p143, %p144
      %p146 = scmp.ne.s32.totalorder %s138, %s141
      %p147 = scmp.eq.s32.totalorder %s13, 0
      %p148 = por %p146, %p147
      %p149 = scmp.ne.s32.totalorder %s138, %s141
      %p150 = scmp.eq.s32.totalorder %s18, 2
      %p151 = por %p149, %p150
      %p152 = scmp.ne.s32.totalorder %s141, %s142
      %p153 = scmp.eq.s32.totalorder %s18, 0
      %p154 = por %p152, %p153
      %p155 = scmp.ne.s32.totalorder %s141, %s142
      %p156 = scmp.eq.s32.totalorder %s19, 2
      %p157 = por %p155, %p156
      %p159 = scmp.ne.s32.totalorder %s142, %s158
      %p160 = scmp.eq.s32.totalorder %s19, 0
      %p161 = por %p159, %p160
      %s162 = ssub.s32 %s13, %s20
      %p163 = scmp.eq.s32.totalorder %s162, 0
      %s165 = sadd.s32 %s164, 1
      %s166 = scalar_select %p163, %s164, %s165
      %p169 = pneg %p163
      %p170 = scmp.eq.s32.totalorder %s13, 2
      %p171 = por %p169, %p170
      %p172 = scmp.ne.s32.totalorder %s164, %s167
      %p173 = scmp.eq.s32.totalorder %s13, 0
      %p174 = por %p172, %p173
      %p175 = scmp.ne.s32.totalorder %s164, %s167
      %p176 = scmp.eq.s32.totalorder %s18, 2
      %p177 = por %p175, %p176
      %p178 = scmp.ne.s32.totalorder %s167, %s168
      %p179 = scmp.eq.s32.totalorder %s18, 0
      %p180 = por %p178, %p179
      %p181 = scmp.ne.s32.totalorder %s167, %s168
      %p182 = scmp.eq.s32.totalorder %s19, 2
      %p183 = por %p181, %p182
      %p185 = scmp.ne.s32.totalorder %s168, %s184
      %p186 = scmp.eq.s32.totalorder %s19, 0
      %p187 = por %p185, %p186
      %p188 = scmp.le.s32.totalorder 1, %s13
      %p189 = scmp.lt.s32.totalorder %s13, 4
      %p190 = pnand %p188, %p189
      %p191 = pneg %p190
      // Predicated region
      $region9: #{decoder_forward.6} parent=5 // pred_check
        _
      $region10: #{decoder_forward.6} parent=5 // pred_check_branch
        %193 = sbr.rel (%p190) target = $region12
      $region11: #{decoder_forward.6} parent=5 // pred_region
        %s194 = ssub.s32 %s13, 1
        // Predicated region
        $region13: #{decoder_forward.6} parent=11 // pred_check
          %p195 = pneg %p60
        $region14: #{decoder_forward.6} parent=11 // pred_check_branch
          %197 = sbr.rel (%p195) target = $region16
        $region15: #{decoder_forward.6} parent=11 // pred_region
          _
        $region16: #{decoder_forward.6} parent=11 // pred_fallthru
          _
        // Predicated region
        $region17: #{decoder_forward.6} parent=11 // pred_check
          %p198 = pneg %p81
        $region18: #{decoder_forward.6} parent=11 // pred_check_branch
          %200 = sbr.rel (%p198) target = $region20
        $region19: #{decoder_forward.6} parent=11 // pred_region
          _
        $region20: #{decoder_forward.6} parent=11 // pred_fallthru
          _
        // Predicated region
        $region21: #{decoder_forward.6} parent=11 // pred_check
          %p201 = pneg %p102
        $region22: #{decoder_forward.6} parent=11 // pred_check_branch
          %203 = sbr.rel (%p201) target = $region24
        $region23: #{decoder_forward.6} parent=11 // pred_region
          _
        $region24: #{decoder_forward.6} parent=11 // pred_fallthru
          _
      $region12: #{decoder_forward.6} parent=5 // pred_fallthru
        _
      %p204 = scmp.lt.s32.totalorder %s13, 3
      // Predicated region
      $region25: #{decoder_forward.6} parent=5 // pred_check
        %p205 = pneg %p204
      $region26: #{decoder_forward.6} parent=5 // pred_check_branch
        %207 = sbr.rel (%p205) target = $region28
      $region27: #{decoder_forward.6} parent=5 // pred_region
        // Predicated region
        $region29: #{decoder_forward.6} parent=27 // pred_check
          %p208 = pneg %p33
        $region30: #{decoder_forward.6} parent=27 // pred_check_branch
          %210 = sbr.rel (%p208) target = $region32
        $region31: #{decoder_forward.6} parent=27 // pred_region
          %s211 = sand.u32 %s23, 1
          %s212 = sand.u32 %s23, 1
          %s213 = smul.addr %s212, 16
          %s214 = scalar_lea.vmem [#allocation2], %s213
          %s215 = smul.addr %s13, 8
          %s216 = scalar_lea.vmem %s0, %s215
          // Predicated region
          $region33: #{decoder_forward.6} parent=31 // pred_check
            _
          $region34: #{decoder_forward.6} parent=31 // pred_check_branch
            %218 = sbr.rel (0) target = $region36
          $region35: #{decoder_forward.6} parent=31 // pred_region
            // Predicated region
            $region37: #{decoder_forward.6} parent=35 // pred_check
              _
            $region38: #{decoder_forward.6} parent=35 // pred_check_branch
              %220 = sbr.rel (0) target = $region40
            $region39: #{decoder_forward.6} parent=35 // pred_region
              // Predicated region
              $region52: #{decoder_forward.6} parent=39 // pred_check
                _
              $region53: #{decoder_forward.6} parent=39 // pred_check_branch
                %237 = sbr.rel (0) target = $region55
              $region54: #{decoder_forward.6} parent=39 // pred_region
                loop: start=0, step=1, limit=1
                $region56: #{decoder_forward.6} parent=54 // loop_pre_header
                  _
                $region57: #{decoder_forward.6} parent=54 // loop_header
                  %s239 = sphi 0, %s243
                  %p240 = scmp.ge.s32.totalorder %s239, 1
                  %s244 = sphi %s216, %s216
                  %s245 = sphi %s214, %s214
                $region58: #{decoder_forward.6} parent=54 // loop_header_branch
                  %242 = sbr.rel (%p240) target = $region62
                $region59: #{decoder_forward.6} parent=54 // loop_body
                  %v246 = vld [vmem:[%s244] sm:$0xff]
                  %247 = vst [vmem:[%s245] sm:$0xff] %v246
                  %v248 = vld [vmem:[%s244 + $0x18] sm:$0xff]
                  %249 = vst [vmem:[%s245 + $0x8] sm:$0xff] %v248
                $region60: #{decoder_forward.6} parent=54 // loop_footer
                  %s243 = sadd.s32 1, %s239
                $region61: #{decoder_forward.6} parent=54 // loop_footer_branch
                  %238 = sbr.rel target = $region57
                $region62: #{decoder_forward.6} parent=54 // loop_exit
                  _
              $region55: #{decoder_forward.6} parent=39 // pred_fallthru
                _
              // Predicated region
              $region63: #{decoder_forward.6} parent=39 // pred_check
                _
              $region64: #{decoder_forward.6} parent=39 // pred_check_branch
                %251 = sbr.rel target = $region66
              $region65: #{decoder_forward.6} parent=39 // pred_region
                _
              $region66: #{decoder_forward.6} parent=39 // pred_fallthru
                _
            $region40: #{decoder_forward.6} parent=35 // pred_fallthru
              _
            // Predicated region
            $region41: #{decoder_forward.6} parent=35 // pred_check
              _
            $region42: #{decoder_forward.6} parent=35 // pred_check_branch
              %222 = sbr.rel target = $region44
            $region43: #{decoder_forward.6} parent=35 // pred_region
              loop: start=0, step=1, limit=1
              $region45: #{decoder_forward.6} parent=43 // loop_pre_header
                _
              $region46: #{decoder_forward.6} parent=43 // loop_header
                %s225 = sphi 0, %s229
                %p226 = scmp.ge.s32.totalorder %s225, 1
                %s230 = sphi %s216, %s216
                %s231 = sphi %s214, %s214
              $region47: #{decoder_forward.6} parent=43 // loop_header_branch
                %228 = sbr.rel (%p226) target = $region51
              $region48: #{decoder_forward.6} parent=43 // loop_body
                %v232 = vld [vmem:[%s230] sm:$0xff]
                %233 = vst [vmem:[%s231] sm:$0xff] %v232
                %v234 = vld [vmem:[%s230 + $0x18] sm:$0xff]
                %235 = vst [vmem:[%s231 + $0x8] sm:$0xff] %v234
              $region49: #{decoder_forward.6} parent=43 // loop_footer
                %s229 = sadd.s32 1, %s225
              $region50: #{decoder_forward.6} parent=43 // loop_footer_branch
                %224 = sbr.rel target = $region46
              $region51: #{decoder_forward.6} parent=43 // loop_exit
                _
            $region44: #{decoder_forward.6} parent=35 // pred_fallthru
              _
          $region36: #{decoder_forward.6} parent=31 // pred_fallthru
            _
          %252 = vnop
        $region32: #{decoder_forward.6} parent=27 // pred_fallthru
          _
      $region28: #{decoder_forward.6} parent=5 // pred_fallthru
        _
      %p253 = scmp.le.s32.totalorder 1, %s13
      %p254 = scmp.lt.s32.totalorder %s13, 4
      %p255 = pnand %p253, %p254
      %p256 = pneg %p255
      // Predicated region
      $region67: #{decoder_forward.6} parent=5 // pred_check
        _
      $region68: #{decoder_forward.6} parent=5 // pred_check_branch
        %258 = sbr.rel (%p255) target = $region70
      $region69: #{decoder_forward.6} parent=5 // pred_region
        %s259 = ssub.s32 %s13, 1
        %s260 = sand.u32 %s26, 1
        %s261 = sand.u32 %s26, 1
        %s262 = smul.addr %s261, 16
        %s263 = scalar_lea.vmem [#allocation2], %s262
        // Predicated region
        $region71: #{decoder_forward.6} parent=69 // pred_check
          %p264 = pneg %p39
        $region72: #{decoder_forward.6} parent=69 // pred_check_branch
          %266 = sbr.rel (%p264) target = $region74
        $region73: #{decoder_forward.6} parent=69 // pred_region
          _
        $region74: #{decoder_forward.6} parent=69 // pred_fallthru
          _
        %s267 = sand.u32 %s26, 1
        %s268 = sand.u32 %s26, 1
        %s269 = smul.addr %s268, 16
        %s270 = scalar_lea.vmem [#allocation2], %s269
        %p271 = pneg %p39
        %p272 = pneg %p36
        %p273 = pneg %p60
        %p274 = pneg %p57
        %p275 = pneg %p81
        %p276 = pneg %p78
        %p277 = pneg %p102
        %p278 = pneg %p99
        %p279 = pneg %p128
        %p280 = pneg %p125
        %s281 = sand.u32 %s115, 1
        %s282 = sand.u32 %s115, 1
        %s283 = smul.addr %s282, 32
        %s284 = scalar_lea.vmem [#allocation3], %s283
        %p285 = pneg %p154
        %p286 = pneg %p151
        %p287 = scmp.lt.s32.totalorder %s18, 2
        %s288 = scalar_select %p287, %s18, 2
        %s289 = smul.addr %s288, 4
        %s290 = smul.addr %s289, 8
        %s291 = scalar_lea.vmem %s5, %s290
        %p292 = pneg %p180
        %p293 = pneg %p177
        %p294 = scmp.lt.s32.totalorder %s18, 2
        %s295 = scalar_select %p294, %s18, 2
        %s296 = smul.addr %s295, 4
        %s297 = smul.addr %s296, 8
        %s298 = scalar_lea.vmem %s6, %s297
        %p299 = scmp.lt.s32.totalorder %s18, 2
        %s300 = scalar_select %p299, %s18, 2
        %s301 = smul.addr %s300, 4
        %s302 = smul.addr %s301, 8
        %s303 = scalar_lea.vmem %s5, %s302
        %p304 = scmp.lt.s32.totalorder %s18, 2
        %s305 = scalar_select %p304, %s18, 2
        %s306 = smul.addr %s305, 4
        %s307 = smul.addr %s306, 8
        %s308 = scalar_lea.vmem %s6, %s307
        %v309 = vld [vmem:[%s263] sm:$0xff]
        %v310 = vld [vmem:[%s263 + $0x8] sm:$0xff]
        %v311 = vld [vmem:[%s2] sm:$0xff]
        %v312 = vld [vmem:[%s2 + $0x8] sm:$0xff]
        %314 = vset.pattern.permute.xlu0 0
        %315 = vperm.xlu0 %314, %v311
        %v316 = vpop.permute.xlu0 %315
        %319 = vset.pattern.permute.xlu0 0
        %320 = vperm.xlu0 %319, %v312
        %v321 = vpop.permute.xlu0 %320
        %v323 = vmul.f32 %v309, %v316
        %v324 = vmul.f32 %v310, %v321
        %v325 = vld [vmem:[%s3] sm:$0xff]
        %v326 = vld [vmem:[%s3 + $0x8] sm:$0xff]
        %328 = vset.pattern.permute.xlu0 0
        %329 = vperm.xlu0 %328, %v325
        %v330 = vpop.permute.xlu0 %329
        %333 = vset.pattern.permute.xlu0 0
        %334 = vperm.xlu0 %333, %v326
        %v335 = vpop.permute.xlu0 %334
        %v337 = vadd.f32 %v323, %v330
        %v338 = vadd.f32 %v324, %v335
        %v339 = vmax.f32 %v337, 0.0
        %v340 = vmax.f32 %v338, 0.0
        %v341 = vld [vmem:[%s1] sm:$0xff]
        %v342 = vld [vmem:[%s1 + $0x8] sm:$0xff]
        %v343 = vld [vmem:[%s1 + $0x10] sm:$0xff]
        %v344 = vld [vmem:[%s1 + $0x18] sm:$0xff]
        %vm345 = vcmask 130048
        %v347 = vsel %vm345, %v341, 0
        %v350 = vsel %vm345, %v342, 0
        %v353 = vsel %vm345, %v343, 0
        %v356 = vsel %vm345, %v344, 0
        %358 = vmatprep.subr.mxu0 0.0
        %359 = vmatpush1.msra.mxu0 %v339
        %360 = vmatprep.subr.mxu0 0.0
        %361 = vmatpush1.msra.mxu0 %v340
        %362 = vmatprep.subr.mxu0 0.0
        %363 = vmatpush1.msra.mxu0 0.0
        %364 = vmatprep.subr.mxu0 0.0
        %365 = vmatpush1.msra.mxu0 0.0
        %366 = vmatprep.subr.mxu0 0.0
        %367 = vmatpush1.msra.mxu0 0.0
        %368 = vmatprep.subr.mxu0 0.0
        %369 = vmatpush1.msra.mxu0 0.0
        %370 = vmatprep.subr.mxu0 0.0
        %371 = vmatpush1.msra.mxu0 0.0
        %372 = vmatprep.subr.mxu0 0.0
        %373 = vmatpush1.msra.mxu0 0.0
        %374 = vmatprep.subr.mxu0 0.0
        %375 = vmatpush1.msra.mxu0 0.0
        %376 = vmatprep.subr.mxu0 0.0
        %377 = vmatpush1.msra.mxu0 0.0
        %378 = vmatprep.subr.mxu0 0.0
        %379 = vmatpush1.msra.mxu0 0.0
        %380 = vmatprep.subr.mxu0 0.0
        %381 = vmatpush1.msra.mxu0 0.0
        %382 = vmatprep.subr.mxu0 0.0
        %383 = vmatpush1.msra.mxu0 0.0
        %384 = vmatprep.subr.mxu0 0.0
        %385 = vmatpush1.msra.mxu0 0.0
        %386 = vmatprep.subr.mxu0 0.0
        %387 = vmatpush1.msra.mxu0 0.0
        %388 = vmatprep.subr.mxu0 0.0
        %389 = vmatpush1.msra.mxu0 0.0
        %390 = vmatprep.subr.mxu0 0.0
        %391 = vmatpush1.msra.mxu0 0.0
        %392 = vmatprep.subr.mxu0 0.0
        %393 = vmatpush1.msra.mxu0 0.0
        %394 = vmatprep.subr.mxu0 0.0
        %395 = vmatpush1.msra.mxu0 0.0
        %396 = vmatprep.subr.mxu0 0.0
        %397 = vmatpush1.msra.mxu0 0.0
        %398 = vmatprep.subr.mxu0 0.0
        %399 = vmatpush1.msra.mxu0 0.0
        %400 = vmatprep.subr.mxu0 0.0
        %401 = vmatpush1.msra.mxu0 0.0
        %402 = vmatprep.subr.mxu0 0.0
        %403 = vmatpush1.msra.mxu0 0.0
        %404 = vmatprep.subr.mxu0 0.0
        %405 = vmatpush1.msra.mxu0 0.0
        %406 = vmatprep.subr.mxu0 0.0
        %407 = vmatpush1.msra.mxu0 0.0
        %408 = vmatprep.subr.mxu0 0.0
        %409 = vmatpush1.msra.mxu0 0.0
        %410 = vmatprep.subr.mxu0 0.0
        %411 = vmatpush1.msra.mxu0 0.0
        %412 = vmatprep.subr.mxu0 0.0
        %413 = vmatpush1.msra.mxu0 0.0
        %414 = vmatprep.subr.mxu0 0.0
        %415 = vmatpush1.msra.mxu0 0.0
        %416 = vmatprep.subr.mxu0 0.0
        %417 = vmatpush1.msra.mxu0 0.0
        %418 = vmatprep.subr.mxu0 0.0
        %419 = vmatpush1.msra.mxu0 0.0
        %420 = vmatprep.subr.mxu0 0.0
        %421 = vmatpush1.msra.mxu0 0.0
        %422 = vmatprep.mubr.f32.mxu0 0.0
        %423 = vmatmul.mubr.f32.gmra.mrb[0].mxu0 %v347
        %v424 = vpop.f32.mrb[0].mxu0
        %v425 = vadd.f32 0.0, %v424
        %v426 = vpop.f32.mrb[0].mxu0
        %427 = vmatprep.mubr.f32.mxu0 0.0
        %428 = vmatmul.mubr.f32.gmra.mrb[0].mxu0 %v350
        %v429 = vpop.f32.mrb[0].mxu0
        %v430 = vadd.f32 0.0, %v429
        %v431 = vpop.f32.mrb[0].mxu0
        %432 = vmatprep.mubr.f32.mxu0 0.0
        %433 = vmatmul.mubr.f32.gmra.mrb[0].mxu0 %v353
        %v434 = vpop.f32.mrb[0].mxu0
        %v435 = vadd.f32 0.0, %v434
        %v436 = vpop.f32.mrb[0].mxu0
        %437 = vmatprep.mubr.f32.mxu0 0.0
        %438 = vmatmul.mubr.f32.gmra.mrb[0].mxu0 %v356
        %v439 = vpop.f32.mrb[0].mxu0
        %v440 = vadd.f32 0.0, %v439
        %v441 = vpop.f32.mrb[0].mxu0
        %442 = vdwg.mxu0
        %443 = vst [vmem:[%s284] sm:$0xff] %v425
        %444 = vst [vmem:[%s284 + $0x8] sm:$0xff] %v430
        %445 = vst [vmem:[%s284 + $0x10] sm:$0xff] %v435
        %446 = vst [vmem:[%s284 + $0x18] sm:$0xff] %v440
        %447 = vadd.xlane.f32.xlu0 %v425
        %v448 = vpop.xlane.xlu0 %447
        %449 = vadd.xlane.f32.xlu0 %v430
        %v450 = vpop.xlane.xlu0 %449
        %451 = vadd.xlane.f32.xlu0 %v435
        %v452 = vpop.xlane.xlu0 %451
        %453 = vadd.xlane.f32.xlu0 %v440
        %v454 = vpop.xlane.xlu0 %453
        %vm455 = vcmask 7168
        %456 = vst.msk [vmem:[%s303] sm:$0xff] %vm455, %v448
        %457 = vst.msk [vmem:[%s303 + $0x8] sm:$0xff] %vm455, %v450
        %458 = vst.msk [vmem:[%s303 + $0x10] sm:$0xff] %vm455, %v452
        %459 = vst.msk [vmem:[%s303 + $0x18] sm:$0xff] %vm455, %v454
        %v460 = vmul.f32 %v425, %v425
        %v461 = vmul.f32 %v430, %v430
        %v462 = vmul.f32 %v435, %v435
        %v463 = vmul.f32 %v440, %v440
        %464 = vadd.xlane.f32.xlu0 %v460
        %v465 = vpop.xlane.xlu0 %464
        %466 = vadd.xlane.f32.xlu0 %v461
        %v467 = vpop.xlane.xlu0 %466
        %468 = vadd.xlane.f32.xlu0 %v462
        %v469 = vpop.xlane.xlu0 %468
        %470 = vadd.xlane.f32.xlu0 %v463
        %v471 = vpop.xlane.xlu0 %470
        %472 = vst.msk [vmem:[%s308] sm:$0xff] %vm455, %v465
        %473 = vst.msk [vmem:[%s308 + $0x8] sm:$0xff] %vm455, %v467
        %474 = vst.msk [vmem:[%s308 + $0x10] sm:$0xff] %vm455, %v469
        %475 = vst.msk [vmem:[%s308 + $0x18] sm:$0xff] %vm455, %v471
        %s476 = sand.u32 %s115, 1
        %s477 = sand.u32 %s115, 1
        %s478 = smul.addr %s477, 32
        %s479 = scalar_lea.vmem [#allocation3], %s478
        %p480 = scmp.lt.s32.totalorder %s18, 2
        %s481 = scalar_select %p480, %s18, 2
        %s482 = smul.addr %s481, 4
        %s483 = smul.addr %s482, 8
        %s484 = scalar_lea.vmem %s5, %s483
        %p485 = scmp.lt.s32.totalorder %s18, 2
        %s486 = scalar_select %p485, %s18, 2
        %s487 = smul.addr %s486, 4
        %s488 = smul.addr %s487, 8
        %s489 = scalar_lea.vmem %s6, %s488
        // Predicated region
        $region75: #{decoder_forward.6} parent=69 // pred_check
          %p490 = pneg %p125
        $region76: #{decoder_forward.6} parent=69 // pred_check_branch
          %492 = sbr.rel (%p490) target = $region78
        $region77: #{decoder_forward.6} parent=69 // pred_region
          %s493 = smul.addr %s18, 8
          %s494 = scalar_lea.vmem %s4, %s493
          // Predicated region
          $region79: #{decoder_forward.6} parent=77 // pred_check
            _
          $region80: #{decoder_forward.6} parent=77 // pred_check_branch
            %496 = sbr.rel (0) target = $region82
          $region81: #{decoder_forward.6} parent=77 // pred_region
            // Predicated region
            $region83: #{decoder_forward.6} parent=81 // pred_check
              _
            $region84: #{decoder_forward.6} parent=81 // pred_check_branch
              %498 = sbr.rel (0) target = $region86
            $region85: #{decoder_forward.6} parent=81 // pred_region
              // Predicated region
              $region98: #{decoder_forward.6} parent=85 // pred_check
                _
              $region99: #{decoder_forward.6} parent=85 // pred_check_branch
                %519 = sbr.rel (0) target = $region101
              $region100: #{decoder_forward.6} parent=85 // pred_region
                loop: start=0, step=1, limit=1
                $region102: #{decoder_forward.6} parent=100 // loop_pre_header
                  _
                $region103: #{decoder_forward.6} parent=100 // loop_header
                  %s521 = sphi 0, %s525
                  %p522 = scmp.ge.s32.totalorder %s521, 1
                  %s526 = sphi %s479, %s479
                  %s527 = sphi %s494, %s494
                $region104: #{decoder_forward.6} parent=100 // loop_header_branch
                  %524 = sbr.rel (%p522) target = $region108
                $region105: #{decoder_forward.6} parent=100 // loop_body
                  %v528 = vld [vmem:[%s526] sm:$0xff]
                  %529 = vst [vmem:[%s527] sm:$0xff] %v528
                  %v530 = vld [vmem:[%s526 + $0x8] sm:$0xff]
                  %531 = vst [vmem:[%s527 + $0x18] sm:$0xff] %v530
                  %v532 = vld [vmem:[%s526 + $0x10] sm:$0xff]
                  %533 = vst [vmem:[%s527 + $0x30] sm:$0xff] %v532
                  %v534 = vld [vmem:[%s526 + $0x18] sm:$0xff]
                  %535 = vst [vmem:[%s527 + $0x48] sm:$0xff] %v534
                $region106: #{decoder_forward.6} parent=100 // loop_footer
                  %s525 = sadd.s32 1, %s521
                $region107: #{decoder_forward.6} parent=100 // loop_footer_branch
                  %520 = sbr.rel target = $region103
                $region108: #{decoder_forward.6} parent=100 // loop_exit
                  _
              $region101: #{decoder_forward.6} parent=85 // pred_fallthru
                _
              // Predicated region
              $region109: #{decoder_forward.6} parent=85 // pred_check
                _
              $region110: #{decoder_forward.6} parent=85 // pred_check_branch
                %537 = sbr.rel target = $region112
              $region111: #{decoder_forward.6} parent=85 // pred_region
                _
              $region112: #{decoder_forward.6} parent=85 // pred_fallthru
                _
            $region86: #{decoder_forward.6} parent=81 // pred_fallthru
              _
            // Predicated region
            $region87: #{decoder_forward.6} parent=81 // pred_check
              _
            $region88: #{decoder_forward.6} parent=81 // pred_check_branch
              %500 = sbr.rel target = $region90
            $region89: #{decoder_forward.6} parent=81 // pred_region
              loop: start=0, step=1, limit=1
              $region91: #{decoder_forward.6} parent=89 // loop_pre_header
                _
              $region92: #{decoder_forward.6} parent=89 // loop_header
                %s503 = sphi 0, %s507
                %p504 = scmp.ge.s32.totalorder %s503, 1
                %s508 = sphi %s479, %s479
                %s509 = sphi %s494, %s494
              $region93: #{decoder_forward.6} parent=89 // loop_header_branch
                %506 = sbr.rel (%p504) target = $region97
              $region94: #{decoder_forward.6} parent=89 // loop_body
                %v510 = vld [vmem:[%s508] sm:$0xff]
                %511 = vst [vmem:[%s509] sm:$0xff] %v510
                %v512 = vld [vmem:[%s508 + $0x8] sm:$0xff]
                %513 = vst [vmem:[%s509 + $0x18] sm:$0xff] %v512
                %v514 = vld [vmem:[%s508 + $0x10] sm:$0xff]
                %515 = vst [vmem:[%s509 + $0x30] sm:$0xff] %v514
                %v516 = vld [vmem:[%s508 + $0x18] sm:$0xff]
                %517 = vst [vmem:[%s509 + $0x48] sm:$0xff] %v516
              $region95: #{decoder_forward.6} parent=89 // loop_footer
                %s507 = sadd.s32 1, %s503
              $region96: #{decoder_forward.6} parent=89 // loop_footer_branch
                %502 = sbr.rel target = $region92
              $region97: #{decoder_forward.6} parent=89 // loop_exit
                _
            $region90: #{decoder_forward.6} parent=81 // pred_fallthru
              _
          $region82: #{decoder_forward.6} parent=77 // pred_fallthru
            _
          %538 = vnop
        $region78: #{decoder_forward.6} parent=69 // pred_fallthru
          _
        // Predicated region
        $region113: #{decoder_forward.6} parent=69 // pred_check
          %p539 = pneg %p151
        $region114: #{decoder_forward.6} parent=69 // pred_check_branch
          %541 = sbr.rel (%p539) target = $region116
        $region115: #{decoder_forward.6} parent=69 // pred_region
          _
        $region116: #{decoder_forward.6} parent=69 // pred_fallthru
          _
        // Predicated region
        $region117: #{decoder_forward.6} parent=69 // pred_check
          %p542 = pneg %p177
        $region118: #{decoder_forward.6} parent=69 // pred_check_branch
          %544 = sbr.rel (%p542) target = $region120
        $region119: #{decoder_forward.6} parent=69 // pred_region
          _
        $region120: #{decoder_forward.6} parent=69 // pred_fallthru
          _
      $region70: #{decoder_forward.6} parent=5 // pred_fallthru
        _
      %p545 = scmp.le.s32.totalorder 2, %s13
      // Predicated region
      $region121: #{decoder_forward.6} parent=5 // pred_check
        %p546 = pneg %p545
      $region122: #{decoder_forward.6} parent=5 // pred_check_branch
        %548 = sbr.rel (%p546) target = $region124
      $region123: #{decoder_forward.6} parent=5 // pred_region
        %s549 = ssub.s32 %s13, 2
        // Predicated region
        $region125: #{decoder_forward.6} parent=123 // pred_check
          %p550 = pneg %p131
        $region126: #{decoder_forward.6} parent=123 // pred_check_branch
          %552 = sbr.rel (%p550) target = $region128
        $region127: #{decoder_forward.6} parent=123 // pred_region
          %s553 = sand.u32 %s116, 1
          %s554 = sand.u32 %s116, 1
          %s555 = smul.addr %s554, 32
          %s556 = scalar_lea.vmem [#allocation3], %s555
        $region128: #{decoder_forward.6} parent=123 // pred_fallthru
          _
        // Predicated region
        $region129: #{decoder_forward.6} parent=123 // pred_check
          %p557 = pneg %p157
        $region130: #{decoder_forward.6} parent=123 // pred_check_branch
          %559 = sbr.rel (%p557) target = $region132
        $region131: #{decoder_forward.6} parent=123 // pred_region
          %p560 = scmp.lt.s32.totalorder %s19, 2
          %s561 = scalar_select %p560, %s19, 2
          %s562 = smul.addr %s561, 4
          %s563 = smul.addr %s562, 8
          %s564 = scalar_lea.vmem %s5, %s563
        $region132: #{decoder_forward.6} parent=123 // pred_fallthru
          _
        // Predicated region
        $region133: #{decoder_forward.6} parent=123 // pred_check
          %p565 = pneg %p183
        $region134: #{decoder_forward.6} parent=123 // pred_check_branch
          %567 = sbr.rel (%p565) target = $region136
        $region135: #{decoder_forward.6} parent=123 // pred_region
          %p568 = scmp.lt.s32.totalorder %s19, 2
          %s569 = scalar_select %p568, %s19, 2
          %s570 = smul.addr %s569, 4
          %s571 = smul.addr %s570, 8
          %s572 = scalar_lea.vmem %s6, %s571
        $region136: #{decoder_forward.6} parent=123 // pred_fallthru
          _
      $region124: #{decoder_forward.6} parent=5 // pred_fallthru
        _
    $region6: #{decoder_forward.6} parent=1 // loop_footer
      %s17 = sadd.s32 1, %s13
    $region7: #{decoder_forward.6} parent=1 // loop_footer_branch
      %12 = sbr.rel target = $region3
    $region8: #{decoder_forward.6} parent=1 // loop_exit
      _

</llo_original>
